<compile_context>
chip_gen: v7x
topology: tpu7x:2x2x1
jax: 0.10.0
libtpu: 0.0.40
codegen_flags: <defaults>
</compile_context>

<pallas_src>
import functools

import jax
import jax.numpy as jnp
import numpy as np
from jax.experimental import pallas as pl
from jax.experimental.pallas import tpu as pltpu

EPS = 1e-5      # torch InstanceNorm3d default eps (affine=False, no running stats)
LANE = 128
CP = 8          # channels padded to one full f32 sublane tile


def _round_up(x, m):
    return (x + m - 1) // m * m


def residual_block_kernel(xpad_ref, xres_ref, mask_ref, w1_ref, w2_ref, b_ref,
                          out_ref, h1p_ref, *,
                          lq, offs, base2, marg_l, marg_r, n_valid):
    """One batch element.

    xpad_ref: (CP, LX)            bf16  zero-padded volume, padded-stride flat
    xres_ref: (CP, LQ)            f32   lane-aligned residual: x voxel q
    mask_ref: (1,  LQ)            f32   1.0 at real output voxels
    w*_ref:   (CP, 27*CP)         bf16  im2col weight matrices
    b_ref:    (CP, 2)             f32   conv biases (column 0 = conv1, 1 = conv2)
    out_ref:  (CP, LQ)            f32   conv-block output + residual
    h1p_ref:  (CP, marg_l+LQ+marg_r) bf16 scratch: conv2's padded input frame
    """
    cp = out_ref.shape[0]
    mask = mask_ref[...]                                   # (1, lq) f32
    inv_n = jnp.float32(1.0 / n_valid)

    def conv_im2col(src_ref, w_ref, base):
        # 27 lane-shifted bf16 slices of the padded source (one per 3x3x3 tap)
        # -> (27*CP, lq) patch matrix -> single MXU matmul, f32 accumulation.
        pieces = [src_ref[:, base + o: base + o + lq] for o in offs]
        patches = jnp.concatenate(pieces, axis=0)          # (27*cp, lq) bf16
        return jnp.dot(w_ref[...], patches,
                       preferred_element_type=jnp.float32)  # (cp, lq) f32

    def instance_norm(y):
        # Fused one-pass masked stats over the n_valid real voxels: the two
        # reductions are independent (no serial mean -> diff -> reduce chain).
        ym = y * mask
        s1 = jnp.sum(ym, axis=1, keepdims=True)            # sum(y * m)
        s2 = jnp.sum(ym * y, axis=1, keepdims=True)        # sum(y^2 * m)
        mean = s1 * inv_n
        var = jnp.maximum(s2 * inv_n - mean * mean, 0.0)   # guard cancellation
        # Masked normalized value: zero at pad / out-of-volume lanes, which is
        # exactly the zero padding the next conv needs.
        return ((y - mean) * mask) * jax.lax.rsqrt(var + EPS)

    # conv1 + bias (post-matmul f32 add) + InstanceNorm + ReLU.
    y1 = conv_im2col(xpad_ref, w1_ref, 0) + b_ref[:, 0:1]
    h1 = jnp.maximum(instance_norm(y1), 0.0)               # (cp, lq) f32

    # Re-embed h1 into conv2's padded frame held in persistent VMEM scratch:
    # lane-aligned interior store + two tiny lane-aligned zero margins.  The
    # F.pad(..., 1) of block 1's output is the (+1,+1,+1) shift folded into
    # `base2`; the mask already zeroed every invalid interior position.
    h1p_ref[:, :marg_l] = jnp.zeros((cp, marg_l), jnp.bfloat16)
    h1p_ref[:, marg_l:marg_l + lq] = h1.astype(jnp.bfloat16)
    h1p_ref[:, marg_l + lq:] = jnp.zeros((cp, marg_r), jnp.bfloat16)

    # conv2 + bias + InstanceNorm + residual (aligned f32 stream).
    y2 = instance_norm(conv_im2col(h1p_ref, w2_ref, base2) + b_ref[:, 1:2])
    out_ref[...] = y2 + xres_ref[...]


def _prep_weight(w):
    """torch (Cout, Cin, 3, 3, 3) -> (CP, 27*CP) bf16 where column k*CP + ci
    holds w[co, ci, kd, kh, kw] with k = kd*9 + kh*3 + kw (no bias block)."""
    c = w.shape[0]
    wt = jnp.transpose(w.astype(jnp.float32), (2, 3, 4, 1, 0)).reshape(27, c, c)
    wt = jnp.pad(wt, ((0, 0), (0, CP - c), (0, CP - c)))         # (27, CP, CP)
    wt = jnp.transpose(wt, (2, 0, 1)).reshape(CP, 27 * CP)        # [co, k*CP+ci]
    return wt.astype(jnp.bfloat16)


def residual_block(x, w1, b1, w2, b2):
    """x: (N, C, D, H, W); weights in torch layout (Cout, Cin, 3, 3, 3); b: (C,)."""
    n, c, d, h, w = x.shape
    assert c <= CP
    dp, hp, wp = d + 2, h + 2, w + 2
    hwp = hp * wp
    l_pad = dp * hwp                                   # flattened padded volume
    c_off = hwp + wp + 1                               # the (+1,+1,+1) shift
    offs = tuple(kd * hwp + kh * wp + kw
                 for kd in range(3) for kh in range(3) for kw in range(3))
    max_off = offs[-1]
    q_max = (d - 1) * hwp + (h - 1) * wp + (w - 1)     # last real output voxel
    lq = _round_up(q_max + 1, LANE)                    # lane-dense compute frame
    lx = _round_up(max_off + lq, LANE)                 # input buffer length
    marg_l = _round_up(c_off, LANE)
    base2 = marg_l - c_off
    marg_r = _round_up(max_off - c_off, LANE)
    n_valid = d * h * w
    assert c_off + lq <= lx                            # residual slice in-bounds

    # Channel-pad to CP, spatially pad by 1, flatten with padded strides,
    # zero-tail to lane alignment.  The bf16 copy is the conv-tap stream; the
    # f32 lane-aligned slice at +c_off is the residual stream.
    xpad = jnp.pad(x.astype(jnp.float32),
                   ((0, 0), (0, CP - c), (1, 1), (1, 1), (1, 1)))
    xflat = jnp.pad(xpad.reshape(n, CP, l_pad),
                    ((0, 0), (0, 0), (0, lx - l_pad)))
    xres = xflat[:, :, c_off:c_off + lq]               # (n, CP, lq) f32, aligned
    xconv = xflat.astype(jnp.bfloat16)                 # (n, CP, lx) bf16 source

    # Validity mask of the padded-stride frame (1.0 at real output voxels).
    qs = np.arange(lq)
    qd, qr = qs // hwp, qs % hwp
    qh, qw = qr // wp, qr % wp
    mask = jnp.asarray(((qd < d) & (qh < h) & (qw < w)).astype(np.float32)
                       ).reshape(1, lq)

    wb1 = _prep_weight(w1)
    wb2 = _prep_weight(w2)
    bias = jnp.pad(jnp.stack([b1.astype(jnp.float32), b2.astype(jnp.float32)],
                             axis=1), ((0, CP - c), (0, 0)))      # (CP, 2) f32

    kernel = functools.partial(
        residual_block_kernel, lq=lq, offs=offs, base2=base2,
        marg_l=marg_l, marg_r=marg_r, n_valid=n_valid)

    flops = n * 2 * (2 * CP * (27 * CP) * lq)          # two im2col matmuls / elem
    bytes_accessed = (n * (CP * lx * 2 + CP * lq * 4 + CP * lq * 4)
                      + lq * 4 + 2 * (CP * 27 * CP * 2) + CP * 2 * 4)

    out = pl.pallas_call(
        kernel,
        out_shape=jax.ShapeDtypeStruct((n, CP, lq), jnp.float32),
        grid=(n,),
        in_specs=[
            pl.BlockSpec((None, CP, lx), lambda i: (i, 0, 0)),      # bf16 source
            pl.BlockSpec((None, CP, lq), lambda i: (i, 0, 0)),      # f32 residual
            pl.BlockSpec((1, lq), lambda i: (0, 0)),                # mask
            pl.BlockSpec((CP, 27 * CP), lambda i: (0, 0)),          # w1
            pl.BlockSpec((CP, 27 * CP), lambda i: (0, 0)),          # w2
            pl.BlockSpec((CP, 2), lambda i: (0, 0)),                # biases
        ],
        out_specs=pl.BlockSpec((None, CP, lq), lambda i: (i, 0, 0)),
        scratch_shapes=[pltpu.VMEM((CP, marg_l + lq + marg_r), jnp.bfloat16)],
        compiler_params=pltpu.CompilerParams(
            dimension_semantics=("parallel",),
            vmem_limit_bytes=32 * 1024 * 1024),
        cost_estimate=pl.CostEstimate(
            flops=flops, transcendentals=n * 2 * CP,
            bytes_accessed=bytes_accessed),
    )(xconv, xres, mask, wb1, wb2, bias)

    # Back to NCDHW: pad/trim the padded-stride frame, un-flatten, drop pads.
    if lq < l_pad:
        out = jnp.pad(out, ((0, 0), (0, 0), (0, l_pad - lq)))
    else:
        out = out[:, :, :l_pad]
    return out.reshape(n, CP, dp, hp, wp)[:, :c, :d, :h, :w]


def ref_residual_block(x, w1, b1, w2, b2):
    """Pure-JAX f32 reference mirroring the torch forward (NCDHW)."""
    def conv3(inp, wt, b):
        out = jax.lax.conv_general_dilated(
            inp.astype(jnp.float32), wt.astype(jnp.float32),
            window_strides=(1, 1, 1), padding=((1, 1), (1, 1), (1, 1)),
            dimension_numbers=("NCDHW", "OIDHW", "NCDHW"),
            precision=jax.lax.Precision.HIGHEST)
        return out + b[None, :, None, None, None]

    def inorm(v):
        m = jnp.mean(v, axis=(2, 3, 4), keepdims=True)
        va = jnp.mean((v - m) ** 2, axis=(2, 3, 4), keepdims=True)
        return (v - m) * jax.lax.rsqrt(va + EPS)

    hblk = jnp.maximum(inorm(conv3(x, w1, b1)), 0.0)
    return x + inorm(conv3(hblk, w2, b2))


if __name__ == "__main__":
    key = jax.random.PRNGKey(0)
    k1, k2, k3, k4, k5 = jax.random.split(key, 5)

    N, C, D, H, W = 2, 4, 8, 8, 8          # features=4
    x = jax.random.normal(k1, (N, C, D, H, W), jnp.float32)

    # Deterministic "torch-like" init: uniform(-1/sqrt(fan_in), 1/sqrt(fan_in))
    fan_in = C * 3 * 3 * 3
    bound = 1.0 / np.sqrt(fan_in)
    w1 = jax.random.uniform(k2, (C, C, 3, 3, 3), jnp.float32, -bound, bound)
    b1 = jax.random.uniform(k3, (C,), jnp.float32, -bound, bound)
    w2 = jax.random.uniform(k4, (C, C, 3, 3, 3), jnp.float32, -bound, bound)
    b2 = jax.random.uniform(k5, (C,), jnp.float32, -bound, bound)

    out = jax.block_until_ready(residual_block(x, w1, b1, w2, b2))
    ref = jax.block_until_ready(ref_residual_block(x, w1, b1, w2, b2))
    # bf16 MXU operands with f32 accumulation / f32 norm statistics and f32
    # residual: allow a slightly looser tolerance than pure-f32.
    np.testing.assert_allclose(np.asarray(out), np.asarray(ref),
                               rtol=2e-2, atol=2e-2)
    print("KERNEL_OK")
</pallas_src>

<mosaic_0001>
module attributes {stable_mosaic.version = 11 : i64} {
  func.func @residual_block_kernel(%arg0: i32, %arg1: memref<1x8x1152xbf16, #tpu.memory_space<vmem>>, %arg2: memref<1x8x896xf32, #tpu.memory_space<vmem>>, %arg3: memref<1x896xf32, #tpu.memory_space<vmem>>, %arg4: memref<8x216xbf16, #tpu.memory_space<vmem>>, %arg5: memref<8x216xbf16, #tpu.memory_space<vmem>>, %arg6: memref<8x2xf32, #tpu.memory_space<vmem>>, %arg7: memref<1x8x896xf32, #tpu.memory_space<vmem>>, %arg8: memref<8x1152xbf16, #tpu.memory_space<vmem>>) attributes {dimension_semantics = [#tpu.dimension_semantics<parallel>], iteration_bounds = array<i64: 2>, scalar_prefetch = 0 : i64, scratch_operands = 1 : i64, tpu.core_type = #tpu.core_type<tc>, window_params = [{transform_indices = @transform_0, window_bounds = array<i64: 1, 8, 1152>}, {transform_indices = @transform_1, window_bounds = array<i64: 1, 8, 896>}, {pipeline_mode = #tpu.pipeline_mode<synchronous>, transform_indices = @transform_2, window_bounds = array<i64: 1, 896>}, {pipeline_mode = #tpu.pipeline_mode<synchronous>, transform_indices = @transform_3, window_bounds = array<i64: 8, 216>}, {pipeline_mode = #tpu.pipeline_mode<synchronous>, transform_indices = @transform_4, window_bounds = array<i64: 8, 216>}, {pipeline_mode = #tpu.pipeline_mode<synchronous>, transform_indices = @transform_5, window_bounds = array<i64: 8, 2>}, {transform_indices = @transform_6, window_bounds = array<i64: 1, 8, 896>}]} {
    %c0 = arith.constant 0 : index
    %c0_0 = arith.constant 0 : index
    %0 = vector.load %arg3[%c0, %c0_0] : memref<1x896xf32, #tpu.memory_space<vmem>>, vector<1x896xf32>
    %c0_1 = arith.constant 0 : index
    %c0_2 = arith.constant 0 : index
    %c0_3 = arith.constant 0 : index
    %1 = vector.load %arg1[%c0_1, %c0_2, %c0_3] : memref<1x8x1152xbf16, #tpu.memory_space<vmem>>, vector<1x8x896xbf16>
    %2 = vector.shape_cast %1 : vector<1x8x896xbf16> to vector<8x896xbf16>
    %c0_4 = arith.constant 0 : index
    %c0_5 = arith.constant 0 : index
    %c1 = arith.constant 1 : index
    %3 = vector.load %arg1[%c0_4, %c0_5, %c1] : memref<1x8x1152xbf16, #tpu.memory_space<vmem>>, vector<1x8x896xbf16>
    %4 = vector.shape_cast %3 : vector<1x8x896xbf16> to vector<8x896xbf16>
    %c0_6 = arith.constant 0 : index
    %c0_7 = arith.constant 0 : index
    %c2 = arith.constant 2 : index
    %5 = vector.load %arg1[%c0_6, %c0_7, %c2] : memref<1x8x1152xbf16, #tpu.memory_space<vmem>>, vector<1x8x896xbf16>
    %6 = vector.shape_cast %5 : vector<1x8x896xbf16> to vector<8x896xbf16>
    %c0_8 = arith.constant 0 : index
    %c0_9 = arith.constant 0 : index
    %c10 = arith.constant 10 : index
    %7 = vector.load %arg1[%c0_8, %c0_9, %c10] : memref<1x8x1152xbf16, #tpu.memory_space<vmem>>, vector<1x8x896xbf16>
    %8 = vector.shape_cast %7 : vector<1x8x896xbf16> to vector<8x896xbf16>
    %c0_10 = arith.constant 0 : index
    %c0_11 = arith.constant 0 : index
    %c11 = arith.constant 11 : index
    %9 = vector.load %arg1[%c0_10, %c0_11, %c11] : memref<1x8x1152xbf16, #tpu.memory_space<vmem>>, vector<1x8x896xbf16>
    %10 = vector.shape_cast %9 : vector<1x8x896xbf16> to vector<8x896xbf16>
    %c0_12 = arith.constant 0 : index
    %c0_13 = arith.constant 0 : index
    %c12 = arith.constant 12 : index
    %11 = vector.load %arg1[%c0_12, %c0_13, %c12] : memref<1x8x1152xbf16, #tpu.memory_space<vmem>>, vector<1x8x896xbf16>
    %12 = vector.shape_cast %11 : vector<1x8x896xbf16> to vector<8x896xbf16>
    %c0_14 = arith.constant 0 : index
    %c0_15 = arith.constant 0 : index
    %c20 = arith.constant 20 : index
    %13 = vector.load %arg1[%c0_14, %c0_15, %c20] : memref<1x8x1152xbf16, #tpu.memory_space<vmem>>, vector<1x8x896xbf16>
    %14 = vector.shape_cast %13 : vector<1x8x896xbf16> to vector<8x896xbf16>
    %c0_16 = arith.constant 0 : index
    %c0_17 = arith.constant 0 : index
    %c21 = arith.constant 21 : index
    %15 = vector.load %arg1[%c0_16, %c0_17, %c21] : memref<1x8x1152xbf16, #tpu.memory_space<vmem>>, vector<1x8x896xbf16>
    %16 = vector.shape_cast %15 : vector<1x8x896xbf16> to vector<8x896xbf16>
    %c0_18 = arith.constant 0 : index
    %c0_19 = arith.constant 0 : index
    %c22 = arith.constant 22 : index
    %17 = vector.load %arg1[%c0_18, %c0_19, %c22] : memref<1x8x1152xbf16, #tpu.memory_space<vmem>>, vector<1x8x896xbf16>
    %18 = vector.shape_cast %17 : vector<1x8x896xbf16> to vector<8x896xbf16>
    %c0_20 = arith.constant 0 : index
    %c0_21 = arith.constant 0 : index
    %c100 = arith.constant 100 : index
    %19 = vector.load %arg1[%c0_20, %c0_21, %c100] : memref<1x8x1152xbf16, #tpu.memory_space<vmem>>, vector<1x8x896xbf16>
    %20 = vector.shape_cast %19 : vector<1x8x896xbf16> to vector<8x896xbf16>
    %c0_22 = arith.constant 0 : index
    %c0_23 = arith.constant 0 : index
    %c101 = arith.constant 101 : index
    %21 = vector.load %arg1[%c0_22, %c0_23, %c101] : memref<1x8x1152xbf16, #tpu.memory_space<vmem>>, vector<1x8x896xbf16>
    %22 = vector.shape_cast %21 : vector<1x8x896xbf16> to vector<8x896xbf16>
    %c0_24 = arith.constant 0 : index
    %c0_25 = arith.constant 0 : index
    %c102 = arith.constant 102 : index
    %23 = vector.load %arg1[%c0_24, %c0_25, %c102] : memref<1x8x1152xbf16, #tpu.memory_space<vmem>>, vector<1x8x896xbf16>
    %24 = vector.shape_cast %23 : vector<1x8x896xbf16> to vector<8x896xbf16>
    %c0_26 = arith.constant 0 : index
    %c0_27 = arith.constant 0 : index
    %c110 = arith.constant 110 : index
    %25 = vector.load %arg1[%c0_26, %c0_27, %c110] : memref<1x8x1152xbf16, #tpu.memory_space<vmem>>, vector<1x8x896xbf16>
    %26 = vector.shape_cast %25 : vector<1x8x896xbf16> to vector<8x896xbf16>
    %c0_28 = arith.constant 0 : index
    %c0_29 = arith.constant 0 : index
    %c111 = arith.constant 111 : index
    %27 = vector.load %arg1[%c0_28, %c0_29, %c111] : memref<1x8x1152xbf16, #tpu.memory_space<vmem>>, vector<1x8x896xbf16>
    %28 = vector.shape_cast %27 : vector<1x8x896xbf16> to vector<8x896xbf16>
    %c0_30 = arith.constant 0 : index
    %c0_31 = arith.constant 0 : index
    %c112 = arith.constant 112 : index
    %29 = vector.load %arg1[%c0_30, %c0_31, %c112] : memref<1x8x1152xbf16, #tpu.memory_space<vmem>>, vector<1x8x896xbf16>
    %30 = vector.shape_cast %29 : vector<1x8x896xbf16> to vector<8x896xbf16>
    %c0_32 = arith.constant 0 : index
    %c0_33 = arith.constant 0 : index
    %c120 = arith.constant 120 : index
    %31 = vector.load %arg1[%c0_32, %c0_33, %c120] : memref<1x8x1152xbf16, #tpu.memory_space<vmem>>, vector<1x8x896xbf16>
    %32 = vector.shape_cast %31 : vector<1x8x896xbf16> to vector<8x896xbf16>
    %c0_34 = arith.constant 0 : index
    %c0_35 = arith.constant 0 : index
    %c121 = arith.constant 121 : index
    %33 = vector.load %arg1[%c0_34, %c0_35, %c121] : memref<1x8x1152xbf16, #tpu.memory_space<vmem>>, vector<1x8x896xbf16>
    %34 = vector.shape_cast %33 : vector<1x8x896xbf16> to vector<8x896xbf16>
    %c0_36 = arith.constant 0 : index
    %c0_37 = arith.constant 0 : index
    %c122 = arith.constant 122 : index
    %35 = vector.load %arg1[%c0_36, %c0_37, %c122] : memref<1x8x1152xbf16, #tpu.memory_space<vmem>>, vector<1x8x896xbf16>
    %36 = vector.shape_cast %35 : vector<1x8x896xbf16> to vector<8x896xbf16>
    %c0_38 = arith.constant 0 : index
    %c0_39 = arith.constant 0 : index
    %c200 = arith.constant 200 : index
    %37 = vector.load %arg1[%c0_38, %c0_39, %c200] : memref<1x8x1152xbf16, #tpu.memory_space<vmem>>, vector<1x8x896xbf16>
    %38 = vector.shape_cast %37 : vector<1x8x896xbf16> to vector<8x896xbf16>
    %c0_40 = arith.constant 0 : index
    %c0_41 = arith.constant 0 : index
    %c201 = arith.constant 201 : index
    %39 = vector.load %arg1[%c0_40, %c0_41, %c201] : memref<1x8x1152xbf16, #tpu.memory_space<vmem>>, vector<1x8x896xbf16>
    %40 = vector.shape_cast %39 : vector<1x8x896xbf16> to vector<8x896xbf16>
    %c0_42 = arith.constant 0 : index
    %c0_43 = arith.constant 0 : index
    %c202 = arith.constant 202 : index
    %41 = vector.load %arg1[%c0_42, %c0_43, %c202] : memref<1x8x1152xbf16, #tpu.memory_space<vmem>>, vector<1x8x896xbf16>
    %42 = vector.shape_cast %41 : vector<1x8x896xbf16> to vector<8x896xbf16>
    %c0_44 = arith.constant 0 : index
    %c0_45 = arith.constant 0 : index
    %c210 = arith.constant 210 : index
    %43 = vector.load %arg1[%c0_44, %c0_45, %c210] : memref<1x8x1152xbf16, #tpu.memory_space<vmem>>, vector<1x8x896xbf16>
    %44 = vector.shape_cast %43 : vector<1x8x896xbf16> to vector<8x896xbf16>
    %c0_46 = arith.constant 0 : index
    %c0_47 = arith.constant 0 : index
    %c211 = arith.constant 211 : index
    %45 = vector.load %arg1[%c0_46, %c0_47, %c211] : memref<1x8x1152xbf16, #tpu.memory_space<vmem>>, vector<1x8x896xbf16>
    %46 = vector.shape_cast %45 : vector<1x8x896xbf16> to vector<8x896xbf16>
    %c0_48 = arith.constant 0 : index
    %c0_49 = arith.constant 0 : index
    %c212 = arith.constant 212 : index
    %47 = vector.load %arg1[%c0_48, %c0_49, %c212] : memref<1x8x1152xbf16, #tpu.memory_space<vmem>>, vector<1x8x896xbf16>
    %48 = vector.shape_cast %47 : vector<1x8x896xbf16> to vector<8x896xbf16>
    %c0_50 = arith.constant 0 : index
    %c0_51 = arith.constant 0 : index
    %c220 = arith.constant 220 : index
    %49 = vector.load %arg1[%c0_50, %c0_51, %c220] : memref<1x8x1152xbf16, #tpu.memory_space<vmem>>, vector<1x8x896xbf16>
    %50 = vector.shape_cast %49 : vector<1x8x896xbf16> to vector<8x896xbf16>
    %c0_52 = arith.constant 0 : index
    %c0_53 = arith.constant 0 : index
    %c221 = arith.constant 221 : index
    %51 = vector.load %arg1[%c0_52, %c0_53, %c221] : memref<1x8x1152xbf16, #tpu.memory_space<vmem>>, vector<1x8x896xbf16>
    %52 = vector.shape_cast %51 : vector<1x8x896xbf16> to vector<8x896xbf16>
    %c0_54 = arith.constant 0 : index
    %c0_55 = arith.constant 0 : index
    %c222 = arith.constant 222 : index
    %53 = vector.load %arg1[%c0_54, %c0_55, %c222] : memref<1x8x1152xbf16, #tpu.memory_space<vmem>>, vector<1x8x896xbf16>
    %54 = vector.shape_cast %53 : vector<1x8x896xbf16> to vector<8x896xbf16>
    %55 = tpu.concatenate %2, %4, %6, %8, %10, %12, %14, %16, %18, %20, %22, %24, %26, %28, %30, %32 in 0 : vector<8x896xbf16>, vector<8x896xbf16>, vector<8x896xbf16>, vector<8x896xbf16>, vector<8x896xbf16>, vector<8x896xbf16>, vector<8x896xbf16>, vector<8x896xbf16>, vector<8x896xbf16>, vector<8x896xbf16>, vector<8x896xbf16>, vector<8x896xbf16>, vector<8x896xbf16>, vector<8x896xbf16>, vector<8x896xbf16>, vector<8x896xbf16> -> vector<128x896xbf16>
    %56 = tpu.concatenate %34, %36, %38, %40, %42, %44, %46, %48, %50, %52, %54 in 0 : vector<8x896xbf16>, vector<8x896xbf16>, vector<8x896xbf16>, vector<8x896xbf16>, vector<8x896xbf16>, vector<8x896xbf16>, vector<8x896xbf16>, vector<8x896xbf16>, vector<8x896xbf16>, vector<8x896xbf16>, vector<8x896xbf16> -> vector<88x896xbf16>
    %57 = tpu.concatenate %55, %56 in 0 : vector<128x896xbf16>, vector<88x896xbf16> -> vector<216x896xbf16>
    %c0_56 = arith.constant 0 : index
    %c0_57 = arith.constant 0 : index
    %58 = vector.load %arg4[%c0_56, %c0_57] : memref<8x216xbf16, #tpu.memory_space<vmem>>, vector<8x216xbf16>
    %cst = arith.constant dense<0.000000e+00> : vector<8x896xf32>
    %59 = tpu.matmul %58, %57, %cst {dimension_numbers = #tpu.dot_dimension_numbers<[1], [0], [0], [1], [0, 0, 1, 1], [], []>} : vector<8x216xbf16>, vector<216x896xbf16>, vector<8x896xf32> -> vector<8x896xf32>
    %c0_58 = arith.constant 0 : index
    %c0_59 = arith.constant 0 : index
    %60 = vector.load %arg6[%c0_58, %c0_59] : memref<8x2xf32, #tpu.memory_space<vmem>>, vector<8x1xf32>
    %61 = vector.broadcast %60 : vector<8x1xf32> to vector<8x896xf32>
    %62 = arith.addf %59, %61 : vector<8x896xf32>
    %63 = vector.broadcast %0 : vector<1x896xf32> to vector<8x896xf32>
    %64 = arith.mulf %62, %63 : vector<8x896xf32>
    %cst_60 = arith.constant dense<0.000000e+00> : vector<8xf32>
    %65 = vector.multi_reduction <add>, %64, %cst_60 [1] : vector<8x896xf32> to vector<8xf32>
    %66 = vector.shape_cast %65 : vector<8xf32> to vector<8x1xf32>
    %67 = arith.mulf %64, %62 : vector<8x896xf32>
    %cst_61 = arith.constant dense<0.000000e+00> : vector<8xf32>
    %68 = vector.multi_reduction <add>, %67, %cst_61 [1] : vector<8x896xf32> to vector<8xf32>
    %69 = vector.shape_cast %68 : vector<8xf32> to vector<8x1xf32>
    %cst_62 = arith.constant 0.001953125 : f32
    %70 = vector.broadcast %cst_62 : f32 to vector<8x1xf32>
    %71 = arith.mulf %66, %70 : vector<8x1xf32>
    %cst_63 = arith.constant 0.001953125 : f32
    %72 = vector.broadcast %cst_63 : f32 to vector<8x1xf32>
    %73 = arith.mulf %69, %72 : vector<8x1xf32>
    %74 = arith.mulf %71, %71 : vector<8x1xf32>
    %75 = arith.subf %73, %74 : vector<8x1xf32>
    %cst_64 = arith.constant 0.000000e+00 : f32
    %76 = vector.broadcast %cst_64 : f32 to vector<8x1xf32>
    %77 = arith.maximumf %75, %76 : vector<8x1xf32>
    %78 = vector.broadcast %71 : vector<8x1xf32> to vector<8x896xf32>
    %79 = arith.subf %62, %78 : vector<8x896xf32>
    %80 = vector.broadcast %0 : vector<1x896xf32> to vector<8x896xf32>
    %81 = arith.mulf %79, %80 : vector<8x896xf32>
    %cst_65 = arith.constant 9.99999974E-6 : f32
    %82 = vector.broadcast %cst_65 : f32 to vector<8x1xf32>
    %83 = arith.addf %77, %82 : vector<8x1xf32>
    %84 = math.rsqrt %83 : vector<8x1xf32>
    %85 = vector.broadcast %84 : vector<8x1xf32> to vector<8x896xf32>
    %86 = arith.mulf %81, %85 : vector<8x896xf32>
    %cst_66 = arith.constant 0.000000e+00 : f32
    %87 = vector.broadcast %cst_66 : f32 to vector<8x896xf32>
    %88 = arith.maximumf %86, %87 : vector<8x896xf32>
    %cst_67 = arith.constant 0.000000e+00 : bf16
    %89 = vector.broadcast %cst_67 : bf16 to vector<8x128xbf16>
    %c0_68 = arith.constant 0 : index
    %c0_69 = arith.constant 0 : index
    %90 = vector.load %arg8[%c0_68, %c0_69] : memref<8x1152xbf16, #tpu.memory_space<vmem>>, vector<8x128xbf16>
    tpu.vector_store %arg8[%c0_68, %c0_69], %89 {strides = array<i32>} : memref<8x1152xbf16, #tpu.memory_space<vmem>>, vector<8x128xbf16>,
    %91 = arith.truncf %88 : vector<8x896xf32> to vector<8x896xbf16>
    %c0_70 = arith.constant 0 : index
    %c128 = arith.constant 128 : index
    %92 = vector.load %arg8[%c0_70, %c128] : memref<8x1152xbf16, #tpu.memory_space<vmem>>, vector<8x896xbf16>
    tpu.vector_store %arg8[%c0_70, %c128], %91 {strides = array<i32>} : memref<8x1152xbf16, #tpu.memory_space<vmem>>, vector<8x896xbf16>,
    %cst_71 = arith.constant 0.000000e+00 : bf16
    %93 = vector.broadcast %cst_71 : bf16 to vector<8x128xbf16>
    %c0_72 = arith.constant 0 : index
    %c1024 = arith.constant 1024 : index
    %94 = vector.load %arg8[%c0_72, %c1024] : memref<8x1152xbf16, #tpu.memory_space<vmem>>, vector<8x128xbf16>
    tpu.vector_store %arg8[%c0_72, %c1024], %93 {strides = array<i32>} : memref<8x1152xbf16, #tpu.memory_space<vmem>>, vector<8x128xbf16>,
    %c0_73 = arith.constant 0 : index
    %c17 = arith.constant 17 : index
    %95 = vector.load %arg8[%c0_73, %c17] : memref<8x1152xbf16, #tpu.memory_space<vmem>>, vector<8x896xbf16>
    %c0_74 = arith.constant 0 : index
    %c18 = arith.constant 18 : index
    %96 = vector.load %arg8[%c0_74, %c18] : memref<8x1152xbf16, #tpu.memory_space<vmem>>, vector<8x896xbf16>
    %c0_75 = arith.constant 0 : index
    %c19 = arith.constant 19 : index
    %97 = vector.load %arg8[%c0_75, %c19] : memref<8x1152xbf16, #tpu.memory_space<vmem>>, vector<8x896xbf16>
    %c0_76 = arith.constant 0 : index
    %c27 = arith.constant 27 : index
    %98 = vector.load %arg8[%c0_76, %c27] : memref<8x1152xbf16, #tpu.memory_space<vmem>>, vector<8x896xbf16>
    %c0_77 = arith.constant 0 : index
    %c28 = arith.constant 28 : index
    %99 = vector.load %arg8[%c0_77, %c28] : memref<8x1152xbf16, #tpu.memory_space<vmem>>, vector<8x896xbf16>
    %c0_78 = arith.constant 0 : index
    %c29 = arith.constant 29 : index
    %100 = vector.load %arg8[%c0_78, %c29] : memref<8x1152xbf16, #tpu.memory_space<vmem>>, vector<8x896xbf16>
    %c0_79 = arith.constant 0 : index
    %c37 = arith.constant 37 : index
    %101 = vector.load %arg8[%c0_79, %c37] : memref<8x1152xbf16, #tpu.memory_space<vmem>>, vector<8x896xbf16>
    %c0_80 = arith.constant 0 : index
    %c38 = arith.constant 38 : index
    %102 = vector.load %arg8[%c0_80, %c38] : memref<8x1152xbf16, #tpu.memory_space<vmem>>, vector<8x896xbf16>
    %c0_81 = arith.constant 0 : index
    %c39 = arith.constant 39 : index
    %103 = vector.load %arg8[%c0_81, %c39] : memref<8x1152xbf16, #tpu.memory_space<vmem>>, vector<8x896xbf16>
    %c0_82 = arith.constant 0 : index
    %c117 = arith.constant 117 : index
    %104 = vector.load %arg8[%c0_82, %c117] : memref<8x1152xbf16, #tpu.memory_space<vmem>>, vector<8x896xbf16>
    %c0_83 = arith.constant 0 : index
    %c118 = arith.constant 118 : index
    %105 = vector.load %arg8[%c0_83, %c118] : memref<8x1152xbf16, #tpu.memory_space<vmem>>, vector<8x896xbf16>
    %c0_84 = arith.constant 0 : index
    %c119 = arith.constant 119 : index
    %106 = vector.load %arg8[%c0_84, %c119] : memref<8x1152xbf16, #tpu.memory_space<vmem>>, vector<8x896xbf16>
    %c0_85 = arith.constant 0 : index
    %c127 = arith.constant 127 : index
    %107 = vector.load %arg8[%c0_85, %c127] : memref<8x1152xbf16, #tpu.memory_space<vmem>>, vector<8x896xbf16>
    %c0_86 = arith.constant 0 : index
    %c128_87 = arith.constant 128 : index
    %108 = vector.load %arg8[%c0_86, %c128_87] : memref<8x1152xbf16, #tpu.memory_space<vmem>>, vector<8x896xbf16>
    %c0_88 = arith.constant 0 : index
    %c129 = arith.constant 129 : index
    %109 = vector.load %arg8[%c0_88, %c129] : memref<8x1152xbf16, #tpu.memory_space<vmem>>, vector<8x896xbf16>
    %c0_89 = arith.constant 0 : index
    %c137 = arith.constant 137 : index
    %110 = vector.load %arg8[%c0_89, %c137] : memref<8x1152xbf16, #tpu.memory_space<vmem>>, vector<8x896xbf16>
    %c0_90 = arith.constant 0 : index
    %c138 = arith.constant 138 : index
    %111 = vector.load %arg8[%c0_90, %c138] : memref<8x1152xbf16, #tpu.memory_space<vmem>>, vector<8x896xbf16>
    %c0_91 = arith.constant 0 : index
    %c139 = arith.constant 139 : index
    %112 = vector.load %arg8[%c0_91, %c139] : memref<8x1152xbf16, #tpu.memory_space<vmem>>, vector<8x896xbf16>
    %c0_92 = arith.constant 0 : index
    %c217 = arith.constant 217 : index
    %113 = vector.load %arg8[%c0_92, %c217] : memref<8x1152xbf16, #tpu.memory_space<vmem>>, vector<8x896xbf16>
    %c0_93 = arith.constant 0 : index
    %c218 = arith.constant 218 : index
    %114 = vector.load %arg8[%c0_93, %c218] : memref<8x1152xbf16, #tpu.memory_space<vmem>>, vector<8x896xbf16>
    %c0_94 = arith.constant 0 : index
    %c219 = arith.constant 219 : index
    %115 = vector.load %arg8[%c0_94, %c219] : memref<8x1152xbf16, #tpu.memory_space<vmem>>, vector<8x896xbf16>
    %c0_95 = arith.constant 0 : index
    %c227 = arith.constant 227 : index
    %116 = vector.load %arg8[%c0_95, %c227] : memref<8x1152xbf16, #tpu.memory_space<vmem>>, vector<8x896xbf16>
    %c0_96 = arith.constant 0 : index
    %c228 = arith.constant 228 : index
    %117 = vector.load %arg8[%c0_96, %c228] : memref<8x1152xbf16, #tpu.memory_space<vmem>>, vector<8x896xbf16>
    %c0_97 = arith.constant 0 : index
    %c229 = arith.constant 229 : index
    %118 = vector.load %arg8[%c0_97, %c229] : memref<8x1152xbf16, #tpu.memory_space<vmem>>, vector<8x896xbf16>
    %c0_98 = arith.constant 0 : index
    %c237 = arith.constant 237 : index
    %119 = vector.load %arg8[%c0_98, %c237] : memref<8x1152xbf16, #tpu.memory_space<vmem>>, vector<8x896xbf16>
    %c0_99 = arith.constant 0 : index
    %c238 = arith.constant 238 : index
    %120 = vector.load %arg8[%c0_99, %c238] : memref<8x1152xbf16, #tpu.memory_space<vmem>>, vector<8x896xbf16>
    %c0_100 = arith.constant 0 : index
    %c239 = arith.constant 239 : index
    %121 = vector.load %arg8[%c0_100, %c239] : memref<8x1152xbf16, #tpu.memory_space<vmem>>, vector<8x896xbf16>
    %122 = tpu.concatenate %95, %96, %97, %98, %99, %100, %101, %102, %103, %104, %105, %106, %107, %108, %109, %110 in 0 : vector<8x896xbf16>, vector<8x896xbf16>, vector<8x896xbf16>, vector<8x896xbf16>, vector<8x896xbf16>, vector<8x896xbf16>, vector<8x896xbf16>, vector<8x896xbf16>, vector<8x896xbf16>, vector<8x896xbf16>, vector<8x896xbf16>, vector<8x896xbf16>, vector<8x896xbf16>, vector<8x896xbf16>, vector<8x896xbf16>, vector<8x896xbf16> -> vector<128x896xbf16>
    %123 = tpu.concatenate %111, %112, %113, %114, %115, %116, %117, %118, %119, %120, %121 in 0 : vector<8x896xbf16>, vector<8x896xbf16>, vector<8x896xbf16>, vector<8x896xbf16>, vector<8x896xbf16>, vector<8x896xbf16>, vector<8x896xbf16>, vector<8x896xbf16>, vector<8x896xbf16>, vector<8x896xbf16>, vector<8x896xbf16> -> vector<88x896xbf16>
    %124 = tpu.concatenate %122, %123 in 0 : vector<128x896xbf16>, vector<88x896xbf16> -> vector<216x896xbf16>
    %c0_101 = arith.constant 0 : index
    %c0_102 = arith.constant 0 : index
    %125 = vector.load %arg5[%c0_101, %c0_102] : memref<8x216xbf16, #tpu.memory_space<vmem>>, vector<8x216xbf16>
    %cst_103 = arith.constant dense<0.000000e+00> : vector<8x896xf32>
    %126 = tpu.matmul %125, %124, %cst_103 {dimension_numbers = #tpu.dot_dimension_numbers<[1], [0], [0], [1], [0, 0, 1, 1], [], []>} : vector<8x216xbf16>, vector<216x896xbf16>, vector<8x896xf32> -> vector<8x896xf32>
    %c0_104 = arith.constant 0 : index
    %c1_105 = arith.constant 1 : index
    %127 = vector.load %arg6[%c0_104, %c1_105] : memref<8x2xf32, #tpu.memory_space<vmem>>, vector<8x1xf32>
    %128 = vector.broadcast %127 : vector<8x1xf32> to vector<8x896xf32>
    %129 = arith.addf %126, %128 : vector<8x896xf32>
    %130 = vector.broadcast %0 : vector<1x896xf32> to vector<8x896xf32>
    %131 = arith.mulf %129, %130 : vector<8x896xf32>
    %cst_106 = arith.constant dense<0.000000e+00> : vector<8xf32>
    %132 = vector.multi_reduction <add>, %131, %cst_106 [1] : vector<8x896xf32> to vector<8xf32>
    %133 = vector.shape_cast %132 : vector<8xf32> to vector<8x1xf32>
    %134 = arith.mulf %131, %129 : vector<8x896xf32>
    %cst_107 = arith.constant dense<0.000000e+00> : vector<8xf32>
    %135 = vector.multi_reduction <add>, %134, %cst_107 [1] : vector<8x896xf32> to vector<8xf32>
    %136 = vector.shape_cast %135 : vector<8xf32> to vector<8x1xf32>
    %cst_108 = arith.constant 0.001953125 : f32
    %137 = vector.broadcast %cst_108 : f32 to vector<8x1xf32>
    %138 = arith.mulf %133, %137 : vector<8x1xf32>
    %cst_109 = arith.constant 0.001953125 : f32
    %139 = vector.broadcast %cst_109 : f32 to vector<8x1xf32>
    %140 = arith.mulf %136, %139 : vector<8x1xf32>
    %141 = arith.mulf %138, %138 : vector<8x1xf32>
    %142 = arith.subf %140, %141 : vector<8x1xf32>
    %cst_110 = arith.constant 0.000000e+00 : f32
    %143 = vector.broadcast %cst_110 : f32 to vector<8x1xf32>
    %144 = arith.maximumf %142, %143 : vector<8x1xf32>
    %145 = vector.broadcast %138 : vector<8x1xf32> to vector<8x896xf32>
    %146 = arith.subf %129, %145 : vector<8x896xf32>
    %147 = vector.broadcast %0 : vector<1x896xf32> to vector<8x896xf32>
    %148 = arith.mulf %146, %147 : vector<8x896xf32>
    %cst_111 = arith.constant 9.99999974E-6 : f32
    %149 = vector.broadcast %cst_111 : f32 to vector<8x1xf32>
    %150 = arith.addf %144, %149 : vector<8x1xf32>
    %151 = math.rsqrt %150 : vector<8x1xf32>
    %152 = vector.broadcast %151 : vector<8x1xf32> to vector<8x896xf32>
    %153 = arith.mulf %148, %152 : vector<8x896xf32>
    %c0_112 = arith.constant 0 : index
    %c0_113 = arith.constant 0 : index
    %c0_114 = arith.constant 0 : index
    %154 = vector.load %arg2[%c0_112, %c0_113, %c0_114] : memref<1x8x896xf32, #tpu.memory_space<vmem>>, vector<1x8x896xf32>
    %155 = vector.shape_cast %154 : vector<1x8x896xf32> to vector<8x896xf32>
    %156 = arith.addf %153, %155 : vector<8x896xf32>
    %c0_115 = arith.constant 0 : index
    %c0_116 = arith.constant 0 : index
    %c0_117 = arith.constant 0 : index
    %157 = vector.load %arg7[%c0_115, %c0_116, %c0_117] : memref<1x8x896xf32, #tpu.memory_space<vmem>>, vector<1x8x896xf32>
    %158 = vector.shape_cast %157 : vector<1x8x896xf32> to vector<8x896xf32>
    %159 = vector.shape_cast %156 : vector<8x896xf32> to vector<1x8x896xf32>
    tpu.vector_store %arg7[%c0_115, %c0_116, %c0_117], %159 {strides = array<i32>} : memref<1x8x896xf32, #tpu.memory_space<vmem>>, vector<1x8x896xf32>,
    return
  }
  func.func @transform_0(%arg0: i32) -> (i32, i32, i32) {
    %c0_i32 = arith.constant 0 : i32
    %c0_i32_0 = arith.constant 0 : i32
    %c0_i32_1 = arith.constant 0 : i32
    return %arg0, %c0_i32, %c0_i32_0 : i32, i32, i32
  }
  func.func @transform_1(%arg0: i32) -> (i32, i32, i32) {
    %c0_i32 = arith.constant 0 : i32
    %c0_i32_0 = arith.constant 0 : i32
    %c0_i32_1 = arith.constant 0 : i32
    return %arg0, %c0_i32, %c0_i32_0 : i32, i32, i32
  }
  func.func @transform_2(%arg0: i32) -> (i32, i32) {
    %c0_i32 = arith.constant 0 : i32
    %c0_i32_0 = arith.constant 0 : i32
    %c0_i32_1 = arith.constant 0 : i32
    return %c0_i32, %c0_i32_0 : i32, i32
  }
  func.func @transform_3(%arg0: i32) -> (i32, i32) {
    %c0_i32 = arith.constant 0 : i32
    %c0_i32_0 = arith.constant 0 : i32
    %c0_i32_1 = arith.constant 0 : i32
    return %c0_i32, %c0_i32_0 : i32, i32
  }
  func.func @transform_4(%arg0: i32) -> (i32, i32) {
    %c0_i32 = arith.constant 0 : i32
    %c0_i32_0 = arith.constant 0 : i32
    %c0_i32_1 = arith.constant 0 : i32
    return %c0_i32, %c0_i32_0 : i32, i32
  }
  func.func @transform_5(%arg0: i32) -> (i32, i32) {
    %c0_i32 = arith.constant 0 : i32
    %c0_i32_0 = arith.constant 0 : i32
    %c0_i32_1 = arith.constant 0 : i32
    return %c0_i32, %c0_i32_0 : i32, i32
  }
  func.func @transform_6(%arg0: i32) -> (i32, i32, i32) {
    %c0_i32 = arith.constant 0 : i32
    %c0_i32_0 = arith.constant 0 : i32
    %c0_i32_1 = arith.constant 0 : i32
    return %arg0, %c0_i32, %c0_i32_0 : i32, i32, i32
  }
}

</mosaic_0001>

<llo_original>
// kernel: tpu_custom_call.1
$region0: #{tpu_custom_call.1}
  #allocation0 [shape = 'u32[]', space=smem, size = 0x4, offset = 0x4, fixed_abs, tag = 'smem constant byte address 0x4 - core index']
  #allocation1 [shape = 'u32[144,128]{1,0:T(1,128)}', space=vmem, size = 0x12000, scoped, tag = 'internal scratch']
  #allocation2 [shape = 'bf16[8,1152]{1,0:T(8,128)(2,1)}', space=vmem, size = 0x4800, scoped, tag = 'scratch operand']
  %s0 = inlined_call_operand.hbm [shape: bf16[2,8,1152], index: 0, kind: input, shape index: {}]
  %s1 = inlined_call_operand.hbm [shape: f32[2,8,896], index: 1, kind: input, shape index: {}]
  %s2 = inlined_call_operand.hbm [shape: f32[1,896], index: 2, kind: input, shape index: {}]
  %s3 = inlined_call_operand.vmem [shape: bf16[8,216], index: 3, kind: input, shape index: {}]
  %s4 = inlined_call_operand.vmem [shape: bf16[8,216], index: 4, kind: input, shape index: {}]
  %s5 = inlined_call_operand.vmem [shape: f32[8,2], index: 5, kind: input, shape index: {}]
  %s6 = inlined_call_operand.hbm [shape: f32[2,8,896], index: 6, kind: output, shape index: {}]
  %s7 = sld [smem:[#allocation0]]
  $region69: #{tpu_custom_call.1} parent=0
    _
  %s9 = ssub.s32 1, %s7
  %s10 = scalar_select 0, %s9, %s7
  $region1: #{tpu_custom_call.1} parent=0
    #allocation3 [shape = 'u8[36864]{0}', space=vmem, size = 0x9000, scoped, tag = 'input window, operand 0']
    #allocation4 [shape = 's32[2]{0}', space=sflag, size = 0x8, scoped, tag = 'scoped memory for tpu_custom_call.1']
    #allocation5 [shape = 's32[2]{0}', space=sflag, size = 0x8, scoped, tag = 'scoped memory for tpu_custom_call.1']
    #allocation6 [shape = 'u8[57344]{0}', space=vmem, size = 0xe000, scoped, tag = 'input window, operand 1']
    #allocation7 [shape = 's32[2]{0}', space=sflag, size = 0x8, scoped, tag = 'scoped memory for tpu_custom_call.1']
    #allocation8 [shape = 'u8[3584]{0}', space=vmem, size = 0x1000, scoped, tag = 'input window, operand 2, single buffered']
    #allocation9 [shape = 'u8[57344]{0}', space=vmem, size = 0xe000, scoped, tag = 'output window, operand 0']
    %11 = vsyncpa [#allocation4], 0
    %s12 = scalar_lea.sflag [#allocation4], 1
    %13 = vsyncpa %s12, 0
    %14 = vsyncpa [#allocation7], 0
    %s15 = scalar_lea.sflag [#allocation7], 1
    %16 = vsyncpa %s15, 0
    %17 = vsyncpa [#allocation5], 0
    %s18 = scalar_lea.sflag [#allocation5], 1
    %19 = vsyncpa %s18, 0
    loop: start=0, step=1, limit=4
    $region2: #{tpu_custom_call.1} parent=1 // loop_pre_header
      _
    $region3: #{tpu_custom_call.1} parent=1 // loop_header
      %s21 = sphi 0, %s25
      %p22 = scmp.ge.s32.totalorder %s21, 4
      %s31 = sphi 0, %s33
      %s34 = sphi 0, %s31
      %s35 = sphi 0, %s34
      %s51 = sphi 0, %s35
      %s57 = sphi 0, %s59
      %s60 = sphi 0, %s57
      %s61 = sphi 0, %s60
      %s77 = sphi 0, %s61
      %s81 = sphi 0, %s81
      %s83 = sphi 0, %s81
      %s84 = sphi 0, %s83
      %s98 = sphi 0, %s84
      %s102 = sphi 0, %s102
      %s104 = sphi 0, %s102
      %s105 = sphi 0, %s104
      %s119 = sphi 0, %s105
      %s123 = sphi 0, %s123
      %s125 = sphi 0, %s123
      %s126 = sphi 0, %s125
      %s140 = sphi 0, %s126
      %s144 = sphi 0, %s144
      %s146 = sphi 0, %s144
      %s147 = sphi 0, %s146
      %s161 = sphi 0, %s147
      %s167 = sphi 0, %s169
      %s170 = sphi 0, %s167
      %s171 = sphi 0, %s170
      %s187 = sphi 0, %s171
    $region4: #{tpu_custom_call.1} parent=1 // loop_header_branch
      %24 = sbr.rel (%p22) target = $region8
    $region5: #{tpu_custom_call.1} parent=1 // loop_body
      %s26 = ssub.s32 %s21, 1
      %s27 = ssub.s32 %s21, 2
      %s28 = sadd.s32 %s21, 1
      %s29 = ssub.s32 %s21, %s28
      %p30 = scmp.eq.s32.totalorder %s29, 0
      %s32 = sadd.s32 %s31, 1
      %s33 = scalar_select %p30, %s31, %s32
      %p36 = pneg %p30
      %p37 = scmp.eq.s32.totalorder %s21, 1
      %p38 = por %p36, %p37
      %p39 = scmp.ne.s32.totalorder %s31, %s34
      %p40 = scmp.eq.s32.totalorder %s21, 0
      %p41 = por %p39, %p40
      %p42 = scmp.ne.s32.totalorder %s31, %s34
      %p43 = scmp.eq.s32.totalorder %s26, 1
      %p44 = por %p42, %p43
      %p45 = scmp.ne.s32.totalorder %s34, %s35
      %p46 = scmp.eq.s32.totalorder %s26, 0
      %p47 = por %p45, %p46
      %p48 = scmp.ne.s32.totalorder %s34, %s35
      %p49 = scmp.eq.s32.totalorder %s27, 1
      %p50 = por %p48, %p49
      %p52 = scmp.ne.s32.totalorder %s35, %s51
      %p53 = scmp.eq.s32.totalorder %s27, 0
      %p54 = por %p52, %p53
      %s55 = ssub.s32 %s21, %s28
      %p56 = scmp.eq.s32.totalorder %s55, 0
      %s58 = sadd.s32 %s57, 1
      %s59 = scalar_select %p56, %s57, %s58
      %p62 = pneg %p56
      %p63 = scmp.eq.s32.totalorder %s21, 1
      %p64 = por %p62, %p63
      %p65 = scmp.ne.s32.totalorder %s57, %s60
      %p66 = scmp.eq.s32.totalorder %s21, 0
      %p67 = por %p65, %p66
      %p68 = scmp.ne.s32.totalorder %s57, %s60
      %p69 = scmp.eq.s32.totalorder %s26, 1
      %p70 = por %p68, %p69
      %p71 = scmp.ne.s32.totalorder %s60, %s61
      %p72 = scmp.eq.s32.totalorder %s26, 0
      %p73 = por %p71, %p72
      %p74 = scmp.ne.s32.totalorder %s60, %s61
      %p75 = scmp.eq.s32.totalorder %s27, 1
      %p76 = por %p74, %p75
      %p78 = scmp.ne.s32.totalorder %s61, %s77
      %p79 = scmp.eq.s32.totalorder %s27, 0
      %p80 = por %p78, %p79
      %s82 = sadd.s32 %s81, 1
      %p85 = scmp.eq.s32.totalorder %s21, 1
      %p86 = scmp.ne.s32.totalorder %s81, %s83
      %p87 = scmp.eq.s32.totalorder %s21, 0
      %p88 = por %p86, %p87
      %p89 = scmp.ne.s32.totalorder %s81, %s83
      %p90 = scmp.eq.s32.totalorder %s26, 1
      %p91 = por %p89, %p90
      %p92 = scmp.ne.s32.totalorder %s83, %s84
      %p93 = scmp.eq.s32.totalorder %s26, 0
      %p94 = por %p92, %p93
      %p95 = scmp.ne.s32.totalorder %s83, %s84
      %p96 = scmp.eq.s32.totalorder %s27, 1
      %p97 = por %p95, %p96
      %p99 = scmp.ne.s32.totalorder %s84, %s98
      %p100 = scmp.eq.s32.totalorder %s27, 0
      %p101 = por %p99, %p100
      %s103 = sadd.s32 %s102, 1
      %p106 = scmp.eq.s32.totalorder %s21, 1
      %p107 = scmp.ne.s32.totalorder %s102, %s104
      %p108 = scmp.eq.s32.totalorder %s21, 0
      %p109 = por %p107, %p108
      %p110 = scmp.ne.s32.totalorder %s102, %s104
      %p111 = scmp.eq.s32.totalorder %s26, 1
      %p112 = por %p110, %p111
      %p113 = scmp.ne.s32.totalorder %s104, %s105
      %p114 = scmp.eq.s32.totalorder %s26, 0
      %p115 = por %p113, %p114
      %p116 = scmp.ne.s32.totalorder %s104, %s105
      %p117 = scmp.eq.s32.totalorder %s27, 1
      %p118 = por %p116, %p117
      %p120 = scmp.ne.s32.totalorder %s105, %s119
      %p121 = scmp.eq.s32.totalorder %s27, 0
      %p122 = por %p120, %p121
      %s124 = sadd.s32 %s123, 1
      %p127 = scmp.eq.s32.totalorder %s21, 1
      %p128 = scmp.ne.s32.totalorder %s123, %s125
      %p129 = scmp.eq.s32.totalorder %s21, 0
      %p130 = por %p128, %p129
      %p131 = scmp.ne.s32.totalorder %s123, %s125
      %p132 = scmp.eq.s32.totalorder %s26, 1
      %p133 = por %p131, %p132
      %p134 = scmp.ne.s32.totalorder %s125, %s126
      %p135 = scmp.eq.s32.totalorder %s26, 0
      %p136 = por %p134, %p135
      %p137 = scmp.ne.s32.totalorder %s125, %s126
      %p138 = scmp.eq.s32.totalorder %s27, 1
      %p139 = por %p137, %p138
      %p141 = scmp.ne.s32.totalorder %s126, %s140
      %p142 = scmp.eq.s32.totalorder %s27, 0
      %p143 = por %p141, %p142
      %s145 = sadd.s32 %s144, 1
      %p148 = scmp.eq.s32.totalorder %s21, 1
      %p149 = scmp.ne.s32.totalorder %s144, %s146
      %p150 = scmp.eq.s32.totalorder %s21, 0
      %p151 = por %p149, %p150
      %p152 = scmp.ne.s32.totalorder %s144, %s146
      %p153 = scmp.eq.s32.totalorder %s26, 1
      %p154 = por %p152, %p153
      %p155 = scmp.ne.s32.totalorder %s146, %s147
      %p156 = scmp.eq.s32.totalorder %s26, 0
      %p157 = por %p155, %p156
      %p158 = scmp.ne.s32.totalorder %s146, %s147
      %p159 = scmp.eq.s32.totalorder %s27, 1
      %p160 = por %p158, %p159
      %p162 = scmp.ne.s32.totalorder %s147, %s161
      %p163 = scmp.eq.s32.totalorder %s27, 0
      %p164 = por %p162, %p163
      %s165 = ssub.s32 %s21, %s28
      %p166 = scmp.eq.s32.totalorder %s165, 0
      %s168 = sadd.s32 %s167, 1
      %s169 = scalar_select %p166, %s167, %s168
      %p172 = pneg %p166
      %p173 = scmp.eq.s32.totalorder %s21, 1
      %p174 = por %p172, %p173
      %p175 = scmp.ne.s32.totalorder %s167, %s170
      %p176 = scmp.eq.s32.totalorder %s21, 0
      %p177 = por %p175, %p176
      %p178 = scmp.ne.s32.totalorder %s167, %s170
      %p179 = scmp.eq.s32.totalorder %s26, 1
      %p180 = por %p178, %p179
      %p181 = scmp.ne.s32.totalorder %s170, %s171
      %p182 = scmp.eq.s32.totalorder %s26, 0
      %p183 = por %p181, %p182
      %p184 = scmp.ne.s32.totalorder %s170, %s171
      %p185 = scmp.eq.s32.totalorder %s27, 1
      %p186 = por %p184, %p185
      %p188 = scmp.ne.s32.totalorder %s171, %s187
      %p189 = scmp.eq.s32.totalorder %s27, 0
      %p190 = por %p188, %p189
      %p191 = scmp.le.s32.totalorder 1, %s21
      %p192 = scmp.lt.s32.totalorder %s21, 3
      %p193 = pnand %p191, %p192
      %p194 = pneg %p193
      // Predicated region
      $region9: #{tpu_custom_call.1} parent=5 // pred_check
        _
      $region10: #{tpu_custom_call.1} parent=5 // pred_check_branch
        %196 = sbr.rel (%p193) target = $region12
      $region11: #{tpu_custom_call.1} parent=5 // pred_region
        %s197 = ssub.s32 %s21, 1
        // Predicated region
        $region13: #{tpu_custom_call.1} parent=11 // pred_check
          %p198 = pneg %p94
        $region14: #{tpu_custom_call.1} parent=11 // pred_check_branch
          %200 = sbr.rel (%p198) target = $region16
        $region15: #{tpu_custom_call.1} parent=11 // pred_region
          %s202 = ssub.s32 112, 112
          %203 = vsyncadd [#allocation7], %s202
          %s205 = sshll.u32 [#allocation8], 4
          %s206 = int_to_ptr.vmem [resolvable:$true] %s205
          %208 = dma.hbm_to_vmem [thread:$0]  %s2, 112, %s206, [#allocation7]
        $region16: #{tpu_custom_call.1} parent=11 // pred_fallthru
          _
        // Predicated region
        $region17: #{tpu_custom_call.1} parent=11 // pred_check
          %p209 = pneg %p115
        $region18: #{tpu_custom_call.1} parent=11 // pred_check_branch
          %211 = sbr.rel (%p209) target = $region20
        $region19: #{tpu_custom_call.1} parent=11 // pred_region
          _
        $region20: #{tpu_custom_call.1} parent=11 // pred_fallthru
          _
        // Predicated region
        $region21: #{tpu_custom_call.1} parent=11 // pred_check
          %p212 = pneg %p136
        $region22: #{tpu_custom_call.1} parent=11 // pred_check_branch
          %214 = sbr.rel (%p212) target = $region24
        $region23: #{tpu_custom_call.1} parent=11 // pred_region
          _
        $region24: #{tpu_custom_call.1} parent=11 // pred_fallthru
          _
        // Predicated region
        $region25: #{tpu_custom_call.1} parent=11 // pred_check
          %p215 = pneg %p157
        $region26: #{tpu_custom_call.1} parent=11 // pred_check_branch
          %217 = sbr.rel (%p215) target = $region28
        $region27: #{tpu_custom_call.1} parent=11 // pred_region
          _
        $region28: #{tpu_custom_call.1} parent=11 // pred_fallthru
          _
      $region12: #{tpu_custom_call.1} parent=5 // pred_fallthru
        _
      %p218 = scmp.lt.s32.totalorder %s21, 2
      // Predicated region
      $region29: #{tpu_custom_call.1} parent=5 // pred_check
        %p219 = pneg %p218
      $region30: #{tpu_custom_call.1} parent=5 // pred_check_branch
        %221 = sbr.rel (%p219) target = $region32
      $region31: #{tpu_custom_call.1} parent=5 // pred_region
        // Predicated region
        $region33: #{tpu_custom_call.1} parent=31 // pred_check
          %p222 = pneg %p41
        $region34: #{tpu_custom_call.1} parent=31 // pred_check_branch
          %224 = sbr.rel (%p222) target = $region36
        $region35: #{tpu_custom_call.1} parent=31 // pred_region
          %s225 = sand.u32 %s31, 1
          %s226 = scalar_lea.sflag [#allocation4], %s225
          %s227 = sand.u32 %s31, 1
          %s228 = smul.addr %s227, 36
          %s229 = scalar_lea.vmem [#allocation3], %s228
          %s231 = ssub.s32 576, 576
          %232 = vsyncadd %s226, %s231
          %s233 = smul.addr %s21, 9
          %s234 = smul.addr %s233, 64
          %s235 = scalar_lea.hbm %s0, %s234
          %s237 = sshll.u32 %s229, 4
          %s238 = int_to_ptr.vmem [resolvable:$true] %s237
          %240 = dma.hbm_to_vmem [thread:$0]  %s235, 576, %s238, %s226
        $region36: #{tpu_custom_call.1} parent=31 // pred_fallthru
          _
        // Predicated region
        $region37: #{tpu_custom_call.1} parent=31 // pred_check
          %p241 = pneg %p67
        $region38: #{tpu_custom_call.1} parent=31 // pred_check_branch
          %243 = sbr.rel (%p241) target = $region40
        $region39: #{tpu_custom_call.1} parent=31 // pred_region
          %s244 = sand.u32 %s21, 1
          %s245 = scalar_lea.sflag [#allocation7], %s244
          %s246 = sand.u32 %s57, 1
          %s247 = smul.addr %s246, 56
          %s248 = scalar_lea.vmem [#allocation6], %s247
          %s250 = ssub.s32 896, 896
          %251 = vsyncadd %s245, %s250
          %s252 = smul.addr %s21, 7
          %s253 = smul.addr %s252, 128
          %s254 = scalar_lea.hbm %s1, %s253
          %s256 = sshll.u32 %s248, 4
          %s257 = int_to_ptr.vmem [resolvable:$true] %s256
          %259 = dma.hbm_to_vmem [thread:$0]  %s254, 896, %s257, %s245
        $region40: #{tpu_custom_call.1} parent=31 // pred_fallthru
          _
      $region32: #{tpu_custom_call.1} parent=5 // pred_fallthru
        _
      %p260 = scmp.le.s32.totalorder 1, %s21
      %p261 = scmp.lt.s32.totalorder %s21, 3
      %p262 = pnand %p260, %p261
      %p263 = pneg %p262
      // Predicated region
      $region41: #{tpu_custom_call.1} parent=5 // pred_check
        _
      $region42: #{tpu_custom_call.1} parent=5 // pred_check_branch
        %265 = sbr.rel (%p262) target = $region44
      $region43: #{tpu_custom_call.1} parent=5 // pred_region
        %s266 = ssub.s32 %s21, 1
        %s267 = sand.u32 %s34, 1
        %s268 = scalar_lea.sflag [#allocation4], %s267
        %s269 = sand.u32 %s34, 1
        %s270 = smul.addr %s269, 36
        %s271 = scalar_lea.vmem [#allocation3], %s270
        // Predicated region
        $region45: #{tpu_custom_call.1} parent=43 // pred_check
          %p272 = pneg %p47
        $region46: #{tpu_custom_call.1} parent=43 // pred_check_branch
          %274 = sbr.rel (%p272) target = $region48
        $region47: #{tpu_custom_call.1} parent=43 // pred_region
          %275 = dma.done %s268, 576
        $region48: #{tpu_custom_call.1} parent=43 // pred_fallthru
          _
        %s276 = sand.u32 %s26, 1
        %s277 = scalar_lea.sflag [#allocation7], %s276
        %s278 = sand.u32 %s60, 1
        %s279 = smul.addr %s278, 56
        %s280 = scalar_lea.vmem [#allocation6], %s279
        // Predicated region
        $region49: #{tpu_custom_call.1} parent=43 // pred_check
          %p281 = pneg %p73
        $region50: #{tpu_custom_call.1} parent=43 // pred_check_branch
          %283 = sbr.rel (%p281) target = $region52
        $region51: #{tpu_custom_call.1} parent=43 // pred_region
          %284 = dma.done %s277, 896
        $region52: #{tpu_custom_call.1} parent=43 // pred_fallthru
          _
        // Predicated region
        $region53: #{tpu_custom_call.1} parent=43 // pred_check
          %p285 = pneg %p94
        $region54: #{tpu_custom_call.1} parent=43 // pred_check_branch
          %287 = sbr.rel (%p285) target = $region56
        $region55: #{tpu_custom_call.1} parent=43 // pred_region
          %288 = dma.done [#allocation7], 112
        $region56: #{tpu_custom_call.1} parent=43 // pred_fallthru
          _
        %s289 = sand.u32 %s34, 1
        %s290 = scalar_lea.sflag [#allocation4], %s289
        %s291 = sand.u32 %s34, 1
        %s292 = smul.addr %s291, 36
        %s293 = scalar_lea.vmem [#allocation3], %s292
        %p294 = pneg %p47
        %p295 = pneg %p44
        %s296 = sand.u32 %s26, 1
        %s297 = scalar_lea.sflag [#allocation7], %s296
        %s298 = sand.u32 %s60, 1
        %s299 = smul.addr %s298, 56
        %s300 = scalar_lea.vmem [#allocation6], %s299
        %p301 = pneg %p73
        %p302 = pneg %p70
        %p303 = pneg %p94
        %p304 = pneg %p91
        %p305 = pneg %p115
        %p306 = pneg %p112
        %p307 = pneg %p136
        %p308 = pneg %p133
        %p309 = pneg %p157
        %p310 = pneg %p154
        %p311 = pneg %p183
        %p312 = pneg %p180
        %s313 = sand.u32 %s170, 1
        %s314 = scalar_lea.sflag [#allocation5], %s313
        %s315 = sand.u32 %s170, 1
        %s316 = smul.addr %s315, 56
        %s317 = scalar_lea.vmem [#allocation9], %s316
        %v319 = vld [vmem:[#allocation8] sm:$0xff]
        %v320 = vld [vmem:[%s271] sm:$0xff]
        %v321 = vld [vmem:[%s271 + $0x8] sm:$0xff]
        %v322 = vld [vmem:[%s271 + $0x10] sm:$0xff]
        %v323 = vld [vmem:[%s271 + $0x18] sm:$0xf]
        %v324 = vld [vmem:[%s271 + $0x18] sm:$0xff]
        %v325 = vld [vmem:[%s271 + $0x4] sm:$0xff]
        %v326 = vld [vmem:[%s271 + $0xc] sm:$0xff]
        %v327 = vld [vmem:[%s271 + $0x14] sm:$0xff]
        %v328 = vld [vmem:[%s271 + $0x1c] sm:$0xff]
        %v333 = vunpack.c.l.b16 %v320
        %v334 = vunpack.c.h.b16 %v320
        %v335 = vunpack.c.l.b16 %v321
        %v336 = vunpack.c.h.b16 %v321
        %v337 = vunpack.c.l.b16 %v322
        %v338 = vunpack.c.h.b16 %v322
        %v339 = vunpack.c.l.b16 %v323
        %v340 = vpack.c.b16 %v333, %v333
        %v341 = vpack.c.b16 %v334, %v334
        %v342 = vpack.c.b16 %v335, %v335
        %v343 = vpack.c.b16 %v336, %v336
        %v344 = vpack.c.b16 %v337, %v337
        %v345 = vpack.c.b16 %v338, %v338
        %v346 = vpack.c.b16 %v339, %v339
        %v348 = vunpack.c.l.b16 %v324
        %v349 = vunpack.c.h.b16 %v324
        %v350 = vpack.c.b16 %v348, %v348
        %v351 = vpack.c.b16 %v349, %v349
        %352 = vrot.lane.b32.xlu0 %v340, 127
        %v353 = vpop.permute.xlu0 %352
        %354 = vrot.lane.b32.xlu0 %v341, 127
        %v355 = vpop.permute.xlu0 %354
        %356 = vrot.lane.b32.xlu0 %v342, 127
        %v357 = vpop.permute.xlu0 %356
        %358 = vrot.lane.b32.xlu0 %v343, 127
        %v359 = vpop.permute.xlu0 %358
        %360 = vrot.lane.b32.xlu0 %v344, 127
        %v361 = vpop.permute.xlu0 %360
        %362 = vrot.lane.b32.xlu0 %v345, 127
        %v363 = vpop.permute.xlu0 %362
        %364 = vrot.lane.b32.xlu0 %v350, 127
        %v365 = vpop.permute.xlu0 %364
        %366 = vrot.lane.b32.xlu0 %v351, 127
        %v367 = vpop.permute.xlu0 %366
        %vm368 = vcmask 1039360
        %v369 = vsel %vm368, %v353, %v355
        %v370 = vsel %vm368, %v355, %v357
        %v371 = vsel %vm368, %v357, %v359
        %v372 = vsel %vm368, %v359, %v361
        %v373 = vsel %vm368, %v361, %v363
        %v374 = vsel %vm368, %v363, %v365
        %v375 = vsel %vm368, %v365, %v367
        %376 = vrot.lane.b32.xlu0 %v340, 126
        %v377 = vpop.permute.xlu0 %376
        %378 = vrot.lane.b32.xlu0 %v341, 126
        %v379 = vpop.permute.xlu0 %378
        %380 = vrot.lane.b32.xlu0 %v342, 126
        %v381 = vpop.permute.xlu0 %380
        %382 = vrot.lane.b32.xlu0 %v343, 126
        %v383 = vpop.permute.xlu0 %382
        %384 = vrot.lane.b32.xlu0 %v344, 126
        %v385 = vpop.permute.xlu0 %384
        %386 = vrot.lane.b32.xlu0 %v345, 126
        %v387 = vpop.permute.xlu0 %386
        %388 = vrot.lane.b32.xlu0 %v350, 126
        %v389 = vpop.permute.xlu0 %388
        %390 = vrot.lane.b32.xlu0 %v351, 126
        %v391 = vpop.permute.xlu0 %390
        %vm392 = vcmask 1031168
        %v393 = vsel %vm392, %v377, %v379
        %v394 = vsel %vm392, %v379, %v381
        %v395 = vsel %vm392, %v381, %v383
        %v396 = vsel %vm392, %v383, %v385
        %v397 = vsel %vm392, %v385, %v387
        %v398 = vsel %vm392, %v387, %v389
        %v399 = vsel %vm392, %v389, %v391
        %400 = vrot.lane.b32.xlu0 %v340, 118
        %v401 = vpop.permute.xlu0 %400
        %402 = vrot.lane.b32.xlu0 %v341, 118
        %v403 = vpop.permute.xlu0 %402
        %404 = vrot.lane.b32.xlu0 %v342, 118
        %v405 = vpop.permute.xlu0 %404
        %406 = vrot.lane.b32.xlu0 %v343, 118
        %v407 = vpop.permute.xlu0 %406
        %408 = vrot.lane.b32.xlu0 %v344, 118
        %v409 = vpop.permute.xlu0 %408
        %410 = vrot.lane.b32.xlu0 %v345, 118
        %v411 = vpop.permute.xlu0 %410
        %412 = vrot.lane.b32.xlu0 %v350, 118
        %v413 = vpop.permute.xlu0 %412
        %414 = vrot.lane.b32.xlu0 %v351, 118
        %v415 = vpop.permute.xlu0 %414
        %vm416 = vcmask 965632
        %v417 = vsel %vm416, %v401, %v403
        %v418 = vsel %vm416, %v403, %v405
        %v419 = vsel %vm416, %v405, %v407
        %v420 = vsel %vm416, %v407, %v409
        %v421 = vsel %vm416, %v409, %v411
        %v422 = vsel %vm416, %v411, %v413
        %v423 = vsel %vm416, %v413, %v415
        %424 = vrot.lane.b32.xlu0 %v340, 117
        %v425 = vpop.permute.xlu0 %424
        %426 = vrot.lane.b32.xlu0 %v341, 117
        %v427 = vpop.permute.xlu0 %426
        %428 = vrot.lane.b32.xlu0 %v342, 117
        %v429 = vpop.permute.xlu0 %428
        %430 = vrot.lane.b32.xlu0 %v343, 117
        %v431 = vpop.permute.xlu0 %430
        %432 = vrot.lane.b32.xlu0 %v344, 117
        %v433 = vpop.permute.xlu0 %432
        %434 = vrot.lane.b32.xlu0 %v345, 117
        %v435 = vpop.permute.xlu0 %434
        %436 = vrot.lane.b32.xlu0 %v350, 117
        %v437 = vpop.permute.xlu0 %436
        %438 = vrot.lane.b32.xlu0 %v351, 117
        %v439 = vpop.permute.xlu0 %438
        %vm440 = vcmask 957440
        %v441 = vsel %vm440, %v425, %v427
        %v442 = vsel %vm440, %v427, %v429
        %v443 = vsel %vm440, %v429, %v431
        %v444 = vsel %vm440, %v431, %v433
        %v445 = vsel %vm440, %v433, %v435
        %v446 = vsel %vm440, %v435, %v437
        %v447 = vsel %vm440, %v437, %v439
        %448 = vrot.lane.b32.xlu0 %v340, 116
        %v449 = vpop.permute.xlu0 %448
        %450 = vrot.lane.b32.xlu0 %v341, 116
        %v451 = vpop.permute.xlu0 %450
        %452 = vrot.lane.b32.xlu0 %v342, 116
        %v453 = vpop.permute.xlu0 %452
        %454 = vrot.lane.b32.xlu0 %v343, 116
        %v455 = vpop.permute.xlu0 %454
        %456 = vrot.lane.b32.xlu0 %v344, 116
        %v457 = vpop.permute.xlu0 %456
        %458 = vrot.lane.b32.xlu0 %v345, 116
        %v459 = vpop.permute.xlu0 %458
        %460 = vrot.lane.b32.xlu0 %v350, 116
        %v461 = vpop.permute.xlu0 %460
        %462 = vrot.lane.b32.xlu0 %v351, 116
        %v463 = vpop.permute.xlu0 %462
        %vm464 = vcmask 949248
        %v465 = vsel %vm464, %v449, %v451
        %v466 = vsel %vm464, %v451, %v453
        %v467 = vsel %vm464, %v453, %v455
        %v468 = vsel %vm464, %v455, %v457
        %v469 = vsel %vm464, %v457, %v459
        %v470 = vsel %vm464, %v459, %v461
        %v471 = vsel %vm464, %v461, %v463
        %472 = vrot.lane.b32.xlu0 %v340, 108
        %v473 = vpop.permute.xlu0 %472
        %474 = vrot.lane.b32.xlu0 %v341, 108
        %v475 = vpop.permute.xlu0 %474
        %476 = vrot.lane.b32.xlu0 %v342, 108
        %v477 = vpop.permute.xlu0 %476
        %478 = vrot.lane.b32.xlu0 %v343, 108
        %v479 = vpop.permute.xlu0 %478
        %480 = vrot.lane.b32.xlu0 %v344, 108
        %v481 = vpop.permute.xlu0 %480
        %482 = vrot.lane.b32.xlu0 %v345, 108
        %v483 = vpop.permute.xlu0 %482
        %484 = vrot.lane.b32.xlu0 %v350, 108
        %v485 = vpop.permute.xlu0 %484
        %486 = vrot.lane.b32.xlu0 %v351, 108
        %v487 = vpop.permute.xlu0 %486
        %vm488 = vcmask 883712
        %v489 = vsel %vm488, %v473, %v475
        %v490 = vsel %vm488, %v475, %v477
        %v491 = vsel %vm488, %v477, %v479
        %v492 = vsel %vm488, %v479, %v481
        %v493 = vsel %vm488, %v481, %v483
        %v494 = vsel %vm488, %v483, %v485
        %v495 = vsel %vm488, %v485, %v487
        %496 = vrot.lane.b32.xlu0 %v340, 107
        %v497 = vpop.permute.xlu0 %496
        %498 = vrot.lane.b32.xlu0 %v341, 107
        %v499 = vpop.permute.xlu0 %498
        %500 = vrot.lane.b32.xlu0 %v342, 107
        %v501 = vpop.permute.xlu0 %500
        %502 = vrot.lane.b32.xlu0 %v343, 107
        %v503 = vpop.permute.xlu0 %502
        %504 = vrot.lane.b32.xlu0 %v344, 107
        %v505 = vpop.permute.xlu0 %504
        %506 = vrot.lane.b32.xlu0 %v345, 107
        %v507 = vpop.permute.xlu0 %506
        %508 = vrot.lane.b32.xlu0 %v350, 107
        %v509 = vpop.permute.xlu0 %508
        %510 = vrot.lane.b32.xlu0 %v351, 107
        %v511 = vpop.permute.xlu0 %510
        %vm512 = vcmask 875520
        %v513 = vsel %vm512, %v497, %v499
        %v514 = vsel %vm512, %v499, %v501
        %v515 = vsel %vm512, %v501, %v503
        %v516 = vsel %vm512, %v503, %v505
        %v517 = vsel %vm512, %v505, %v507
        %v518 = vsel %vm512, %v507, %v509
        %v519 = vsel %vm512, %v509, %v511
        %520 = vrot.lane.b32.xlu0 %v340, 106
        %v521 = vpop.permute.xlu0 %520
        %522 = vrot.lane.b32.xlu0 %v341, 106
        %v523 = vpop.permute.xlu0 %522
        %524 = vrot.lane.b32.xlu0 %v342, 106
        %v525 = vpop.permute.xlu0 %524
        %526 = vrot.lane.b32.xlu0 %v343, 106
        %v527 = vpop.permute.xlu0 %526
        %528 = vrot.lane.b32.xlu0 %v344, 106
        %v529 = vpop.permute.xlu0 %528
        %530 = vrot.lane.b32.xlu0 %v345, 106
        %v531 = vpop.permute.xlu0 %530
        %532 = vrot.lane.b32.xlu0 %v350, 106
        %v533 = vpop.permute.xlu0 %532
        %534 = vrot.lane.b32.xlu0 %v351, 106
        %v535 = vpop.permute.xlu0 %534
        %vm536 = vcmask 867328
        %v537 = vsel %vm536, %v521, %v523
        %v538 = vsel %vm536, %v523, %v525
        %v539 = vsel %vm536, %v525, %v527
        %v540 = vsel %vm536, %v527, %v529
        %v541 = vsel %vm536, %v529, %v531
        %v542 = vsel %vm536, %v531, %v533
        %v543 = vsel %vm536, %v533, %v535
        %544 = vrot.lane.b32.xlu0 %v340, 28
        %v545 = vpop.permute.xlu0 %544
        %546 = vrot.lane.b32.xlu0 %v341, 28
        %v547 = vpop.permute.xlu0 %546
        %548 = vrot.lane.b32.xlu0 %v342, 28
        %v549 = vpop.permute.xlu0 %548
        %550 = vrot.lane.b32.xlu0 %v343, 28
        %v551 = vpop.permute.xlu0 %550
        %552 = vrot.lane.b32.xlu0 %v344, 28
        %v553 = vpop.permute.xlu0 %552
        %554 = vrot.lane.b32.xlu0 %v345, 28
        %v555 = vpop.permute.xlu0 %554
        %556 = vrot.lane.b32.xlu0 %v350, 28
        %v557 = vpop.permute.xlu0 %556
        %558 = vrot.lane.b32.xlu0 %v351, 28
        %v559 = vpop.permute.xlu0 %558
        %vm560 = vcmask 228352
        %v561 = vsel %vm560, %v545, %v547
        %v562 = vsel %vm560, %v547, %v549
        %v563 = vsel %vm560, %v549, %v551
        %v564 = vsel %vm560, %v551, %v553
        %v565 = vsel %vm560, %v553, %v555
        %v566 = vsel %vm560, %v555, %v557
        %v567 = vsel %vm560, %v557, %v559
        %568 = vrot.lane.b32.xlu0 %v340, 27
        %v569 = vpop.permute.xlu0 %568
        %570 = vrot.lane.b32.xlu0 %v341, 27
        %v571 = vpop.permute.xlu0 %570
        %572 = vrot.lane.b32.xlu0 %v342, 27
        %v573 = vpop.permute.xlu0 %572
        %574 = vrot.lane.b32.xlu0 %v343, 27
        %v575 = vpop.permute.xlu0 %574
        %576 = vrot.lane.b32.xlu0 %v344, 27
        %v577 = vpop.permute.xlu0 %576
        %578 = vrot.lane.b32.xlu0 %v345, 27
        %v579 = vpop.permute.xlu0 %578
        %580 = vrot.lane.b32.xlu0 %v350, 27
        %v581 = vpop.permute.xlu0 %580
        %582 = vrot.lane.b32.xlu0 %v351, 27
        %v583 = vpop.permute.xlu0 %582
        %vm584 = vcmask 220160
        %v585 = vsel %vm584, %v569, %v571
        %v586 = vsel %vm584, %v571, %v573
        %v587 = vsel %vm584, %v573, %v575
        %v588 = vsel %vm584, %v575, %v577
        %v589 = vsel %vm584, %v577, %v579
        %v590 = vsel %vm584, %v579, %v581
        %v591 = vsel %vm584, %v581, %v583
        %592 = vrot.lane.b32.xlu0 %v340, 26
        %v593 = vpop.permute.xlu0 %592
        %594 = vrot.lane.b32.xlu0 %v341, 26
        %v595 = vpop.permute.xlu0 %594
        %596 = vrot.lane.b32.xlu0 %v342, 26
        %v597 = vpop.permute.xlu0 %596
        %598 = vrot.lane.b32.xlu0 %v343, 26
        %v599 = vpop.permute.xlu0 %598
        %600 = vrot.lane.b32.xlu0 %v344, 26
        %v601 = vpop.permute.xlu0 %600
        %602 = vrot.lane.b32.xlu0 %v345, 26
        %v603 = vpop.permute.xlu0 %602
        %604 = vrot.lane.b32.xlu0 %v350, 26
        %v605 = vpop.permute.xlu0 %604
        %606 = vrot.lane.b32.xlu0 %v351, 26
        %v607 = vpop.permute.xlu0 %606
        %vm608 = vcmask 211968
        %v609 = vsel %vm608, %v593, %v595
        %v610 = vsel %vm608, %v595, %v597
        %v611 = vsel %vm608, %v597, %v599
        %v612 = vsel %vm608, %v599, %v601
        %v613 = vsel %vm608, %v601, %v603
        %v614 = vsel %vm608, %v603, %v605
        %v615 = vsel %vm608, %v605, %v607
        %616 = vrot.lane.b32.xlu0 %v340, 18
        %v617 = vpop.permute.xlu0 %616
        %618 = vrot.lane.b32.xlu0 %v341, 18
        %v619 = vpop.permute.xlu0 %618
        %620 = vrot.lane.b32.xlu0 %v342, 18
        %v621 = vpop.permute.xlu0 %620
        %622 = vrot.lane.b32.xlu0 %v343, 18
        %v623 = vpop.permute.xlu0 %622
        %624 = vrot.lane.b32.xlu0 %v344, 18
        %v625 = vpop.permute.xlu0 %624
        %626 = vrot.lane.b32.xlu0 %v345, 18
        %v627 = vpop.permute.xlu0 %626
        %628 = vrot.lane.b32.xlu0 %v350, 18
        %v629 = vpop.permute.xlu0 %628
        %630 = vrot.lane.b32.xlu0 %v351, 18
        %v631 = vpop.permute.xlu0 %630
        %vm632 = vcmask 146432
        %v633 = vsel %vm632, %v617, %v619
        %v634 = vsel %vm632, %v619, %v621
        %v635 = vsel %vm632, %v621, %v623
        %v636 = vsel %vm632, %v623, %v625
        %v637 = vsel %vm632, %v625, %v627
        %v638 = vsel %vm632, %v627, %v629
        %v639 = vsel %vm632, %v629, %v631
        %640 = vrot.lane.b32.xlu0 %v340, 17
        %v641 = vpop.permute.xlu0 %640
        %642 = vrot.lane.b32.xlu0 %v341, 17
        %v643 = vpop.permute.xlu0 %642
        %644 = vrot.lane.b32.xlu0 %v342, 17
        %v645 = vpop.permute.xlu0 %644
        %646 = vrot.lane.b32.xlu0 %v343, 17
        %v647 = vpop.permute.xlu0 %646
        %648 = vrot.lane.b32.xlu0 %v344, 17
        %v649 = vpop.permute.xlu0 %648
        %650 = vrot.lane.b32.xlu0 %v345, 17
        %v651 = vpop.permute.xlu0 %650
        %652 = vrot.lane.b32.xlu0 %v350, 17
        %v653 = vpop.permute.xlu0 %652
        %654 = vrot.lane.b32.xlu0 %v351, 17
        %v655 = vpop.permute.xlu0 %654
        %vm656 = vcmask 138240
        %v657 = vsel %vm656, %v641, %v643
        %v658 = vsel %vm656, %v643, %v645
        %v659 = vsel %vm656, %v645, %v647
        %v660 = vsel %vm656, %v647, %v649
        %v661 = vsel %vm656, %v649, %v651
        %v662 = vsel %vm656, %v651, %v653
        %v663 = vsel %vm656, %v653, %v655
        %664 = vrot.lane.b32.xlu0 %v340, 16
        %v665 = vpop.permute.xlu0 %664
        %666 = vrot.lane.b32.xlu0 %v341, 16
        %v667 = vpop.permute.xlu0 %666
        %668 = vrot.lane.b32.xlu0 %v342, 16
        %v669 = vpop.permute.xlu0 %668
        %670 = vrot.lane.b32.xlu0 %v343, 16
        %v671 = vpop.permute.xlu0 %670
        %672 = vrot.lane.b32.xlu0 %v344, 16
        %v673 = vpop.permute.xlu0 %672
        %674 = vrot.lane.b32.xlu0 %v345, 16
        %v675 = vpop.permute.xlu0 %674
        %676 = vrot.lane.b32.xlu0 %v350, 16
        %v677 = vpop.permute.xlu0 %676
        %678 = vrot.lane.b32.xlu0 %v351, 16
        %v679 = vpop.permute.xlu0 %678
        %vm680 = vcmask 130048
        %v681 = vsel %vm680, %v665, %v667
        %v682 = vsel %vm680, %v667, %v669
        %v683 = vsel %vm680, %v669, %v671
        %v684 = vsel %vm680, %v671, %v673
        %v685 = vsel %vm680, %v673, %v675
        %v686 = vsel %vm680, %v675, %v677
        %v687 = vsel %vm680, %v677, %v679
        %688 = vrot.lane.b32.xlu0 %v340, 8
        %v689 = vpop.permute.xlu0 %688
        %690 = vrot.lane.b32.xlu0 %v341, 8
        %v691 = vpop.permute.xlu0 %690
        %692 = vrot.lane.b32.xlu0 %v342, 8
        %v693 = vpop.permute.xlu0 %692
        %694 = vrot.lane.b32.xlu0 %v343, 8
        %v695 = vpop.permute.xlu0 %694
        %696 = vrot.lane.b32.xlu0 %v344, 8
        %v697 = vpop.permute.xlu0 %696
        %698 = vrot.lane.b32.xlu0 %v345, 8
        %v699 = vpop.permute.xlu0 %698
        %700 = vrot.lane.b32.xlu0 %v350, 8
        %v701 = vpop.permute.xlu0 %700
        %702 = vrot.lane.b32.xlu0 %v351, 8
        %v703 = vpop.permute.xlu0 %702
        %vm704 = vcmask 64512
        %v705 = vsel %vm704, %v689, %v691
        %v706 = vsel %vm704, %v691, %v693
        %v707 = vsel %vm704, %v693, %v695
        %v708 = vsel %vm704, %v695, %v697
        %v709 = vsel %vm704, %v697, %v699
        %v710 = vsel %vm704, %v699, %v701
        %v711 = vsel %vm704, %v701, %v703
        %vm712 = vcmask 1043456
        %v715 = vsel %vm712, %v340, %v369
        %v719 = vsel %vm712, %v341, %v370
        %v723 = vsel %vm712, %v342, %v371
        %v727 = vsel %vm712, %v343, %v372
        %v731 = vsel %vm712, %v344, %v373
        %v735 = vsel %vm712, %v345, %v374
        %v739 = vsel %vm712, %v346, %v375
        %v743 = vsel %vm712, %v393, %v417
        %v747 = vsel %vm712, %v394, %v418
        %v751 = vsel %vm712, %v395, %v419
        %v755 = vsel %vm712, %v396, %v420
        %v759 = vsel %vm712, %v397, %v421
        %v763 = vsel %vm712, %v398, %v422
        %v767 = vsel %vm712, %v399, %v423
        %v771 = vsel %vm712, %v441, %v465
        %v775 = vsel %vm712, %v442, %v466
        %v779 = vsel %vm712, %v443, %v467
        %v783 = vsel %vm712, %v444, %v468
        %v787 = vsel %vm712, %v445, %v469
        %v791 = vsel %vm712, %v446, %v470
        %v795 = vsel %vm712, %v447, %v471
        %v799 = vsel %vm712, %v489, %v513
        %v803 = vsel %vm712, %v490, %v514
        %v807 = vsel %vm712, %v491, %v515
        %v811 = vsel %vm712, %v492, %v516
        %v815 = vsel %vm712, %v493, %v517
        %v819 = vsel %vm712, %v494, %v518
        %v823 = vsel %vm712, %v495, %v519
        %v827 = vsel %vm712, %v537, %v561
        %v831 = vsel %vm712, %v538, %v562
        %v835 = vsel %vm712, %v539, %v563
        %v839 = vsel %vm712, %v540, %v564
        %v843 = vsel %vm712, %v541, %v565
        %v847 = vsel %vm712, %v542, %v566
        %v851 = vsel %vm712, %v543, %v567
        %v855 = vsel %vm712, %v585, %v609
        %v859 = vsel %vm712, %v586, %v610
        %v863 = vsel %vm712, %v587, %v611
        %v867 = vsel %vm712, %v588, %v612
        %v871 = vsel %vm712, %v589, %v613
        %v875 = vsel %vm712, %v590, %v614
        %v879 = vsel %vm712, %v591, %v615
        %v883 = vsel %vm712, %v633, %v657
        %v887 = vsel %vm712, %v634, %v658
        %v891 = vsel %vm712, %v635, %v659
        %v895 = vsel %vm712, %v636, %v660
        %v899 = vsel %vm712, %v637, %v661
        %v903 = vsel %vm712, %v638, %v662
        %v907 = vsel %vm712, %v639, %v663
        %v911 = vsel %vm712, %v681, %v705
        %v915 = vsel %vm712, %v682, %v706
        %v919 = vsel %vm712, %v683, %v707
        %v923 = vsel %vm712, %v684, %v708
        %v927 = vsel %vm712, %v685, %v709
        %v931 = vsel %vm712, %v686, %v710
        %v935 = vsel %vm712, %v687, %v711
        %v941 = vunpack.c.l.b16 %v325
        %v942 = vunpack.c.h.b16 %v325
        %v943 = vunpack.c.l.b16 %v326
        %v944 = vunpack.c.h.b16 %v326
        %v945 = vunpack.c.l.b16 %v327
        %v946 = vunpack.c.h.b16 %v327
        %v947 = vunpack.c.l.b16 %v328
        %v948 = vunpack.c.h.b16 %v328
        %v949 = vpack.c.b16 %v941, %v941
        %v950 = vpack.c.b16 %v942, %v942
        %v951 = vpack.c.b16 %v943, %v943
        %v952 = vpack.c.b16 %v944, %v944
        %v953 = vpack.c.b16 %v945, %v945
        %v954 = vpack.c.b16 %v946, %v946
        %v955 = vpack.c.b16 %v947, %v947
        %v956 = vpack.c.b16 %v948, %v948
        %957 = vrot.lane.b32.xlu0 %v949, 49
        %v958 = vpop.permute.xlu0 %957
        %959 = vrot.lane.b32.xlu0 %v950, 49
        %v960 = vpop.permute.xlu0 %959
        %961 = vrot.lane.b32.xlu0 %v951, 49
        %v962 = vpop.permute.xlu0 %961
        %963 = vrot.lane.b32.xlu0 %v952, 49
        %v964 = vpop.permute.xlu0 %963
        %965 = vrot.lane.b32.xlu0 %v953, 49
        %v966 = vpop.permute.xlu0 %965
        %967 = vrot.lane.b32.xlu0 %v954, 49
        %v968 = vpop.permute.xlu0 %967
        %969 = vrot.lane.b32.xlu0 %v955, 49
        %v970 = vpop.permute.xlu0 %969
        %971 = vrot.lane.b32.xlu0 %v956, 49
        %v972 = vpop.permute.xlu0 %971
        %vm973 = vcmask 400384
        %v974 = vsel %vm973, %v958, %v960
        %v975 = vsel %vm973, %v960, %v962
        %v976 = vsel %vm973, %v962, %v964
        %v977 = vsel %vm973, %v964, %v966
        %v978 = vsel %vm973, %v966, %v968
        %v979 = vsel %vm973, %v968, %v970
        %v980 = vsel %vm973, %v970, %v972
        %981 = vrot.lane.b32.xlu0 %v949, 48
        %v982 = vpop.permute.xlu0 %981
        %983 = vrot.lane.b32.xlu0 %v950, 48
        %v984 = vpop.permute.xlu0 %983
        %985 = vrot.lane.b32.xlu0 %v951, 48
        %v986 = vpop.permute.xlu0 %985
        %987 = vrot.lane.b32.xlu0 %v952, 48
        %v988 = vpop.permute.xlu0 %987
        %989 = vrot.lane.b32.xlu0 %v953, 48
        %v990 = vpop.permute.xlu0 %989
        %991 = vrot.lane.b32.xlu0 %v954, 48
        %v992 = vpop.permute.xlu0 %991
        %993 = vrot.lane.b32.xlu0 %v955, 48
        %v994 = vpop.permute.xlu0 %993
        %995 = vrot.lane.b32.xlu0 %v956, 48
        %v996 = vpop.permute.xlu0 %995
        %vm997 = vcmask 392192
        %v998 = vsel %vm997, %v982, %v984
        %v999 = vsel %vm997, %v984, %v986
        %v1000 = vsel %vm997, %v986, %v988
        %v1001 = vsel %vm997, %v988, %v990
        %v1002 = vsel %vm997, %v990, %v992
        %v1003 = vsel %vm997, %v992, %v994
        %v1004 = vsel %vm997, %v994, %v996
        %1005 = vrot.lane.b32.xlu0 %v949, 47
        %v1006 = vpop.permute.xlu0 %1005
        %1007 = vrot.lane.b32.xlu0 %v950, 47
        %v1008 = vpop.permute.xlu0 %1007
        %1009 = vrot.lane.b32.xlu0 %v951, 47
        %v1010 = vpop.permute.xlu0 %1009
        %1011 = vrot.lane.b32.xlu0 %v952, 47
        %v1012 = vpop.permute.xlu0 %1011
        %1013 = vrot.lane.b32.xlu0 %v953, 47
        %v1014 = vpop.permute.xlu0 %1013
        %1015 = vrot.lane.b32.xlu0 %v954, 47
        %v1016 = vpop.permute.xlu0 %1015
        %1017 = vrot.lane.b32.xlu0 %v955, 47
        %v1018 = vpop.permute.xlu0 %1017
        %1019 = vrot.lane.b32.xlu0 %v956, 47
        %v1020 = vpop.permute.xlu0 %1019
        %vm1021 = vcmask 384000
        %v1022 = vsel %vm1021, %v1006, %v1008
        %v1023 = vsel %vm1021, %v1008, %v1010
        %v1024 = vsel %vm1021, %v1010, %v1012
        %v1025 = vsel %vm1021, %v1012, %v1014
        %v1026 = vsel %vm1021, %v1014, %v1016
        %v1027 = vsel %vm1021, %v1016, %v1018
        %v1028 = vsel %vm1021, %v1018, %v1020
        %1029 = vrot.lane.b32.xlu0 %v949, 39
        %v1030 = vpop.permute.xlu0 %1029
        %1031 = vrot.lane.b32.xlu0 %v950, 39
        %v1032 = vpop.permute.xlu0 %1031
        %1033 = vrot.lane.b32.xlu0 %v951, 39
        %v1034 = vpop.permute.xlu0 %1033
        %1035 = vrot.lane.b32.xlu0 %v952, 39
        %v1036 = vpop.permute.xlu0 %1035
        %1037 = vrot.lane.b32.xlu0 %v953, 39
        %v1038 = vpop.permute.xlu0 %1037
        %1039 = vrot.lane.b32.xlu0 %v954, 39
        %v1040 = vpop.permute.xlu0 %1039
        %1041 = vrot.lane.b32.xlu0 %v955, 39
        %v1042 = vpop.permute.xlu0 %1041
        %1043 = vrot.lane.b32.xlu0 %v956, 39
        %v1044 = vpop.permute.xlu0 %1043
        %vm1045 = vcmask 318464
        %v1046 = vsel %vm1045, %v1030, %v1032
        %v1047 = vsel %vm1045, %v1032, %v1034
        %v1048 = vsel %vm1045, %v1034, %v1036
        %v1049 = vsel %vm1045, %v1036, %v1038
        %v1050 = vsel %vm1045, %v1038, %v1040
        %v1051 = vsel %vm1045, %v1040, %v1042
        %v1052 = vsel %vm1045, %v1042, %v1044
        %1053 = vrot.lane.b32.xlu0 %v949, 38
        %v1054 = vpop.permute.xlu0 %1053
        %1055 = vrot.lane.b32.xlu0 %v950, 38
        %v1056 = vpop.permute.xlu0 %1055
        %1057 = vrot.lane.b32.xlu0 %v951, 38
        %v1058 = vpop.permute.xlu0 %1057
        %1059 = vrot.lane.b32.xlu0 %v952, 38
        %v1060 = vpop.permute.xlu0 %1059
        %1061 = vrot.lane.b32.xlu0 %v953, 38
        %v1062 = vpop.permute.xlu0 %1061
        %1063 = vrot.lane.b32.xlu0 %v954, 38
        %v1064 = vpop.permute.xlu0 %1063
        %1065 = vrot.lane.b32.xlu0 %v955, 38
        %v1066 = vpop.permute.xlu0 %1065
        %1067 = vrot.lane.b32.xlu0 %v956, 38
        %v1068 = vpop.permute.xlu0 %1067
        %vm1069 = vcmask 310272
        %v1070 = vsel %vm1069, %v1054, %v1056
        %v1071 = vsel %vm1069, %v1056, %v1058
        %v1072 = vsel %vm1069, %v1058, %v1060
        %v1073 = vsel %vm1069, %v1060, %v1062
        %v1074 = vsel %vm1069, %v1062, %v1064
        %v1075 = vsel %vm1069, %v1064, %v1066
        %v1076 = vsel %vm1069, %v1066, %v1068
        %1077 = vrot.lane.b32.xlu0 %v949, 37
        %v1078 = vpop.permute.xlu0 %1077
        %1079 = vrot.lane.b32.xlu0 %v950, 37
        %v1080 = vpop.permute.xlu0 %1079
        %1081 = vrot.lane.b32.xlu0 %v951, 37
        %v1082 = vpop.permute.xlu0 %1081
        %1083 = vrot.lane.b32.xlu0 %v952, 37
        %v1084 = vpop.permute.xlu0 %1083
        %1085 = vrot.lane.b32.xlu0 %v953, 37
        %v1086 = vpop.permute.xlu0 %1085
        %1087 = vrot.lane.b32.xlu0 %v954, 37
        %v1088 = vpop.permute.xlu0 %1087
        %1089 = vrot.lane.b32.xlu0 %v955, 37
        %v1090 = vpop.permute.xlu0 %1089
        %1091 = vrot.lane.b32.xlu0 %v956, 37
        %v1092 = vpop.permute.xlu0 %1091
        %vm1093 = vcmask 302080
        %v1094 = vsel %vm1093, %v1078, %v1080
        %v1095 = vsel %vm1093, %v1080, %v1082
        %v1096 = vsel %vm1093, %v1082, %v1084
        %v1097 = vsel %vm1093, %v1084, %v1086
        %v1098 = vsel %vm1093, %v1086, %v1088
        %v1099 = vsel %vm1093, %v1088, %v1090
        %v1100 = vsel %vm1093, %v1090, %v1092
        %1101 = vrot.lane.b32.xlu0 %v949, 29
        %v1102 = vpop.permute.xlu0 %1101
        %1103 = vrot.lane.b32.xlu0 %v950, 29
        %v1104 = vpop.permute.xlu0 %1103
        %1105 = vrot.lane.b32.xlu0 %v951, 29
        %v1106 = vpop.permute.xlu0 %1105
        %1107 = vrot.lane.b32.xlu0 %v952, 29
        %v1108 = vpop.permute.xlu0 %1107
        %1109 = vrot.lane.b32.xlu0 %v953, 29
        %v1110 = vpop.permute.xlu0 %1109
        %1111 = vrot.lane.b32.xlu0 %v954, 29
        %v1112 = vpop.permute.xlu0 %1111
        %1113 = vrot.lane.b32.xlu0 %v955, 29
        %v1114 = vpop.permute.xlu0 %1113
        %1115 = vrot.lane.b32.xlu0 %v956, 29
        %v1116 = vpop.permute.xlu0 %1115
        %vm1117 = vcmask 236544
        %v1118 = vsel %vm1117, %v1102, %v1104
        %v1119 = vsel %vm1117, %v1104, %v1106
        %v1120 = vsel %vm1117, %v1106, %v1108
        %v1121 = vsel %vm1117, %v1108, %v1110
        %v1122 = vsel %vm1117, %v1110, %v1112
        %v1123 = vsel %vm1117, %v1112, %v1114
        %v1124 = vsel %vm1117, %v1114, %v1116
        %1125 = vrot.lane.b32.xlu0 %v949, 28
        %v1126 = vpop.permute.xlu0 %1125
        %1127 = vrot.lane.b32.xlu0 %v950, 28
        %v1128 = vpop.permute.xlu0 %1127
        %1129 = vrot.lane.b32.xlu0 %v951, 28
        %v1130 = vpop.permute.xlu0 %1129
        %1131 = vrot.lane.b32.xlu0 %v952, 28
        %v1132 = vpop.permute.xlu0 %1131
        %1133 = vrot.lane.b32.xlu0 %v953, 28
        %v1134 = vpop.permute.xlu0 %1133
        %1135 = vrot.lane.b32.xlu0 %v954, 28
        %v1136 = vpop.permute.xlu0 %1135
        %1137 = vrot.lane.b32.xlu0 %v955, 28
        %v1138 = vpop.permute.xlu0 %1137
        %1139 = vrot.lane.b32.xlu0 %v956, 28
        %v1140 = vpop.permute.xlu0 %1139
        %v1141 = vsel %vm560, %v1126, %v1128
        %v1142 = vsel %vm560, %v1128, %v1130
        %v1143 = vsel %vm560, %v1130, %v1132
        %v1144 = vsel %vm560, %v1132, %v1134
        %v1145 = vsel %vm560, %v1134, %v1136
        %v1146 = vsel %vm560, %v1136, %v1138
        %v1147 = vsel %vm560, %v1138, %v1140
        %1148 = vrot.lane.b32.xlu0 %v949, 27
        %v1149 = vpop.permute.xlu0 %1148
        %1150 = vrot.lane.b32.xlu0 %v950, 27
        %v1151 = vpop.permute.xlu0 %1150
        %1152 = vrot.lane.b32.xlu0 %v951, 27
        %v1153 = vpop.permute.xlu0 %1152
        %1154 = vrot.lane.b32.xlu0 %v952, 27
        %v1155 = vpop.permute.xlu0 %1154
        %1156 = vrot.lane.b32.xlu0 %v953, 27
        %v1157 = vpop.permute.xlu0 %1156
        %1158 = vrot.lane.b32.xlu0 %v954, 27
        %v1159 = vpop.permute.xlu0 %1158
        %1160 = vrot.lane.b32.xlu0 %v955, 27
        %v1161 = vpop.permute.xlu0 %1160
        %1162 = vrot.lane.b32.xlu0 %v956, 27
        %v1163 = vpop.permute.xlu0 %1162
        %v1164 = vsel %vm584, %v1149, %v1151
        %v1165 = vsel %vm584, %v1151, %v1153
        %v1166 = vsel %vm584, %v1153, %v1155
        %v1167 = vsel %vm584, %v1155, %v1157
        %v1168 = vsel %vm584, %v1157, %v1159
        %v1169 = vsel %vm584, %v1159, %v1161
        %v1170 = vsel %vm584, %v1161, %v1163
        %v1172 = vsel %vm712, %v350, %v375
        %v1175 = vsel %vm712, %v351, %v367
        %v1178 = vsel %vm712, %v958, %v982
        %v1181 = vsel %vm712, %v974, %v998
        %v1184 = vsel %vm712, %v975, %v999
        %v1187 = vsel %vm712, %v976, %v1000
        %v1190 = vsel %vm712, %v977, %v1001
        %v1193 = vsel %vm712, %v978, %v1002
        %v1196 = vsel %vm712, %v979, %v1003
        %v1199 = vsel %vm712, %v980, %v1004
        %v1202 = vsel %vm712, %v1006, %v1030
        %v1205 = vsel %vm712, %v1022, %v1046
        %v1208 = vsel %vm712, %v1023, %v1047
        %v1211 = vsel %vm712, %v1024, %v1048
        %v1214 = vsel %vm712, %v1025, %v1049
        %v1217 = vsel %vm712, %v1026, %v1050
        %v1220 = vsel %vm712, %v1027, %v1051
        %v1223 = vsel %vm712, %v1028, %v1052
        %v1226 = vsel %vm712, %v1054, %v1078
        %v1229 = vsel %vm712, %v1070, %v1094
        %v1232 = vsel %vm712, %v1071, %v1095
        %v1235 = vsel %vm712, %v1072, %v1096
        %v1238 = vsel %vm712, %v1073, %v1097
        %v1241 = vsel %vm712, %v1074, %v1098
        %v1244 = vsel %vm712, %v1075, %v1099
        %v1247 = vsel %vm712, %v1076, %v1100
        %v1250 = vsel %vm712, %v1102, %v1126
        %v1253 = vsel %vm712, %v1118, %v1141
        %v1256 = vsel %vm712, %v1119, %v1142
        %v1259 = vsel %vm712, %v1120, %v1143
        %v1262 = vsel %vm712, %v1121, %v1144
        %v1265 = vsel %vm712, %v1122, %v1145
        %v1268 = vsel %vm712, %v1123, %v1146
        %v1271 = vsel %vm712, %v1124, %v1147
        %1312 = vrot.lane.b32.xlu0 %v715, 7
        %v1313 = vpop.permute.xlu0 %1312
        %1314 = vrot.lane.b32.xlu0 %v719, 7
        %v1315 = vpop.permute.xlu0 %1314
        %1316 = vrot.lane.b32.xlu0 %v723, 7
        %v1317 = vpop.permute.xlu0 %1316
        %1318 = vrot.lane.b32.xlu0 %v727, 7
        %v1319 = vpop.permute.xlu0 %1318
        %1320 = vrot.lane.b32.xlu0 %v731, 7
        %v1321 = vpop.permute.xlu0 %1320
        %1322 = vrot.lane.b32.xlu0 %v735, 7
        %v1323 = vpop.permute.xlu0 %1322
        %1324 = vrot.lane.b32.xlu0 %v1172, 7
        %v1325 = vpop.permute.xlu0 %1324
        %1326 = vrot.lane.b32.xlu0 %v1175, 7
        %v1327 = vpop.permute.xlu0 %1326
        %1328 = vrot.lane.b32.xlu0 %v1178, 7
        %v1329 = vpop.permute.xlu0 %1328
        %1330 = vrot.lane.b32.xlu0 %v1181, 7
        %v1331 = vpop.permute.xlu0 %1330
        %1332 = vrot.lane.b32.xlu0 %v1184, 7
        %v1333 = vpop.permute.xlu0 %1332
        %1334 = vrot.lane.b32.xlu0 %v1187, 7
        %v1335 = vpop.permute.xlu0 %1334
        %1336 = vrot.lane.b32.xlu0 %v1190, 7
        %v1337 = vpop.permute.xlu0 %1336
        %1338 = vrot.lane.b32.xlu0 %v1193, 7
        %v1339 = vpop.permute.xlu0 %1338
        %1340 = vrot.lane.b32.xlu0 %v1196, 7
        %v1341 = vpop.permute.xlu0 %1340
        %1342 = vrot.lane.b32.xlu0 %v1199, 7
        %v1343 = vpop.permute.xlu0 %1342
        %1344 = vrot.lane.b32.xlu0 %v1202, 7
        %v1345 = vpop.permute.xlu0 %1344
        %1346 = vrot.lane.b32.xlu0 %v1205, 7
        %v1347 = vpop.permute.xlu0 %1346
        %1348 = vrot.lane.b32.xlu0 %v1208, 7
        %v1349 = vpop.permute.xlu0 %1348
        %1350 = vrot.lane.b32.xlu0 %v1211, 7
        %v1351 = vpop.permute.xlu0 %1350
        %1352 = vrot.lane.b32.xlu0 %v1214, 7
        %v1353 = vpop.permute.xlu0 %1352
        %1354 = vrot.lane.b32.xlu0 %v1217, 7
        %v1355 = vpop.permute.xlu0 %1354
        %1356 = vrot.lane.b32.xlu0 %v1220, 7
        %v1357 = vpop.permute.xlu0 %1356
        %1358 = vrot.lane.b32.xlu0 %v1223, 7
        %v1359 = vpop.permute.xlu0 %1358
        %1360 = vrot.lane.b32.xlu0 %v1226, 7
        %v1361 = vpop.permute.xlu0 %1360
        %1362 = vrot.lane.b32.xlu0 %v1229, 7
        %v1363 = vpop.permute.xlu0 %1362
        %1364 = vrot.lane.b32.xlu0 %v1232, 7
        %v1365 = vpop.permute.xlu0 %1364
        %1366 = vrot.lane.b32.xlu0 %v1235, 7
        %v1367 = vpop.permute.xlu0 %1366
        %1368 = vrot.lane.b32.xlu0 %v1238, 7
        %v1369 = vpop.permute.xlu0 %1368
        %1370 = vrot.lane.b32.xlu0 %v1241, 7
        %v1371 = vpop.permute.xlu0 %1370
        %1372 = vrot.lane.b32.xlu0 %v1244, 7
        %v1373 = vpop.permute.xlu0 %1372
        %1374 = vrot.lane.b32.xlu0 %v1247, 7
        %v1375 = vpop.permute.xlu0 %1374
        %1376 = vrot.lane.b32.xlu0 %v1250, 7
        %v1377 = vpop.permute.xlu0 %1376
        %1378 = vrot.lane.b32.xlu0 %v1253, 7
        %v1379 = vpop.permute.xlu0 %1378
        %1380 = vrot.lane.b32.xlu0 %v1256, 7
        %v1381 = vpop.permute.xlu0 %1380
        %1382 = vrot.lane.b32.xlu0 %v1259, 7
        %v1383 = vpop.permute.xlu0 %1382
        %1384 = vrot.lane.b32.xlu0 %v1262, 7
        %v1385 = vpop.permute.xlu0 %1384
        %1386 = vrot.lane.b32.xlu0 %v1265, 7
        %v1387 = vpop.permute.xlu0 %1386
        %1388 = vrot.lane.b32.xlu0 %v1268, 7
        %v1389 = vpop.permute.xlu0 %1388
        %1390 = vrot.lane.b32.xlu0 %v1271, 7
        %v1391 = vpop.permute.xlu0 %1390
        %1392 = vrot.lane.b32.xlu0 %v1149, 7
        %v1393 = vpop.permute.xlu0 %1392
        %1394 = vrot.lane.b32.xlu0 %v1164, 7
        %v1395 = vpop.permute.xlu0 %1394
        %1396 = vrot.lane.b32.xlu0 %v1165, 7
        %v1397 = vpop.permute.xlu0 %1396
        %1398 = vrot.lane.b32.xlu0 %v1166, 7
        %v1399 = vpop.permute.xlu0 %1398
        %1400 = vrot.lane.b32.xlu0 %v1167, 7
        %v1401 = vpop.permute.xlu0 %1400
        %1402 = vrot.lane.b32.xlu0 %v1168, 7
        %v1403 = vpop.permute.xlu0 %1402
        %1404 = vrot.lane.b32.xlu0 %v1169, 7
        %v1405 = vpop.permute.xlu0 %1404
        %1406 = vrot.lane.b32.xlu0 %v1170, 7
        %v1407 = vpop.permute.xlu0 %1406
        %vm1408 = vcmask 56320
        %v1409 = vsel %vm1408, %v1313, %v1315
        %v1410 = vsel %vm1408, %v1315, %v1317
        %v1411 = vsel %vm1408, %v1317, %v1319
        %v1412 = vsel %vm1408, %v1319, %v1321
        %v1413 = vsel %vm1408, %v1321, %v1323
        %v1414 = vsel %vm1408, %v1323, %v1325
        %v1415 = vsel %vm1408, %v1325, %v1327
        %v1416 = vsel %vm1408, %v1329, %v1331
        %v1417 = vsel %vm1408, %v1331, %v1333
        %v1418 = vsel %vm1408, %v1333, %v1335
        %v1419 = vsel %vm1408, %v1335, %v1337
        %v1420 = vsel %vm1408, %v1337, %v1339
        %v1421 = vsel %vm1408, %v1339, %v1341
        %v1422 = vsel %vm1408, %v1341, %v1343
        %v1423 = vsel %vm1408, %v1345, %v1347
        %v1424 = vsel %vm1408, %v1347, %v1349
        %v1425 = vsel %vm1408, %v1349, %v1351
        %v1426 = vsel %vm1408, %v1351, %v1353
        %v1427 = vsel %vm1408, %v1353, %v1355
        %v1428 = vsel %vm1408, %v1355, %v1357
        %v1429 = vsel %vm1408, %v1357, %v1359
        %v1430 = vsel %vm1408, %v1361, %v1363
        %v1431 = vsel %vm1408, %v1363, %v1365
        %v1432 = vsel %vm1408, %v1365, %v1367
        %v1433 = vsel %vm1408, %v1367, %v1369
        %v1434 = vsel %vm1408, %v1369, %v1371
        %v1435 = vsel %vm1408, %v1371, %v1373
        %v1436 = vsel %vm1408, %v1373, %v1375
        %v1437 = vsel %vm1408, %v1377, %v1379
        %v1438 = vsel %vm1408, %v1379, %v1381
        %v1439 = vsel %vm1408, %v1381, %v1383
        %v1440 = vsel %vm1408, %v1383, %v1385
        %v1441 = vsel %vm1408, %v1385, %v1387
        %v1442 = vsel %vm1408, %v1387, %v1389
        %v1443 = vsel %vm1408, %v1389, %v1391
        %v1444 = vsel %vm1408, %v1393, %v1395
        %v1445 = vsel %vm1408, %v1395, %v1397
        %v1446 = vsel %vm1408, %v1397, %v1399
        %v1447 = vsel %vm1408, %v1399, %v1401
        %v1448 = vsel %vm1408, %v1401, %v1403
        %v1449 = vsel %vm1408, %v1403, %v1405
        %v1450 = vsel %vm1408, %v1405, %v1407
        %v1486 = vld [vmem:[%s3] sm:$0xff]
        %v1487 = vld [vmem:[%s5] sm:$0xff]
        %1489 = vset.pattern.permute.xlu0 0
        %1490 = vperm.xlu0 %1489, %v1487
        %v1491 = vpop.permute.xlu0 %1490
        %v1494 = vunpack.c.l.b16 %v1486
        %v1495 = vunpack.c.h.b16 %v1486
        %v1496 = vpack.c.b16 %v1494, %v1494
        %v1497 = vpack.c.b16 %v1495, %v1495
        %vm1499 = vcmask 719872
        %v1501 = vsel %vm1499, %v1497, 0
        %v1504 = vsel %vm712, %v1444, 0
        %v1507 = vsel %vm712, %v1445, 0
        %v1510 = vsel %vm712, %v1446, 0
        %v1513 = vsel %vm712, %v1447, 0
        %v1516 = vsel %vm712, %v1448, 0
        %v1519 = vsel %vm712, %v1449, 0
        %v1522 = vsel %vm712, %v1450, 0
        %1524 = vmatprep.subr.bf16.mxu0 %v719
        %1525 = vmatpush1.bf16.msra.mxu0 %v715
        %1526 = vmatprep.subr.bf16.mxu0 %v747
        %1527 = vmatpush1.bf16.msra.mxu0 %v743
        %1528 = vmatprep.subr.bf16.mxu0 %v775
        %1529 = vmatpush1.bf16.msra.mxu0 %v771
        %1530 = vmatprep.subr.bf16.mxu0 %v803
        %1531 = vmatpush1.bf16.msra.mxu0 %v799
        %1532 = vmatprep.subr.bf16.mxu0 %v831
        %1533 = vmatpush1.bf16.msra.mxu0 %v827
        %1534 = vmatprep.subr.bf16.mxu0 %v859
        %1535 = vmatpush1.bf16.msra.mxu0 %v855
        %1536 = vmatprep.subr.bf16.mxu0 %v887
        %1537 = vmatpush1.bf16.msra.mxu0 %v883
        %1538 = vmatprep.subr.bf16.mxu0 %v915
        %1539 = vmatpush1.bf16.msra.mxu0 %v911
        %1540 = vmatprep.subr.bf16.mxu0 %v1410
        %1541 = vmatpush1.bf16.msra.mxu0 %v1409
        %1542 = vmatprep.subr.bf16.mxu0 %v1417
        %1543 = vmatpush1.bf16.msra.mxu0 %v1416
        %1544 = vmatprep.subr.bf16.mxu0 %v1424
        %1545 = vmatpush1.bf16.msra.mxu0 %v1423
        %1546 = vmatprep.subr.bf16.mxu0 %v1431
        %1547 = vmatpush1.bf16.msra.mxu0 %v1430
        %1548 = vmatprep.subr.bf16.mxu0 %v1438
        %1549 = vmatpush1.bf16.msra.mxu0 %v1437
        %1550 = vmatprep.subr.bf16.mxu0 %v1507
        %1551 = vmatpush1.bf16.msra.mxu0 %v1504
        %1552 = vmatprep.subr.bf16.mxu0 0
        %1553 = vmatpush1.bf16.msra.mxu0 0
        %1554 = vmatprep.subr.bf16.mxu0 0
        %1555 = vmatpush1.bf16.msra.mxu0 0
        %1556 = vmatprep.mubr.bf16.mxu0 %v1501
        %1557 = vmatmul.mubr.bf16.gmra.mrb[0].mxu0 %v1496
        %v1558 = vpop.f32.mrb[0].mxu0
        %v1559 = vadd.f32 %v1491, %v1558
        %v1560 = vpop.f32.mrb[0].mxu0
        %v1561 = vadd.f32 %v1491, %v1560
        %v1562 = vpop.f32.mrb[0].mxu0
        %v1563 = vpop.f32.mrb[0].mxu0
        %1564 = vdwg.mxu0
        %1565 = vmatprep.subr.bf16.mxu0 %v727
        %1566 = vmatpush1.bf16.msra.mxu0 %v723
        %1567 = vmatprep.subr.bf16.mxu0 %v755
        %1568 = vmatpush1.bf16.msra.mxu0 %v751
        %1569 = vmatprep.subr.bf16.mxu0 %v783
        %1570 = vmatpush1.bf16.msra.mxu0 %v779
        %1571 = vmatprep.subr.bf16.mxu0 %v811
        %1572 = vmatpush1.bf16.msra.mxu0 %v807
        %1573 = vmatprep.subr.bf16.mxu0 %v839
        %1574 = vmatpush1.bf16.msra.mxu0 %v835
        %1575 = vmatprep.subr.bf16.mxu0 %v867
        %1576 = vmatpush1.bf16.msra.mxu0 %v863
        %1577 = vmatprep.subr.bf16.mxu0 %v895
        %1578 = vmatpush1.bf16.msra.mxu0 %v891
        %1579 = vmatprep.subr.bf16.mxu0 %v923
        %1580 = vmatpush1.bf16.msra.mxu0 %v919
        %1581 = vmatprep.subr.bf16.mxu0 %v1412
        %1582 = vmatpush1.bf16.msra.mxu0 %v1411
        %1583 = vmatprep.subr.bf16.mxu0 %v1419
        %1584 = vmatpush1.bf16.msra.mxu0 %v1418
        %1585 = vmatprep.subr.bf16.mxu0 %v1426
        %1586 = vmatpush1.bf16.msra.mxu0 %v1425
        %1587 = vmatprep.subr.bf16.mxu0 %v1433
        %1588 = vmatpush1.bf16.msra.mxu0 %v1432
        %1589 = vmatprep.subr.bf16.mxu0 %v1440
        %1590 = vmatpush1.bf16.msra.mxu0 %v1439
        %1591 = vmatprep.subr.bf16.mxu0 %v1513
        %1592 = vmatpush1.bf16.msra.mxu0 %v1510
        %1593 = vmatprep.subr.bf16.mxu0 0
        %1594 = vmatpush1.bf16.msra.mxu0 0
        %1595 = vmatprep.subr.bf16.mxu0 0
        %1596 = vmatpush1.bf16.msra.mxu0 0
        %1597 = vmatprep.mubr.bf16.mxu0 %v1501
        %1598 = vmatmul.mubr.bf16.gmra.mrb[0].mxu0 %v1496
        %v1599 = vpop.f32.mrb[0].mxu0
        %v1600 = vadd.f32 %v1491, %v1599
        %v1601 = vpop.f32.mrb[0].mxu0
        %v1602 = vadd.f32 %v1491, %v1601
        %v1603 = vpop.f32.mrb[0].mxu0
        %v1604 = vpop.f32.mrb[0].mxu0
        %1605 = vdwg.mxu0
        %1606 = vmatprep.subr.bf16.mxu0 %v735
        %1607 = vmatpush1.bf16.msra.mxu0 %v731
        %1608 = vmatprep.subr.bf16.mxu0 %v763
        %1609 = vmatpush1.bf16.msra.mxu0 %v759
        %1610 = vmatprep.subr.bf16.mxu0 %v791
        %1611 = vmatpush1.bf16.msra.mxu0 %v787
        %1612 = vmatprep.subr.bf16.mxu0 %v819
        %1613 = vmatpush1.bf16.msra.mxu0 %v815
        %1614 = vmatprep.subr.bf16.mxu0 %v847
        %1615 = vmatpush1.bf16.msra.mxu0 %v843
        %1616 = vmatprep.subr.bf16.mxu0 %v875
        %1617 = vmatpush1.bf16.msra.mxu0 %v871
        %1618 = vmatprep.subr.bf16.mxu0 %v903
        %1619 = vmatpush1.bf16.msra.mxu0 %v899
        %1620 = vmatprep.subr.bf16.mxu0 %v931
        %1621 = vmatpush1.bf16.msra.mxu0 %v927
        %1622 = vmatprep.subr.bf16.mxu0 %v1414
        %1623 = vmatpush1.bf16.msra.mxu0 %v1413
        %1624 = vmatprep.subr.bf16.mxu0 %v1421
        %1625 = vmatpush1.bf16.msra.mxu0 %v1420
        %1626 = vmatprep.subr.bf16.mxu0 %v1428
        %1627 = vmatpush1.bf16.msra.mxu0 %v1427
        %1628 = vmatprep.subr.bf16.mxu0 %v1435
        %1629 = vmatpush1.bf16.msra.mxu0 %v1434
        %1630 = vmatprep.subr.bf16.mxu0 %v1442
        %1631 = vmatpush1.bf16.msra.mxu0 %v1441
        %1632 = vmatprep.subr.bf16.mxu0 %v1519
        %1633 = vmatpush1.bf16.msra.mxu0 %v1516
        %1634 = vmatprep.subr.bf16.mxu0 0
        %1635 = vmatpush1.bf16.msra.mxu0 0
        %1636 = vmatprep.subr.bf16.mxu0 0
        %1637 = vmatpush1.bf16.msra.mxu0 0
        %1638 = vmatprep.mubr.bf16.mxu0 %v1501
        %1639 = vmatmul.mubr.bf16.gmra.mrb[0].mxu0 %v1496
        %v1640 = vpop.f32.mrb[0].mxu0
        %v1641 = vadd.f32 %v1491, %v1640
        %v1642 = vpop.f32.mrb[0].mxu0
        %v1643 = vadd.f32 %v1491, %v1642
        %v1644 = vpop.f32.mrb[0].mxu0
        %v1645 = vpop.f32.mrb[0].mxu0
        %1646 = vdwg.mxu0
        %1647 = vmatprep.subr.bf16.mxu0 0
        %1648 = vmatpush1.bf16.msra.mxu0 %v739
        %1649 = vmatprep.subr.bf16.mxu0 0
        %1650 = vmatpush1.bf16.msra.mxu0 %v767
        %1651 = vmatprep.subr.bf16.mxu0 0
        %1652 = vmatpush1.bf16.msra.mxu0 %v795
        %1653 = vmatprep.subr.bf16.mxu0 0
        %1654 = vmatpush1.bf16.msra.mxu0 %v823
        %1655 = vmatprep.subr.bf16.mxu0 0
        %1656 = vmatpush1.bf16.msra.mxu0 %v851
        %1657 = vmatprep.subr.bf16.mxu0 0
        %1658 = vmatpush1.bf16.msra.mxu0 %v879
        %1659 = vmatprep.subr.bf16.mxu0 0
        %1660 = vmatpush1.bf16.msra.mxu0 %v907
        %1661 = vmatprep.subr.bf16.mxu0 0
        %1662 = vmatpush1.bf16.msra.mxu0 %v935
        %1663 = vmatprep.subr.bf16.mxu0 0
        %1664 = vmatpush1.bf16.msra.mxu0 %v1415
        %1665 = vmatprep.subr.bf16.mxu0 0
        %1666 = vmatpush1.bf16.msra.mxu0 %v1422
        %1667 = vmatprep.subr.bf16.mxu0 0
        %1668 = vmatpush1.bf16.msra.mxu0 %v1429
        %1669 = vmatprep.subr.bf16.mxu0 0
        %1670 = vmatpush1.bf16.msra.mxu0 %v1436
        %1671 = vmatprep.subr.bf16.mxu0 0
        %1672 = vmatpush1.bf16.msra.mxu0 %v1443
        %1673 = vmatprep.subr.bf16.mxu0 0
        %1674 = vmatpush1.bf16.msra.mxu0 %v1522
        %1675 = vmatprep.subr.bf16.mxu0 0
        %1676 = vmatpush1.bf16.msra.mxu0 0
        %1677 = vmatprep.subr.bf16.mxu0 0
        %1678 = vmatpush1.bf16.msra.mxu0 0
        %1679 = vmatprep.mubr.bf16.mxu0 %v1501
        %1680 = vmatmul.mubr.bf16.gmra.mrb[0].mxu0 %v1496
        %v1681 = vpop.f32.mrb[0].mxu0
        %v1682 = vadd.f32 %v1491, %v1681
        %v1683 = vpop.f32.mrb[0].mxu0
        %v1684 = vpop.f32.mrb[0].mxu0
        %v1685 = vpop.f32.mrb[0].mxu0
        %1686 = vdwg.mxu0
        %v1688 = vlaneseq
        %v1689 = vshrl.u32 %v1688, 7
        %v1690 = vsub.s32 0, %v1689
        %v1691 = vrot.slane %v319, %v1690
        %v1692 = vlaneseq
        %v1693 = vshrl.u32 %v1692, 7
        %v1694 = vsub.s32 1, %v1693
        %v1695 = vrot.slane %v319, %v1694
        %v1696 = vlaneseq
        %v1697 = vshrl.u32 %v1696, 7
        %v1698 = vsub.s32 2, %v1697
        %v1699 = vrot.slane %v319, %v1698
        %v1700 = vlaneseq
        %v1701 = vshrl.u32 %v1700, 7
        %v1702 = vsub.s32 3, %v1701
        %v1703 = vrot.slane %v319, %v1702
        %v1704 = vlaneseq
        %v1705 = vshrl.u32 %v1704, 7
        %v1706 = vsub.s32 4, %v1705
        %v1707 = vrot.slane %v319, %v1706
        %v1708 = vlaneseq
        %v1709 = vshrl.u32 %v1708, 7
        %v1710 = vsub.s32 5, %v1709
        %v1711 = vrot.slane %v319, %v1710
        %v1712 = vlaneseq
        %v1713 = vshrl.u32 %v1712, 7
        %v1714 = vsub.s32 6, %v1713
        %v1715 = vrot.slane %v319, %v1714
        %v1723 = vmul.f32 %v1559, %v1691
        %v1724 = vmul.f32 %v1561, %v1695
        %v1725 = vmul.f32 %v1600, %v1699
        %v1726 = vmul.f32 %v1602, %v1703
        %v1727 = vmul.f32 %v1641, %v1707
        %v1728 = vmul.f32 %v1643, %v1711
        %v1729 = vmul.f32 %v1682, %v1715
        %v1730 = vadd.f32 %v1723, %v1724
        %v1731 = vadd.f32 %v1730, %v1725
        %v1732 = vadd.f32 %v1731, %v1726
        %v1733 = vadd.f32 %v1732, %v1727
        %v1734 = vadd.f32 %v1733, %v1728
        %v1735 = vadd.f32 %v1734, %v1729
        %1736 = vadd.xlane.f32.xlu0 %v1735
        %v1737 = vpop.xlane.xlu0 %1736
        %v1738 = vmul.f32 %v1723, %v1559
        %v1739 = vmul.f32 %v1724, %v1561
        %v1740 = vmul.f32 %v1725, %v1600
        %v1741 = vmul.f32 %v1726, %v1602
        %v1742 = vmul.f32 %v1727, %v1641
        %v1743 = vmul.f32 %v1728, %v1643
        %v1744 = vmul.f32 %v1729, %v1682
        %v1745 = vadd.f32 %v1738, %v1739
        %v1746 = vadd.f32 %v1745, %v1740
        %v1747 = vadd.f32 %v1746, %v1741
        %v1748 = vadd.f32 %v1747, %v1742
        %v1749 = vadd.f32 %v1748, %v1743
        %v1750 = vadd.f32 %v1749, %v1744
        %1751 = vadd.xlane.f32.xlu0 %v1750
        %v1752 = vpop.xlane.xlu0 %1751
        %v1753 = vmul.f32 %v1737, 0.001953125
        %v1754 = vmul.f32 %v1752, 0.001953125
        %v1755 = vmul.f32 %v1753, %v1753
        %v1756 = vsub.f32 %v1754, %v1755
        %v1757 = vmax.f32 %v1756, 0.0
        %v1758 = vsub.f32 %v1559, %v1753
        %v1759 = vsub.f32 %v1561, %v1753
        %v1760 = vsub.f32 %v1600, %v1753
        %v1761 = vsub.f32 %v1602, %v1753
        %v1762 = vsub.f32 %v1641, %v1753
        %v1763 = vsub.f32 %v1643, %v1753
        %v1764 = vsub.f32 %v1682, %v1753
        %v1765 = vmul.f32 %v1758, %v1691
        %v1766 = vmul.f32 %v1759, %v1695
        %v1767 = vmul.f32 %v1760, %v1699
        %v1768 = vmul.f32 %v1761, %v1703
        %v1769 = vmul.f32 %v1762, %v1707
        %v1770 = vmul.f32 %v1763, %v1711
        %v1771 = vmul.f32 %v1764, %v1715
        %v1772 = vadd.f32 %v1757, 1e-05
        %v1773 = vrsqrt.pop %v1772
        %v1774 = vmul.f32 %v1765, %v1773
        %v1775 = vmul.f32 %v1766, %v1773
        %v1776 = vmul.f32 %v1767, %v1773
        %v1777 = vmul.f32 %v1768, %v1773
        %v1778 = vmul.f32 %v1769, %v1773
        %v1779 = vmul.f32 %v1770, %v1773
        %v1780 = vmul.f32 %v1771, %v1773
        %v1781 = vmax.f32 %v1774, 0.0
        %v1782 = vmax.f32 %v1775, 0.0
        %v1783 = vmax.f32 %v1776, 0.0
        %v1784 = vmax.f32 %v1777, 0.0
        %v1785 = vmax.f32 %v1778, 0.0
        %v1786 = vmax.f32 %v1779, 0.0
        %v1787 = vmax.f32 %v1780, 0.0
        %1788 = vst [vmem:[#allocation2] sm:$0xf] 0
        %v1789 = vpack.c.bf16 %v1781, %v1781
        %v1790 = vpack.c.bf16 %v1782, %v1782
        %v1791 = vpack.c.bf16 %v1783, %v1783
        %v1792 = vpack.c.bf16 %v1784, %v1784
        %v1793 = vpack.c.bf16 %v1785, %v1785
        %v1794 = vpack.c.bf16 %v1786, %v1786
        %v1795 = vpack.c.bf16 %v1787, %v1787
        %v1803 = vunpack.c.l.b16 %v1789
        %v1804 = vunpack.c.l.b16 %v1790
        %v1805 = vunpack.c.l.b16 %v1791
        %v1806 = vunpack.c.l.b16 %v1792
        %v1807 = vunpack.c.l.b16 %v1793
        %v1808 = vunpack.c.l.b16 %v1794
        %v1809 = vunpack.c.l.b16 %v1795
        %v1810 = vpack.c.b16 %v1804, %v1803
        %v1811 = vpack.c.b16 %v1806, %v1805
        %v1812 = vpack.c.b16 %v1808, %v1807
        %v1813 = vpack.c.b16 %v1809, %v1809
        %1818 = vst [vmem:[#allocation2 + $0x4] sm:$0xff] %v1810
        %1819 = vst [vmem:[#allocation2 + $0xc] sm:$0xff] %v1811
        %1820 = vst [vmem:[#allocation2 + $0x14] sm:$0xff] %v1812
        %1821 = vst [vmem:[#allocation2 + $0x1c] sm:$0xf] %v1813
        %1822 = vst [vmem:[#allocation2 + $0x20] sm:$0xf] 0
        %v1823 = vld [vmem:[#allocation2] sm:$0xff]
        %v1824 = vld [vmem:[#allocation2 + $0x8] sm:$0xff]
        %v1825 = vld [vmem:[#allocation2 + $0x10] sm:$0xff]
        %v1826 = vld [vmem:[#allocation2 + $0x18] sm:$0xff]
        %v1827 = vld [vmem:[#allocation2 + $0x4] sm:$0xff]
        %v1828 = vld [vmem:[#allocation2 + $0xc] sm:$0xff]
        %v1829 = vld [vmem:[#allocation2 + $0x14] sm:$0xff]
        %v1830 = vld [vmem:[#allocation2 + $0x1c] sm:$0xf]
        %v1831 = vld [vmem:[#allocation2 + $0x4] sm:$0xff]
        %v1832 = vld [vmem:[#allocation2 + $0xc] sm:$0xff]
        %v1833 = vld [vmem:[#allocation2 + $0x14] sm:$0xff]
        %v1834 = vld [vmem:[#allocation2 + $0x1c] sm:$0xff]
        %v1839 = vunpack.c.l.b16 %v1823
        %v1840 = vunpack.c.h.b16 %v1823
        %v1841 = vunpack.c.l.b16 %v1824
        %v1842 = vunpack.c.h.b16 %v1824
        %v1843 = vunpack.c.l.b16 %v1825
        %v1844 = vunpack.c.h.b16 %v1825
        %v1845 = vunpack.c.l.b16 %v1826
        %v1846 = vunpack.c.h.b16 %v1826
        %v1847 = vpack.c.b16 %v1839, %v1839
        %v1848 = vpack.c.b16 %v1840, %v1840
        %v1849 = vpack.c.b16 %v1841, %v1841
        %v1850 = vpack.c.b16 %v1842, %v1842
        %v1851 = vpack.c.b16 %v1843, %v1843
        %v1852 = vpack.c.b16 %v1844, %v1844
        %v1853 = vpack.c.b16 %v1845, %v1845
        %v1854 = vpack.c.b16 %v1846, %v1846
        %1855 = vrot.lane.b32.xlu0 %v1847, 127
        %v1856 = vpop.permute.xlu0 %1855
        %1857 = vrot.lane.b32.xlu0 %v1848, 127
        %v1858 = vpop.permute.xlu0 %1857
        %1859 = vrot.lane.b32.xlu0 %v1849, 127
        %v1860 = vpop.permute.xlu0 %1859
        %1861 = vrot.lane.b32.xlu0 %v1850, 127
        %v1862 = vpop.permute.xlu0 %1861
        %1863 = vrot.lane.b32.xlu0 %v1851, 127
        %v1864 = vpop.permute.xlu0 %1863
        %1865 = vrot.lane.b32.xlu0 %v1852, 127
        %v1866 = vpop.permute.xlu0 %1865
        %1867 = vrot.lane.b32.xlu0 %v1853, 127
        %v1868 = vpop.permute.xlu0 %1867
        %1869 = vrot.lane.b32.xlu0 %v1854, 127
        %v1870 = vpop.permute.xlu0 %1869
        %v1871 = vsel %vm368, %v1856, %v1858
        %v1872 = vsel %vm368, %v1858, %v1860
        %v1873 = vsel %vm368, %v1860, %v1862
        %v1874 = vsel %vm368, %v1862, %v1864
        %v1875 = vsel %vm368, %v1864, %v1866
        %v1876 = vsel %vm368, %v1866, %v1868
        %v1877 = vsel %vm368, %v1868, %v1870
        %1878 = vrot.lane.b32.xlu0 %v1847, 126
        %v1879 = vpop.permute.xlu0 %1878
        %1880 = vrot.lane.b32.xlu0 %v1848, 126
        %v1881 = vpop.permute.xlu0 %1880
        %1882 = vrot.lane.b32.xlu0 %v1849, 126
        %v1883 = vpop.permute.xlu0 %1882
        %1884 = vrot.lane.b32.xlu0 %v1850, 126
        %v1885 = vpop.permute.xlu0 %1884
        %1886 = vrot.lane.b32.xlu0 %v1851, 126
        %v1887 = vpop.permute.xlu0 %1886
        %1888 = vrot.lane.b32.xlu0 %v1852, 126
        %v1889 = vpop.permute.xlu0 %1888
        %1890 = vrot.lane.b32.xlu0 %v1853, 126
        %v1891 = vpop.permute.xlu0 %1890
        %1892 = vrot.lane.b32.xlu0 %v1854, 126
        %v1893 = vpop.permute.xlu0 %1892
        %v1894 = vsel %vm392, %v1879, %v1881
        %v1895 = vsel %vm392, %v1881, %v1883
        %v1896 = vsel %vm392, %v1883, %v1885
        %v1897 = vsel %vm392, %v1885, %v1887
        %v1898 = vsel %vm392, %v1887, %v1889
        %v1899 = vsel %vm392, %v1889, %v1891
        %v1900 = vsel %vm392, %v1891, %v1893
        %1901 = vrot.lane.b32.xlu0 %v1847, 118
        %v1902 = vpop.permute.xlu0 %1901
        %1903 = vrot.lane.b32.xlu0 %v1848, 118
        %v1904 = vpop.permute.xlu0 %1903
        %1905 = vrot.lane.b32.xlu0 %v1849, 118
        %v1906 = vpop.permute.xlu0 %1905
        %1907 = vrot.lane.b32.xlu0 %v1850, 118
        %v1908 = vpop.permute.xlu0 %1907
        %1909 = vrot.lane.b32.xlu0 %v1851, 118
        %v1910 = vpop.permute.xlu0 %1909
        %1911 = vrot.lane.b32.xlu0 %v1852, 118
        %v1912 = vpop.permute.xlu0 %1911
        %1913 = vrot.lane.b32.xlu0 %v1853, 118
        %v1914 = vpop.permute.xlu0 %1913
        %1915 = vrot.lane.b32.xlu0 %v1854, 118
        %v1916 = vpop.permute.xlu0 %1915
        %v1917 = vsel %vm416, %v1902, %v1904
        %v1918 = vsel %vm416, %v1904, %v1906
        %v1919 = vsel %vm416, %v1906, %v1908
        %v1920 = vsel %vm416, %v1908, %v1910
        %v1921 = vsel %vm416, %v1910, %v1912
        %v1922 = vsel %vm416, %v1912, %v1914
        %v1923 = vsel %vm416, %v1914, %v1916
        %1924 = vrot.lane.b32.xlu0 %v1847, 117
        %v1925 = vpop.permute.xlu0 %1924
        %1926 = vrot.lane.b32.xlu0 %v1848, 117
        %v1927 = vpop.permute.xlu0 %1926
        %1928 = vrot.lane.b32.xlu0 %v1849, 117
        %v1929 = vpop.permute.xlu0 %1928
        %1930 = vrot.lane.b32.xlu0 %v1850, 117
        %v1931 = vpop.permute.xlu0 %1930
        %1932 = vrot.lane.b32.xlu0 %v1851, 117
        %v1933 = vpop.permute.xlu0 %1932
        %1934 = vrot.lane.b32.xlu0 %v1852, 117
        %v1935 = vpop.permute.xlu0 %1934
        %1936 = vrot.lane.b32.xlu0 %v1853, 117
        %v1937 = vpop.permute.xlu0 %1936
        %1938 = vrot.lane.b32.xlu0 %v1854, 117
        %v1939 = vpop.permute.xlu0 %1938
        %v1940 = vsel %vm440, %v1925, %v1927
        %v1941 = vsel %vm440, %v1927, %v1929
        %v1942 = vsel %vm440, %v1929, %v1931
        %v1943 = vsel %vm440, %v1931, %v1933
        %v1944 = vsel %vm440, %v1933, %v1935
        %v1945 = vsel %vm440, %v1935, %v1937
        %v1946 = vsel %vm440, %v1937, %v1939
        %1947 = vrot.lane.b32.xlu0 %v1847, 116
        %v1948 = vpop.permute.xlu0 %1947
        %1949 = vrot.lane.b32.xlu0 %v1848, 116
        %v1950 = vpop.permute.xlu0 %1949
        %1951 = vrot.lane.b32.xlu0 %v1849, 116
        %v1952 = vpop.permute.xlu0 %1951
        %1953 = vrot.lane.b32.xlu0 %v1850, 116
        %v1954 = vpop.permute.xlu0 %1953
        %1955 = vrot.lane.b32.xlu0 %v1851, 116
        %v1956 = vpop.permute.xlu0 %1955
        %1957 = vrot.lane.b32.xlu0 %v1852, 116
        %v1958 = vpop.permute.xlu0 %1957
        %1959 = vrot.lane.b32.xlu0 %v1853, 116
        %v1960 = vpop.permute.xlu0 %1959
        %1961 = vrot.lane.b32.xlu0 %v1854, 116
        %v1962 = vpop.permute.xlu0 %1961
        %v1963 = vsel %vm464, %v1948, %v1950
        %v1964 = vsel %vm464, %v1950, %v1952
        %v1965 = vsel %vm464, %v1952, %v1954
        %v1966 = vsel %vm464, %v1954, %v1956
        %v1967 = vsel %vm464, %v1956, %v1958
        %v1968 = vsel %vm464, %v1958, %v1960
        %v1969 = vsel %vm464, %v1960, %v1962
        %1970 = vrot.lane.b32.xlu0 %v1847, 108
        %v1971 = vpop.permute.xlu0 %1970
        %1972 = vrot.lane.b32.xlu0 %v1848, 108
        %v1973 = vpop.permute.xlu0 %1972
        %1974 = vrot.lane.b32.xlu0 %v1849, 108
        %v1975 = vpop.permute.xlu0 %1974
        %1976 = vrot.lane.b32.xlu0 %v1850, 108
        %v1977 = vpop.permute.xlu0 %1976
        %1978 = vrot.lane.b32.xlu0 %v1851, 108
        %v1979 = vpop.permute.xlu0 %1978
        %1980 = vrot.lane.b32.xlu0 %v1852, 108
        %v1981 = vpop.permute.xlu0 %1980
        %1982 = vrot.lane.b32.xlu0 %v1853, 108
        %v1983 = vpop.permute.xlu0 %1982
        %1984 = vrot.lane.b32.xlu0 %v1854, 108
        %v1985 = vpop.permute.xlu0 %1984
        %v1986 = vsel %vm488, %v1971, %v1973
        %v1987 = vsel %vm488, %v1973, %v1975
        %v1988 = vsel %vm488, %v1975, %v1977
        %v1989 = vsel %vm488, %v1977, %v1979
        %v1990 = vsel %vm488, %v1979, %v1981
        %v1991 = vsel %vm488, %v1981, %v1983
        %v1992 = vsel %vm488, %v1983, %v1985
        %1993 = vrot.lane.b32.xlu0 %v1847, 107
        %v1994 = vpop.permute.xlu0 %1993
        %1995 = vrot.lane.b32.xlu0 %v1848, 107
        %v1996 = vpop.permute.xlu0 %1995
        %1997 = vrot.lane.b32.xlu0 %v1849, 107
        %v1998 = vpop.permute.xlu0 %1997
        %1999 = vrot.lane.b32.xlu0 %v1850, 107
        %v2000 = vpop.permute.xlu0 %1999
        %2001 = vrot.lane.b32.xlu0 %v1851, 107
        %v2002 = vpop.permute.xlu0 %2001
        %2003 = vrot.lane.b32.xlu0 %v1852, 107
        %v2004 = vpop.permute.xlu0 %2003
        %2005 = vrot.lane.b32.xlu0 %v1853, 107
        %v2006 = vpop.permute.xlu0 %2005
        %2007 = vrot.lane.b32.xlu0 %v1854, 107
        %v2008 = vpop.permute.xlu0 %2007
        %v2009 = vsel %vm512, %v1994, %v1996
        %v2010 = vsel %vm512, %v1996, %v1998
        %v2011 = vsel %vm512, %v1998, %v2000
        %v2012 = vsel %vm512, %v2000, %v2002
        %v2013 = vsel %vm512, %v2002, %v2004
        %v2014 = vsel %vm512, %v2004, %v2006
        %v2015 = vsel %vm512, %v2006, %v2008
        %2016 = vrot.lane.b32.xlu0 %v1847, 106
        %v2017 = vpop.permute.xlu0 %2016
        %2018 = vrot.lane.b32.xlu0 %v1848, 106
        %v2019 = vpop.permute.xlu0 %2018
        %2020 = vrot.lane.b32.xlu0 %v1849, 106
        %v2021 = vpop.permute.xlu0 %2020
        %2022 = vrot.lane.b32.xlu0 %v1850, 106
        %v2023 = vpop.permute.xlu0 %2022
        %2024 = vrot.lane.b32.xlu0 %v1851, 106
        %v2025 = vpop.permute.xlu0 %2024
        %2026 = vrot.lane.b32.xlu0 %v1852, 106
        %v2027 = vpop.permute.xlu0 %2026
        %2028 = vrot.lane.b32.xlu0 %v1853, 106
        %v2029 = vpop.permute.xlu0 %2028
        %2030 = vrot.lane.b32.xlu0 %v1854, 106
        %v2031 = vpop.permute.xlu0 %2030
        %v2032 = vsel %vm536, %v2017, %v2019
        %v2033 = vsel %vm536, %v2019, %v2021
        %v2034 = vsel %vm536, %v2021, %v2023
        %v2035 = vsel %vm536, %v2023, %v2025
        %v2036 = vsel %vm536, %v2025, %v2027
        %v2037 = vsel %vm536, %v2027, %v2029
        %v2038 = vsel %vm536, %v2029, %v2031
        %2039 = vrot.lane.b32.xlu0 %v1847, 28
        %v2040 = vpop.permute.xlu0 %2039
        %2041 = vrot.lane.b32.xlu0 %v1848, 28
        %v2042 = vpop.permute.xlu0 %2041
        %2043 = vrot.lane.b32.xlu0 %v1849, 28
        %v2044 = vpop.permute.xlu0 %2043
        %2045 = vrot.lane.b32.xlu0 %v1850, 28
        %v2046 = vpop.permute.xlu0 %2045
        %2047 = vrot.lane.b32.xlu0 %v1851, 28
        %v2048 = vpop.permute.xlu0 %2047
        %2049 = vrot.lane.b32.xlu0 %v1852, 28
        %v2050 = vpop.permute.xlu0 %2049
        %2051 = vrot.lane.b32.xlu0 %v1853, 28
        %v2052 = vpop.permute.xlu0 %2051
        %2053 = vrot.lane.b32.xlu0 %v1854, 28
        %v2054 = vpop.permute.xlu0 %2053
        %v2055 = vsel %vm560, %v2040, %v2042
        %v2056 = vsel %vm560, %v2042, %v2044
        %v2057 = vsel %vm560, %v2044, %v2046
        %v2058 = vsel %vm560, %v2046, %v2048
        %v2059 = vsel %vm560, %v2048, %v2050
        %v2060 = vsel %vm560, %v2050, %v2052
        %v2061 = vsel %vm560, %v2052, %v2054
        %2062 = vrot.lane.b32.xlu0 %v1847, 27
        %v2063 = vpop.permute.xlu0 %2062
        %2064 = vrot.lane.b32.xlu0 %v1848, 27
        %v2065 = vpop.permute.xlu0 %2064
        %2066 = vrot.lane.b32.xlu0 %v1849, 27
        %v2067 = vpop.permute.xlu0 %2066
        %2068 = vrot.lane.b32.xlu0 %v1850, 27
        %v2069 = vpop.permute.xlu0 %2068
        %2070 = vrot.lane.b32.xlu0 %v1851, 27
        %v2071 = vpop.permute.xlu0 %2070
        %2072 = vrot.lane.b32.xlu0 %v1852, 27
        %v2073 = vpop.permute.xlu0 %2072
        %2074 = vrot.lane.b32.xlu0 %v1853, 27
        %v2075 = vpop.permute.xlu0 %2074
        %2076 = vrot.lane.b32.xlu0 %v1854, 27
        %v2077 = vpop.permute.xlu0 %2076
        %v2078 = vsel %vm584, %v2063, %v2065
        %v2079 = vsel %vm584, %v2065, %v2067
        %v2080 = vsel %vm584, %v2067, %v2069
        %v2081 = vsel %vm584, %v2069, %v2071
        %v2082 = vsel %vm584, %v2071, %v2073
        %v2083 = vsel %vm584, %v2073, %v2075
        %v2084 = vsel %vm584, %v2075, %v2077
        %2085 = vrot.lane.b32.xlu0 %v1847, 26
        %v2086 = vpop.permute.xlu0 %2085
        %2087 = vrot.lane.b32.xlu0 %v1848, 26
        %v2088 = vpop.permute.xlu0 %2087
        %2089 = vrot.lane.b32.xlu0 %v1849, 26
        %v2090 = vpop.permute.xlu0 %2089
        %2091 = vrot.lane.b32.xlu0 %v1850, 26
        %v2092 = vpop.permute.xlu0 %2091
        %2093 = vrot.lane.b32.xlu0 %v1851, 26
        %v2094 = vpop.permute.xlu0 %2093
        %2095 = vrot.lane.b32.xlu0 %v1852, 26
        %v2096 = vpop.permute.xlu0 %2095
        %2097 = vrot.lane.b32.xlu0 %v1853, 26
        %v2098 = vpop.permute.xlu0 %2097
        %2099 = vrot.lane.b32.xlu0 %v1854, 26
        %v2100 = vpop.permute.xlu0 %2099
        %v2101 = vsel %vm608, %v2086, %v2088
        %v2102 = vsel %vm608, %v2088, %v2090
        %v2103 = vsel %vm608, %v2090, %v2092
        %v2104 = vsel %vm608, %v2092, %v2094
        %v2105 = vsel %vm608, %v2094, %v2096
        %v2106 = vsel %vm608, %v2096, %v2098
        %v2107 = vsel %vm608, %v2098, %v2100
        %2108 = vrot.lane.b32.xlu0 %v1847, 18
        %v2109 = vpop.permute.xlu0 %2108
        %2110 = vrot.lane.b32.xlu0 %v1848, 18
        %v2111 = vpop.permute.xlu0 %2110
        %2112 = vrot.lane.b32.xlu0 %v1849, 18
        %v2113 = vpop.permute.xlu0 %2112
        %2114 = vrot.lane.b32.xlu0 %v1850, 18
        %v2115 = vpop.permute.xlu0 %2114
        %2116 = vrot.lane.b32.xlu0 %v1851, 18
        %v2117 = vpop.permute.xlu0 %2116
        %2118 = vrot.lane.b32.xlu0 %v1852, 18
        %v2119 = vpop.permute.xlu0 %2118
        %2120 = vrot.lane.b32.xlu0 %v1853, 18
        %v2121 = vpop.permute.xlu0 %2120
        %2122 = vrot.lane.b32.xlu0 %v1854, 18
        %v2123 = vpop.permute.xlu0 %2122
        %v2124 = vsel %vm632, %v2109, %v2111
        %v2125 = vsel %vm632, %v2111, %v2113
        %v2126 = vsel %vm632, %v2113, %v2115
        %v2127 = vsel %vm632, %v2115, %v2117
        %v2128 = vsel %vm632, %v2117, %v2119
        %v2129 = vsel %vm632, %v2119, %v2121
        %v2130 = vsel %vm632, %v2121, %v2123
        %v2135 = vunpack.c.l.b16 %v1827
        %v2136 = vunpack.c.h.b16 %v1827
        %v2137 = vunpack.c.l.b16 %v1828
        %v2138 = vunpack.c.h.b16 %v1828
        %v2139 = vunpack.c.l.b16 %v1829
        %v2140 = vunpack.c.h.b16 %v1829
        %v2141 = vunpack.c.l.b16 %v1830
        %v2142 = vpack.c.b16 %v2135, %v2135
        %v2143 = vpack.c.b16 %v2136, %v2136
        %v2144 = vpack.c.b16 %v2137, %v2137
        %v2145 = vpack.c.b16 %v2138, %v2138
        %v2146 = vpack.c.b16 %v2139, %v2139
        %v2147 = vpack.c.b16 %v2140, %v2140
        %v2148 = vpack.c.b16 %v2141, %v2141
        %2149 = vrot.lane.b32.xlu0 %v2142, 17
        %v2150 = vpop.permute.xlu0 %2149
        %2151 = vrot.lane.b32.xlu0 %v2143, 17
        %v2152 = vpop.permute.xlu0 %2151
        %2153 = vrot.lane.b32.xlu0 %v2144, 17
        %v2154 = vpop.permute.xlu0 %2153
        %2155 = vrot.lane.b32.xlu0 %v2145, 17
        %v2156 = vpop.permute.xlu0 %2155
        %2157 = vrot.lane.b32.xlu0 %v2146, 17
        %v2158 = vpop.permute.xlu0 %2157
        %2159 = vrot.lane.b32.xlu0 %v2147, 17
        %v2160 = vpop.permute.xlu0 %2159
        %2161 = vrot.lane.b32.xlu0 %v2148, 17
        %v2162 = vpop.permute.xlu0 %2161
        %v2163 = vsel %vm656, %v2150, %v2152
        %v2164 = vsel %vm656, %v2152, %v2154
        %v2165 = vsel %vm656, %v2154, %v2156
        %v2166 = vsel %vm656, %v2156, %v2158
        %v2167 = vsel %vm656, %v2158, %v2160
        %v2168 = vsel %vm656, %v2160, %v2162
        %v2173 = vunpack.c.l.b16 %v1831
        %v2174 = vunpack.c.h.b16 %v1831
        %v2175 = vunpack.c.l.b16 %v1832
        %v2176 = vunpack.c.h.b16 %v1832
        %v2177 = vunpack.c.l.b16 %v1833
        %v2178 = vunpack.c.h.b16 %v1833
        %v2179 = vunpack.c.l.b16 %v1834
        %v2180 = vunpack.c.h.b16 %v1834
        %v2181 = vpack.c.b16 %v2173, %v2173
        %v2182 = vpack.c.b16 %v2174, %v2174
        %v2183 = vpack.c.b16 %v2175, %v2175
        %v2184 = vpack.c.b16 %v2176, %v2176
        %v2185 = vpack.c.b16 %v2177, %v2177
        %v2186 = vpack.c.b16 %v2178, %v2178
        %v2187 = vpack.c.b16 %v2179, %v2179
        %v2188 = vpack.c.b16 %v2180, %v2180
        %2189 = vrot.lane.b32.xlu0 %v2181, 16
        %v2190 = vpop.permute.xlu0 %2189
        %2191 = vrot.lane.b32.xlu0 %v2182, 16
        %v2192 = vpop.permute.xlu0 %2191
        %2193 = vrot.lane.b32.xlu0 %v2183, 16
        %v2194 = vpop.permute.xlu0 %2193
        %2195 = vrot.lane.b32.xlu0 %v2184, 16
        %v2196 = vpop.permute.xlu0 %2195
        %2197 = vrot.lane.b32.xlu0 %v2185, 16
        %v2198 = vpop.permute.xlu0 %2197
        %2199 = vrot.lane.b32.xlu0 %v2186, 16
        %v2200 = vpop.permute.xlu0 %2199
        %2201 = vrot.lane.b32.xlu0 %v2187, 16
        %v2202 = vpop.permute.xlu0 %2201
        %2203 = vrot.lane.b32.xlu0 %v2188, 16
        %v2204 = vpop.permute.xlu0 %2203
        %v2205 = vsel %vm680, %v2190, %v2192
        %v2206 = vsel %vm680, %v2192, %v2194
        %v2207 = vsel %vm680, %v2194, %v2196
        %v2208 = vsel %vm680, %v2196, %v2198
        %v2209 = vsel %vm680, %v2198, %v2200
        %v2210 = vsel %vm680, %v2200, %v2202
        %v2211 = vsel %vm680, %v2202, %v2204
        %2212 = vrot.lane.b32.xlu0 %v2181, 8
        %v2213 = vpop.permute.xlu0 %2212
        %2214 = vrot.lane.b32.xlu0 %v2182, 8
        %v2215 = vpop.permute.xlu0 %2214
        %2216 = vrot.lane.b32.xlu0 %v2183, 8
        %v2217 = vpop.permute.xlu0 %2216
        %2218 = vrot.lane.b32.xlu0 %v2184, 8
        %v2219 = vpop.permute.xlu0 %2218
        %2220 = vrot.lane.b32.xlu0 %v2185, 8
        %v2221 = vpop.permute.xlu0 %2220
        %2222 = vrot.lane.b32.xlu0 %v2186, 8
        %v2223 = vpop.permute.xlu0 %2222
        %2224 = vrot.lane.b32.xlu0 %v2187, 8
        %v2225 = vpop.permute.xlu0 %2224
        %2226 = vrot.lane.b32.xlu0 %v2188, 8
        %v2227 = vpop.permute.xlu0 %2226
        %v2228 = vsel %vm704, %v2213, %v2215
        %v2229 = vsel %vm704, %v2215, %v2217
        %v2230 = vsel %vm704, %v2217, %v2219
        %v2231 = vsel %vm704, %v2219, %v2221
        %v2232 = vsel %vm704, %v2221, %v2223
        %v2233 = vsel %vm704, %v2223, %v2225
        %v2234 = vsel %vm704, %v2225, %v2227
        %v2237 = vsel %vm712, %v1847, %v1871
        %v2240 = vsel %vm712, %v1848, %v1872
        %v2243 = vsel %vm712, %v1849, %v1873
        %v2246 = vsel %vm712, %v1850, %v1874
        %v2249 = vsel %vm712, %v1851, %v1875
        %v2252 = vsel %vm712, %v1852, %v1876
        %v2255 = vsel %vm712, %v1853, %v1877
        %v2258 = vsel %vm712, %v1854, %v1870
        %v2261 = vsel %vm712, %v1894, %v1917
        %v2264 = vsel %vm712, %v1895, %v1918
        %v2267 = vsel %vm712, %v1896, %v1919
        %v2270 = vsel %vm712, %v1897, %v1920
        %v2273 = vsel %vm712, %v1898, %v1921
        %v2276 = vsel %vm712, %v1899, %v1922
        %v2279 = vsel %vm712, %v1900, %v1923
        %v2282 = vsel %vm712, %v1893, %v1916
        %v2285 = vsel %vm712, %v1940, %v1963
        %v2288 = vsel %vm712, %v1941, %v1964
        %v2291 = vsel %vm712, %v1942, %v1965
        %v2294 = vsel %vm712, %v1943, %v1966
        %v2297 = vsel %vm712, %v1944, %v1967
        %v2300 = vsel %vm712, %v1945, %v1968
        %v2303 = vsel %vm712, %v1946, %v1969
        %v2306 = vsel %vm712, %v1939, %v1962
        %v2309 = vsel %vm712, %v1986, %v2009
        %v2312 = vsel %vm712, %v1987, %v2010
        %v2315 = vsel %vm712, %v1988, %v2011
        %v2318 = vsel %vm712, %v1989, %v2012
        %v2321 = vsel %vm712, %v1990, %v2013
        %v2324 = vsel %vm712, %v1991, %v2014
        %v2327 = vsel %vm712, %v1992, %v2015
        %v2330 = vsel %vm712, %v1985, %v2008
        %v2333 = vsel %vm712, %v2032, %v2055
        %v2336 = vsel %vm712, %v2033, %v2056
        %v2339 = vsel %vm712, %v2034, %v2057
        %v2342 = vsel %vm712, %v2035, %v2058
        %v2345 = vsel %vm712, %v2036, %v2059
        %v2348 = vsel %vm712, %v2037, %v2060
        %v2351 = vsel %vm712, %v2038, %v2061
        %v2354 = vsel %vm712, %v2031, %v2054
        %v2357 = vsel %vm712, %v2078, %v2101
        %v2360 = vsel %vm712, %v2079, %v2102
        %v2363 = vsel %vm712, %v2080, %v2103
        %v2366 = vsel %vm712, %v2081, %v2104
        %v2369 = vsel %vm712, %v2082, %v2105
        %v2372 = vsel %vm712, %v2083, %v2106
        %v2375 = vsel %vm712, %v2084, %v2107
        %v2378 = vsel %vm712, %v2077, %v2100
        %v2381 = vsel %vm712, %v2124, %v2150
        %v2384 = vsel %vm712, %v2125, %v2163
        %v2387 = vsel %vm712, %v2126, %v2164
        %v2390 = vsel %vm712, %v2127, %v2165
        %v2393 = vsel %vm712, %v2128, %v2166
        %v2396 = vsel %vm712, %v2129, %v2167
        %v2399 = vsel %vm712, %v2130, %v2168
        %v2402 = vsel %vm712, %v2123, %v2162
        %v2405 = vsel %vm712, %v2190, %v2213
        %v2408 = vsel %vm712, %v2205, %v2228
        %v2411 = vsel %vm712, %v2206, %v2229
        %v2414 = vsel %vm712, %v2207, %v2230
        %v2417 = vsel %vm712, %v2208, %v2231
        %v2420 = vsel %vm712, %v2209, %v2232
        %v2423 = vsel %vm712, %v2210, %v2233
        %v2426 = vsel %vm712, %v2211, %v2234
        %2427 = vrot.lane.b32.xlu0 %v2181, 127
        %v2428 = vpop.permute.xlu0 %2427
        %2429 = vrot.lane.b32.xlu0 %v2182, 127
        %v2430 = vpop.permute.xlu0 %2429
        %2431 = vrot.lane.b32.xlu0 %v2183, 127
        %v2432 = vpop.permute.xlu0 %2431
        %2433 = vrot.lane.b32.xlu0 %v2184, 127
        %v2434 = vpop.permute.xlu0 %2433
        %2435 = vrot.lane.b32.xlu0 %v2185, 127
        %v2436 = vpop.permute.xlu0 %2435
        %2437 = vrot.lane.b32.xlu0 %v2186, 127
        %v2438 = vpop.permute.xlu0 %2437
        %2439 = vrot.lane.b32.xlu0 %v2187, 127
        %v2440 = vpop.permute.xlu0 %2439
        %2441 = vrot.lane.b32.xlu0 %v2188, 127
        %v2442 = vpop.permute.xlu0 %2441
        %v2443 = vsel %vm368, %v2428, %v2430
        %v2444 = vsel %vm368, %v2430, %v2432
        %v2445 = vsel %vm368, %v2432, %v2434
        %v2446 = vsel %vm368, %v2434, %v2436
        %v2447 = vsel %vm368, %v2436, %v2438
        %v2448 = vsel %vm368, %v2438, %v2440
        %v2449 = vsel %vm368, %v2440, %v2442
        %2450 = vrot.lane.b32.xlu0 %v2181, 49
        %v2451 = vpop.permute.xlu0 %2450
        %2452 = vrot.lane.b32.xlu0 %v2182, 49
        %v2453 = vpop.permute.xlu0 %2452
        %2454 = vrot.lane.b32.xlu0 %v2183, 49
        %v2455 = vpop.permute.xlu0 %2454
        %2456 = vrot.lane.b32.xlu0 %v2184, 49
        %v2457 = vpop.permute.xlu0 %2456
        %2458 = vrot.lane.b32.xlu0 %v2185, 49
        %v2459 = vpop.permute.xlu0 %2458
        %2460 = vrot.lane.b32.xlu0 %v2186, 49
        %v2461 = vpop.permute.xlu0 %2460
        %2462 = vrot.lane.b32.xlu0 %v2187, 49
        %v2463 = vpop.permute.xlu0 %2462
        %2464 = vrot.lane.b32.xlu0 %v2188, 49
        %v2465 = vpop.permute.xlu0 %2464
        %v2466 = vsel %vm973, %v2451, %v2453
        %v2467 = vsel %vm973, %v2453, %v2455
        %v2468 = vsel %vm973, %v2455, %v2457
        %v2469 = vsel %vm973, %v2457, %v2459
        %v2470 = vsel %vm973, %v2459, %v2461
        %v2471 = vsel %vm973, %v2461, %v2463
        %v2472 = vsel %vm973, %v2463, %v2465
        %2473 = vrot.lane.b32.xlu0 %v2181, 48
        %v2474 = vpop.permute.xlu0 %2473
        %2475 = vrot.lane.b32.xlu0 %v2182, 48
        %v2476 = vpop.permute.xlu0 %2475
        %2477 = vrot.lane.b32.xlu0 %v2183, 48
        %v2478 = vpop.permute.xlu0 %2477
        %2479 = vrot.lane.b32.xlu0 %v2184, 48
        %v2480 = vpop.permute.xlu0 %2479
        %2481 = vrot.lane.b32.xlu0 %v2185, 48
        %v2482 = vpop.permute.xlu0 %2481
        %2483 = vrot.lane.b32.xlu0 %v2186, 48
        %v2484 = vpop.permute.xlu0 %2483
        %2485 = vrot.lane.b32.xlu0 %v2187, 48
        %v2486 = vpop.permute.xlu0 %2485
        %2487 = vrot.lane.b32.xlu0 %v2188, 48
        %v2488 = vpop.permute.xlu0 %2487
        %v2489 = vsel %vm997, %v2474, %v2476
        %v2490 = vsel %vm997, %v2476, %v2478
        %v2491 = vsel %vm997, %v2478, %v2480
        %v2492 = vsel %vm997, %v2480, %v2482
        %v2493 = vsel %vm997, %v2482, %v2484
        %v2494 = vsel %vm997, %v2484, %v2486
        %v2495 = vsel %vm997, %v2486, %v2488
        %2496 = vrot.lane.b32.xlu0 %v2181, 47
        %v2497 = vpop.permute.xlu0 %2496
        %2498 = vrot.lane.b32.xlu0 %v2182, 47
        %v2499 = vpop.permute.xlu0 %2498
        %2500 = vrot.lane.b32.xlu0 %v2183, 47
        %v2501 = vpop.permute.xlu0 %2500
        %2502 = vrot.lane.b32.xlu0 %v2184, 47
        %v2503 = vpop.permute.xlu0 %2502
        %2504 = vrot.lane.b32.xlu0 %v2185, 47
        %v2505 = vpop.permute.xlu0 %2504
        %2506 = vrot.lane.b32.xlu0 %v2186, 47
        %v2507 = vpop.permute.xlu0 %2506
        %2508 = vrot.lane.b32.xlu0 %v2187, 47
        %v2509 = vpop.permute.xlu0 %2508
        %2510 = vrot.lane.b32.xlu0 %v2188, 47
        %v2511 = vpop.permute.xlu0 %2510
        %v2512 = vsel %vm1021, %v2497, %v2499
        %v2513 = vsel %vm1021, %v2499, %v2501
        %v2514 = vsel %vm1021, %v2501, %v2503
        %v2515 = vsel %vm1021, %v2503, %v2505
        %v2516 = vsel %vm1021, %v2505, %v2507
        %v2517 = vsel %vm1021, %v2507, %v2509
        %v2518 = vsel %vm1021, %v2509, %v2511
        %2519 = vrot.lane.b32.xlu0 %v2181, 39
        %v2520 = vpop.permute.xlu0 %2519
        %2521 = vrot.lane.b32.xlu0 %v2182, 39
        %v2522 = vpop.permute.xlu0 %2521
        %2523 = vrot.lane.b32.xlu0 %v2183, 39
        %v2524 = vpop.permute.xlu0 %2523
        %2525 = vrot.lane.b32.xlu0 %v2184, 39
        %v2526 = vpop.permute.xlu0 %2525
        %2527 = vrot.lane.b32.xlu0 %v2185, 39
        %v2528 = vpop.permute.xlu0 %2527
        %2529 = vrot.lane.b32.xlu0 %v2186, 39
        %v2530 = vpop.permute.xlu0 %2529
        %2531 = vrot.lane.b32.xlu0 %v2187, 39
        %v2532 = vpop.permute.xlu0 %2531
        %2533 = vrot.lane.b32.xlu0 %v2188, 39
        %v2534 = vpop.permute.xlu0 %2533
        %v2535 = vsel %vm1045, %v2520, %v2522
        %v2536 = vsel %vm1045, %v2522, %v2524
        %v2537 = vsel %vm1045, %v2524, %v2526
        %v2538 = vsel %vm1045, %v2526, %v2528
        %v2539 = vsel %vm1045, %v2528, %v2530
        %v2540 = vsel %vm1045, %v2530, %v2532
        %v2541 = vsel %vm1045, %v2532, %v2534
        %2542 = vrot.lane.b32.xlu0 %v2181, 38
        %v2543 = vpop.permute.xlu0 %2542
        %2544 = vrot.lane.b32.xlu0 %v2182, 38
        %v2545 = vpop.permute.xlu0 %2544
        %2546 = vrot.lane.b32.xlu0 %v2183, 38
        %v2547 = vpop.permute.xlu0 %2546
        %2548 = vrot.lane.b32.xlu0 %v2184, 38
        %v2549 = vpop.permute.xlu0 %2548
        %2550 = vrot.lane.b32.xlu0 %v2185, 38
        %v2551 = vpop.permute.xlu0 %2550
        %2552 = vrot.lane.b32.xlu0 %v2186, 38
        %v2553 = vpop.permute.xlu0 %2552
        %2554 = vrot.lane.b32.xlu0 %v2187, 38
        %v2555 = vpop.permute.xlu0 %2554
        %2556 = vrot.lane.b32.xlu0 %v2188, 38
        %v2557 = vpop.permute.xlu0 %2556
        %v2558 = vsel %vm1069, %v2543, %v2545
        %v2559 = vsel %vm1069, %v2545, %v2547
        %v2560 = vsel %vm1069, %v2547, %v2549
        %v2561 = vsel %vm1069, %v2549, %v2551
        %v2562 = vsel %vm1069, %v2551, %v2553
        %v2563 = vsel %vm1069, %v2553, %v2555
        %v2564 = vsel %vm1069, %v2555, %v2557
        %2565 = vrot.lane.b32.xlu0 %v2181, 37
        %v2566 = vpop.permute.xlu0 %2565
        %2567 = vrot.lane.b32.xlu0 %v2182, 37
        %v2568 = vpop.permute.xlu0 %2567
        %2569 = vrot.lane.b32.xlu0 %v2183, 37
        %v2570 = vpop.permute.xlu0 %2569
        %2571 = vrot.lane.b32.xlu0 %v2184, 37
        %v2572 = vpop.permute.xlu0 %2571
        %2573 = vrot.lane.b32.xlu0 %v2185, 37
        %v2574 = vpop.permute.xlu0 %2573
        %2575 = vrot.lane.b32.xlu0 %v2186, 37
        %v2576 = vpop.permute.xlu0 %2575
        %2577 = vrot.lane.b32.xlu0 %v2187, 37
        %v2578 = vpop.permute.xlu0 %2577
        %2579 = vrot.lane.b32.xlu0 %v2188, 37
        %v2580 = vpop.permute.xlu0 %2579
        %v2581 = vsel %vm1093, %v2566, %v2568
        %v2582 = vsel %vm1093, %v2568, %v2570
        %v2583 = vsel %vm1093, %v2570, %v2572
        %v2584 = vsel %vm1093, %v2572, %v2574
        %v2585 = vsel %vm1093, %v2574, %v2576
        %v2586 = vsel %vm1093, %v2576, %v2578
        %v2587 = vsel %vm1093, %v2578, %v2580
        %2588 = vrot.lane.b32.xlu0 %v2181, 29
        %v2589 = vpop.permute.xlu0 %2588
        %2590 = vrot.lane.b32.xlu0 %v2182, 29
        %v2591 = vpop.permute.xlu0 %2590
        %2592 = vrot.lane.b32.xlu0 %v2183, 29
        %v2593 = vpop.permute.xlu0 %2592
        %2594 = vrot.lane.b32.xlu0 %v2184, 29
        %v2595 = vpop.permute.xlu0 %2594
        %2596 = vrot.lane.b32.xlu0 %v2185, 29
        %v2597 = vpop.permute.xlu0 %2596
        %2598 = vrot.lane.b32.xlu0 %v2186, 29
        %v2599 = vpop.permute.xlu0 %2598
        %2600 = vrot.lane.b32.xlu0 %v2187, 29
        %v2601 = vpop.permute.xlu0 %2600
        %2602 = vrot.lane.b32.xlu0 %v2188, 29
        %v2603 = vpop.permute.xlu0 %2602
        %v2604 = vsel %vm1117, %v2589, %v2591
        %v2605 = vsel %vm1117, %v2591, %v2593
        %v2606 = vsel %vm1117, %v2593, %v2595
        %v2607 = vsel %vm1117, %v2595, %v2597
        %v2608 = vsel %vm1117, %v2597, %v2599
        %v2609 = vsel %vm1117, %v2599, %v2601
        %v2610 = vsel %vm1117, %v2601, %v2603
        %2611 = vrot.lane.b32.xlu0 %v2181, 28
        %v2612 = vpop.permute.xlu0 %2611
        %2613 = vrot.lane.b32.xlu0 %v2182, 28
        %v2614 = vpop.permute.xlu0 %2613
        %2615 = vrot.lane.b32.xlu0 %v2183, 28
        %v2616 = vpop.permute.xlu0 %2615
        %2617 = vrot.lane.b32.xlu0 %v2184, 28
        %v2618 = vpop.permute.xlu0 %2617
        %2619 = vrot.lane.b32.xlu0 %v2185, 28
        %v2620 = vpop.permute.xlu0 %2619
        %2621 = vrot.lane.b32.xlu0 %v2186, 28
        %v2622 = vpop.permute.xlu0 %2621
        %2623 = vrot.lane.b32.xlu0 %v2187, 28
        %v2624 = vpop.permute.xlu0 %2623
        %2625 = vrot.lane.b32.xlu0 %v2188, 28
        %v2626 = vpop.permute.xlu0 %2625
        %v2627 = vsel %vm560, %v2612, %v2614
        %v2628 = vsel %vm560, %v2614, %v2616
        %v2629 = vsel %vm560, %v2616, %v2618
        %v2630 = vsel %vm560, %v2618, %v2620
        %v2631 = vsel %vm560, %v2620, %v2622
        %v2632 = vsel %vm560, %v2622, %v2624
        %v2633 = vsel %vm560, %v2624, %v2626
        %2634 = vrot.lane.b32.xlu0 %v2181, 27
        %v2635 = vpop.permute.xlu0 %2634
        %2636 = vrot.lane.b32.xlu0 %v2182, 27
        %v2637 = vpop.permute.xlu0 %2636
        %2638 = vrot.lane.b32.xlu0 %v2183, 27
        %v2639 = vpop.permute.xlu0 %2638
        %2640 = vrot.lane.b32.xlu0 %v2184, 27
        %v2641 = vpop.permute.xlu0 %2640
        %2642 = vrot.lane.b32.xlu0 %v2185, 27
        %v2643 = vpop.permute.xlu0 %2642
        %2644 = vrot.lane.b32.xlu0 %v2186, 27
        %v2645 = vpop.permute.xlu0 %2644
        %2646 = vrot.lane.b32.xlu0 %v2187, 27
        %v2647 = vpop.permute.xlu0 %2646
        %2648 = vrot.lane.b32.xlu0 %v2188, 27
        %v2649 = vpop.permute.xlu0 %2648
        %v2650 = vsel %vm584, %v2635, %v2637
        %v2651 = vsel %vm584, %v2637, %v2639
        %v2652 = vsel %vm584, %v2639, %v2641
        %v2653 = vsel %vm584, %v2641, %v2643
        %v2654 = vsel %vm584, %v2643, %v2645
        %v2655 = vsel %vm584, %v2645, %v2647
        %v2656 = vsel %vm584, %v2647, %v2649
        %v2659 = vsel %vm712, %v2181, %v2443
        %v2662 = vsel %vm712, %v2182, %v2444
        %v2665 = vsel %vm712, %v2183, %v2445
        %v2668 = vsel %vm712, %v2184, %v2446
        %v2671 = vsel %vm712, %v2185, %v2447
        %v2674 = vsel %vm712, %v2186, %v2448
        %v2677 = vsel %vm712, %v2187, %v2449
        %v2680 = vsel %vm712, %v2188, %v2442
        %v2683 = vsel %vm712, %v2466, %v2489
        %v2686 = vsel %vm712, %v2467, %v2490
        %v2689 = vsel %vm712, %v2468, %v2491
        %v2692 = vsel %vm712, %v2469, %v2492
        %v2695 = vsel %vm712, %v2470, %v2493
        %v2698 = vsel %vm712, %v2471, %v2494
        %v2701 = vsel %vm712, %v2472, %v2495
        %v2704 = vsel %vm712, %v2465, %v2488
        %v2707 = vsel %vm712, %v2512, %v2535
        %v2710 = vsel %vm712, %v2513, %v2536
        %v2713 = vsel %vm712, %v2514, %v2537
        %v2716 = vsel %vm712, %v2515, %v2538
        %v2719 = vsel %vm712, %v2516, %v2539
        %v2722 = vsel %vm712, %v2517, %v2540
        %v2725 = vsel %vm712, %v2518, %v2541
        %v2728 = vsel %vm712, %v2511, %v2534
        %v2731 = vsel %vm712, %v2558, %v2581
        %v2734 = vsel %vm712, %v2559, %v2582
        %v2737 = vsel %vm712, %v2560, %v2583
        %v2740 = vsel %vm712, %v2561, %v2584
        %v2743 = vsel %vm712, %v2562, %v2585
        %v2746 = vsel %vm712, %v2563, %v2586
        %v2749 = vsel %vm712, %v2564, %v2587
        %v2752 = vsel %vm712, %v2557, %v2580
        %v2755 = vsel %vm712, %v2604, %v2627
        %v2758 = vsel %vm712, %v2605, %v2628
        %v2761 = vsel %vm712, %v2606, %v2629
        %v2764 = vsel %vm712, %v2607, %v2630
        %v2767 = vsel %vm712, %v2608, %v2631
        %v2770 = vsel %vm712, %v2609, %v2632
        %v2773 = vsel %vm712, %v2610, %v2633
        %v2776 = vsel %vm712, %v2603, %v2626
        %2817 = vrot.lane.b32.xlu0 %v2659, 7
        %v2818 = vpop.permute.xlu0 %2817
        %2819 = vrot.lane.b32.xlu0 %v2662, 7
        %v2820 = vpop.permute.xlu0 %2819
        %2821 = vrot.lane.b32.xlu0 %v2665, 7
        %v2822 = vpop.permute.xlu0 %2821
        %2823 = vrot.lane.b32.xlu0 %v2668, 7
        %v2824 = vpop.permute.xlu0 %2823
        %2825 = vrot.lane.b32.xlu0 %v2671, 7
        %v2826 = vpop.permute.xlu0 %2825
        %2827 = vrot.lane.b32.xlu0 %v2674, 7
        %v2828 = vpop.permute.xlu0 %2827
        %2829 = vrot.lane.b32.xlu0 %v2677, 7
        %v2830 = vpop.permute.xlu0 %2829
        %2831 = vrot.lane.b32.xlu0 %v2680, 7
        %v2832 = vpop.permute.xlu0 %2831
        %2833 = vrot.lane.b32.xlu0 %v2683, 7
        %v2834 = vpop.permute.xlu0 %2833
        %2835 = vrot.lane.b32.xlu0 %v2686, 7
        %v2836 = vpop.permute.xlu0 %2835
        %2837 = vrot.lane.b32.xlu0 %v2689, 7
        %v2838 = vpop.permute.xlu0 %2837
        %2839 = vrot.lane.b32.xlu0 %v2692, 7
        %v2840 = vpop.permute.xlu0 %2839
        %2841 = vrot.lane.b32.xlu0 %v2695, 7
        %v2842 = vpop.permute.xlu0 %2841
        %2843 = vrot.lane.b32.xlu0 %v2698, 7
        %v2844 = vpop.permute.xlu0 %2843
        %2845 = vrot.lane.b32.xlu0 %v2701, 7
        %v2846 = vpop.permute.xlu0 %2845
        %2847 = vrot.lane.b32.xlu0 %v2704, 7
        %v2848 = vpop.permute.xlu0 %2847
        %2849 = vrot.lane.b32.xlu0 %v2707, 7
        %v2850 = vpop.permute.xlu0 %2849
        %2851 = vrot.lane.b32.xlu0 %v2710, 7
        %v2852 = vpop.permute.xlu0 %2851
        %2853 = vrot.lane.b32.xlu0 %v2713, 7
        %v2854 = vpop.permute.xlu0 %2853
        %2855 = vrot.lane.b32.xlu0 %v2716, 7
        %v2856 = vpop.permute.xlu0 %2855
        %2857 = vrot.lane.b32.xlu0 %v2719, 7
        %v2858 = vpop.permute.xlu0 %2857
        %2859 = vrot.lane.b32.xlu0 %v2722, 7
        %v2860 = vpop.permute.xlu0 %2859
        %2861 = vrot.lane.b32.xlu0 %v2725, 7
        %v2862 = vpop.permute.xlu0 %2861
        %2863 = vrot.lane.b32.xlu0 %v2728, 7
        %v2864 = vpop.permute.xlu0 %2863
        %2865 = vrot.lane.b32.xlu0 %v2731, 7
        %v2866 = vpop.permute.xlu0 %2865
        %2867 = vrot.lane.b32.xlu0 %v2734, 7
        %v2868 = vpop.permute.xlu0 %2867
        %2869 = vrot.lane.b32.xlu0 %v2737, 7
        %v2870 = vpop.permute.xlu0 %2869
        %2871 = vrot.lane.b32.xlu0 %v2740, 7
        %v2872 = vpop.permute.xlu0 %2871
        %2873 = vrot.lane.b32.xlu0 %v2743, 7
        %v2874 = vpop.permute.xlu0 %2873
        %2875 = vrot.lane.b32.xlu0 %v2746, 7
        %v2876 = vpop.permute.xlu0 %2875
        %2877 = vrot.lane.b32.xlu0 %v2749, 7
        %v2878 = vpop.permute.xlu0 %2877
        %2879 = vrot.lane.b32.xlu0 %v2752, 7
        %v2880 = vpop.permute.xlu0 %2879
        %2881 = vrot.lane.b32.xlu0 %v2755, 7
        %v2882 = vpop.permute.xlu0 %2881
        %2883 = vrot.lane.b32.xlu0 %v2758, 7
        %v2884 = vpop.permute.xlu0 %2883
        %2885 = vrot.lane.b32.xlu0 %v2761, 7
        %v2886 = vpop.permute.xlu0 %2885
        %2887 = vrot.lane.b32.xlu0 %v2764, 7
        %v2888 = vpop.permute.xlu0 %2887
        %2889 = vrot.lane.b32.xlu0 %v2767, 7
        %v2890 = vpop.permute.xlu0 %2889
        %2891 = vrot.lane.b32.xlu0 %v2770, 7
        %v2892 = vpop.permute.xlu0 %2891
        %2893 = vrot.lane.b32.xlu0 %v2773, 7
        %v2894 = vpop.permute.xlu0 %2893
        %2895 = vrot.lane.b32.xlu0 %v2776, 7
        %v2896 = vpop.permute.xlu0 %2895
        %2897 = vrot.lane.b32.xlu0 %v2650, 7
        %v2898 = vpop.permute.xlu0 %2897
        %2899 = vrot.lane.b32.xlu0 %v2651, 7
        %v2900 = vpop.permute.xlu0 %2899
        %2901 = vrot.lane.b32.xlu0 %v2652, 7
        %v2902 = vpop.permute.xlu0 %2901
        %2903 = vrot.lane.b32.xlu0 %v2653, 7
        %v2904 = vpop.permute.xlu0 %2903
        %2905 = vrot.lane.b32.xlu0 %v2654, 7
        %v2906 = vpop.permute.xlu0 %2905
        %2907 = vrot.lane.b32.xlu0 %v2655, 7
        %v2908 = vpop.permute.xlu0 %2907
        %2909 = vrot.lane.b32.xlu0 %v2656, 7
        %v2910 = vpop.permute.xlu0 %2909
        %2911 = vrot.lane.b32.xlu0 %v2649, 7
        %v2912 = vpop.permute.xlu0 %2911
        %v2913 = vsel %vm1408, %v2818, %v2820
        %v2914 = vsel %vm1408, %v2820, %v2822
        %v2915 = vsel %vm1408, %v2822, %v2824
        %v2916 = vsel %vm1408, %v2824, %v2826
        %v2917 = vsel %vm1408, %v2826, %v2828
        %v2918 = vsel %vm1408, %v2828, %v2830
        %v2919 = vsel %vm1408, %v2830, %v2832
        %v2920 = vsel %vm1408, %v2834, %v2836
        %v2921 = vsel %vm1408, %v2836, %v2838
        %v2922 = vsel %vm1408, %v2838, %v2840
        %v2923 = vsel %vm1408, %v2840, %v2842
        %v2924 = vsel %vm1408, %v2842, %v2844
        %v2925 = vsel %vm1408, %v2844, %v2846
        %v2926 = vsel %vm1408, %v2846, %v2848
        %v2927 = vsel %vm1408, %v2850, %v2852
        %v2928 = vsel %vm1408, %v2852, %v2854
        %v2929 = vsel %vm1408, %v2854, %v2856
        %v2930 = vsel %vm1408, %v2856, %v2858
        %v2931 = vsel %vm1408, %v2858, %v2860
        %v2932 = vsel %vm1408, %v2860, %v2862
        %v2933 = vsel %vm1408, %v2862, %v2864
        %v2934 = vsel %vm1408, %v2866, %v2868
        %v2935 = vsel %vm1408, %v2868, %v2870
        %v2936 = vsel %vm1408, %v2870, %v2872
        %v2937 = vsel %vm1408, %v2872, %v2874
        %v2938 = vsel %vm1408, %v2874, %v2876
        %v2939 = vsel %vm1408, %v2876, %v2878
        %v2940 = vsel %vm1408, %v2878, %v2880
        %v2941 = vsel %vm1408, %v2882, %v2884
        %v2942 = vsel %vm1408, %v2884, %v2886
        %v2943 = vsel %vm1408, %v2886, %v2888
        %v2944 = vsel %vm1408, %v2888, %v2890
        %v2945 = vsel %vm1408, %v2890, %v2892
        %v2946 = vsel %vm1408, %v2892, %v2894
        %v2947 = vsel %vm1408, %v2894, %v2896
        %v2948 = vsel %vm1408, %v2898, %v2900
        %v2949 = vsel %vm1408, %v2900, %v2902
        %v2950 = vsel %vm1408, %v2902, %v2904
        %v2951 = vsel %vm1408, %v2904, %v2906
        %v2952 = vsel %vm1408, %v2906, %v2908
        %v2953 = vsel %vm1408, %v2908, %v2910
        %v2954 = vsel %vm1408, %v2910, %v2912
        %v2955 = vld [vmem:[%s4] sm:$0xff]
        %v2956 = vld [vmem:[%s5] sm:$0xff]
        %2958 = vset.pattern.permute.xlu0 1
        %2959 = vperm.xlu0 %2958, %v2956
        %v2960 = vpop.permute.xlu0 %2959
        %v2963 = vunpack.c.l.b16 %v2955
        %v2964 = vunpack.c.h.b16 %v2955
        %v2965 = vpack.c.b16 %v2963, %v2963
        %v2966 = vpack.c.b16 %v2964, %v2964
        %3032 = vrot.lane.b32.xlu0 %v2237, 111
        %v3033 = vpop.permute.xlu0 %3032
        %3034 = vrot.lane.b32.xlu0 %v2240, 111
        %v3035 = vpop.permute.xlu0 %3034
        %3036 = vrot.lane.b32.xlu0 %v2243, 111
        %v3037 = vpop.permute.xlu0 %3036
        %3038 = vrot.lane.b32.xlu0 %v2246, 111
        %v3039 = vpop.permute.xlu0 %3038
        %3040 = vrot.lane.b32.xlu0 %v2249, 111
        %v3041 = vpop.permute.xlu0 %3040
        %3042 = vrot.lane.b32.xlu0 %v2252, 111
        %v3043 = vpop.permute.xlu0 %3042
        %3044 = vrot.lane.b32.xlu0 %v2255, 111
        %v3045 = vpop.permute.xlu0 %3044
        %3046 = vrot.lane.b32.xlu0 %v2258, 111
        %v3047 = vpop.permute.xlu0 %3046
        %3048 = vrot.lane.b32.xlu0 %v2261, 111
        %v3049 = vpop.permute.xlu0 %3048
        %3050 = vrot.lane.b32.xlu0 %v2264, 111
        %v3051 = vpop.permute.xlu0 %3050
        %3052 = vrot.lane.b32.xlu0 %v2267, 111
        %v3053 = vpop.permute.xlu0 %3052
        %3054 = vrot.lane.b32.xlu0 %v2270, 111
        %v3055 = vpop.permute.xlu0 %3054
        %3056 = vrot.lane.b32.xlu0 %v2273, 111
        %v3057 = vpop.permute.xlu0 %3056
        %3058 = vrot.lane.b32.xlu0 %v2276, 111
        %v3059 = vpop.permute.xlu0 %3058
        %3060 = vrot.lane.b32.xlu0 %v2279, 111
        %v3061 = vpop.permute.xlu0 %3060
        %3062 = vrot.lane.b32.xlu0 %v2282, 111
        %v3063 = vpop.permute.xlu0 %3062
        %3064 = vrot.lane.b32.xlu0 %v2285, 111
        %v3065 = vpop.permute.xlu0 %3064
        %3066 = vrot.lane.b32.xlu0 %v2288, 111
        %v3067 = vpop.permute.xlu0 %3066
        %3068 = vrot.lane.b32.xlu0 %v2291, 111
        %v3069 = vpop.permute.xlu0 %3068
        %3070 = vrot.lane.b32.xlu0 %v2294, 111
        %v3071 = vpop.permute.xlu0 %3070
        %3072 = vrot.lane.b32.xlu0 %v2297, 111
        %v3073 = vpop.permute.xlu0 %3072
        %3074 = vrot.lane.b32.xlu0 %v2300, 111
        %v3075 = vpop.permute.xlu0 %3074
        %3076 = vrot.lane.b32.xlu0 %v2303, 111
        %v3077 = vpop.permute.xlu0 %3076
        %3078 = vrot.lane.b32.xlu0 %v2306, 111
        %v3079 = vpop.permute.xlu0 %3078
        %3080 = vrot.lane.b32.xlu0 %v2309, 111
        %v3081 = vpop.permute.xlu0 %3080
        %3082 = vrot.lane.b32.xlu0 %v2312, 111
        %v3083 = vpop.permute.xlu0 %3082
        %3084 = vrot.lane.b32.xlu0 %v2315, 111
        %v3085 = vpop.permute.xlu0 %3084
        %3086 = vrot.lane.b32.xlu0 %v2318, 111
        %v3087 = vpop.permute.xlu0 %3086
        %3088 = vrot.lane.b32.xlu0 %v2321, 111
        %v3089 = vpop.permute.xlu0 %3088
        %3090 = vrot.lane.b32.xlu0 %v2324, 111
        %v3091 = vpop.permute.xlu0 %3090
        %3092 = vrot.lane.b32.xlu0 %v2327, 111
        %v3093 = vpop.permute.xlu0 %3092
        %3094 = vrot.lane.b32.xlu0 %v2330, 111
        %v3095 = vpop.permute.xlu0 %3094
        %3096 = vrot.lane.b32.xlu0 %v2333, 111
        %v3097 = vpop.permute.xlu0 %3096
        %3098 = vrot.lane.b32.xlu0 %v2336, 111
        %v3099 = vpop.permute.xlu0 %3098
        %3100 = vrot.lane.b32.xlu0 %v2339, 111
        %v3101 = vpop.permute.xlu0 %3100
        %3102 = vrot.lane.b32.xlu0 %v2342, 111
        %v3103 = vpop.permute.xlu0 %3102
        %3104 = vrot.lane.b32.xlu0 %v2345, 111
        %v3105 = vpop.permute.xlu0 %3104
        %3106 = vrot.lane.b32.xlu0 %v2348, 111
        %v3107 = vpop.permute.xlu0 %3106
        %3108 = vrot.lane.b32.xlu0 %v2351, 111
        %v3109 = vpop.permute.xlu0 %3108
        %3110 = vrot.lane.b32.xlu0 %v2354, 111
        %v3111 = vpop.permute.xlu0 %3110
        %3112 = vrot.lane.b32.xlu0 %v2357, 111
        %v3113 = vpop.permute.xlu0 %3112
        %3114 = vrot.lane.b32.xlu0 %v2360, 111
        %v3115 = vpop.permute.xlu0 %3114
        %3116 = vrot.lane.b32.xlu0 %v2363, 111
        %v3117 = vpop.permute.xlu0 %3116
        %3118 = vrot.lane.b32.xlu0 %v2366, 111
        %v3119 = vpop.permute.xlu0 %3118
        %3120 = vrot.lane.b32.xlu0 %v2369, 111
        %v3121 = vpop.permute.xlu0 %3120
        %3122 = vrot.lane.b32.xlu0 %v2372, 111
        %v3123 = vpop.permute.xlu0 %3122
        %3124 = vrot.lane.b32.xlu0 %v2375, 111
        %v3125 = vpop.permute.xlu0 %3124
        %3126 = vrot.lane.b32.xlu0 %v2378, 111
        %v3127 = vpop.permute.xlu0 %3126
        %3128 = vrot.lane.b32.xlu0 %v2381, 111
        %v3129 = vpop.permute.xlu0 %3128
        %3130 = vrot.lane.b32.xlu0 %v2384, 111
        %v3131 = vpop.permute.xlu0 %3130
        %3132 = vrot.lane.b32.xlu0 %v2387, 111
        %v3133 = vpop.permute.xlu0 %3132
        %3134 = vrot.lane.b32.xlu0 %v2390, 111
        %v3135 = vpop.permute.xlu0 %3134
        %3136 = vrot.lane.b32.xlu0 %v2393, 111
        %v3137 = vpop.permute.xlu0 %3136
        %3138 = vrot.lane.b32.xlu0 %v2396, 111
        %v3139 = vpop.permute.xlu0 %3138
        %3140 = vrot.lane.b32.xlu0 %v2399, 111
        %v3141 = vpop.permute.xlu0 %3140
        %3142 = vrot.lane.b32.xlu0 %v2402, 111
        %v3143 = vpop.permute.xlu0 %3142
        %3144 = vrot.lane.b32.xlu0 %v2405, 111
        %v3145 = vpop.permute.xlu0 %3144
        %3146 = vrot.lane.b32.xlu0 %v2408, 111
        %v3147 = vpop.permute.xlu0 %3146
        %3148 = vrot.lane.b32.xlu0 %v2411, 111
        %v3149 = vpop.permute.xlu0 %3148
        %3150 = vrot.lane.b32.xlu0 %v2414, 111
        %v3151 = vpop.permute.xlu0 %3150
        %3152 = vrot.lane.b32.xlu0 %v2417, 111
        %v3153 = vpop.permute.xlu0 %3152
        %3154 = vrot.lane.b32.xlu0 %v2420, 111
        %v3155 = vpop.permute.xlu0 %3154
        %3156 = vrot.lane.b32.xlu0 %v2423, 111
        %v3157 = vpop.permute.xlu0 %3156
        %3158 = vrot.lane.b32.xlu0 %v2426, 111
        %v3159 = vpop.permute.xlu0 %3158
        %3160 = vrot.lane.b32.xlu0 %v2818, 111
        %v3161 = vpop.permute.xlu0 %3160
        %3162 = vrot.lane.b32.xlu0 %v2913, 111
        %v3163 = vpop.permute.xlu0 %3162
        %3164 = vrot.lane.b32.xlu0 %v2914, 111
        %v3165 = vpop.permute.xlu0 %3164
        %3166 = vrot.lane.b32.xlu0 %v2915, 111
        %v3167 = vpop.permute.xlu0 %3166
        %3168 = vrot.lane.b32.xlu0 %v2916, 111
        %v3169 = vpop.permute.xlu0 %3168
        %3170 = vrot.lane.b32.xlu0 %v2917, 111
        %v3171 = vpop.permute.xlu0 %3170
        %3172 = vrot.lane.b32.xlu0 %v2918, 111
        %v3173 = vpop.permute.xlu0 %3172
        %3174 = vrot.lane.b32.xlu0 %v2919, 111
        %v3175 = vpop.permute.xlu0 %3174
        %3176 = vrot.lane.b32.xlu0 %v2834, 111
        %v3177 = vpop.permute.xlu0 %3176
        %3178 = vrot.lane.b32.xlu0 %v2920, 111
        %v3179 = vpop.permute.xlu0 %3178
        %3180 = vrot.lane.b32.xlu0 %v2921, 111
        %v3181 = vpop.permute.xlu0 %3180
        %3182 = vrot.lane.b32.xlu0 %v2922, 111
        %v3183 = vpop.permute.xlu0 %3182
        %3184 = vrot.lane.b32.xlu0 %v2923, 111
        %v3185 = vpop.permute.xlu0 %3184
        %3186 = vrot.lane.b32.xlu0 %v2924, 111
        %v3187 = vpop.permute.xlu0 %3186
        %3188 = vrot.lane.b32.xlu0 %v2925, 111
        %v3189 = vpop.permute.xlu0 %3188
        %3190 = vrot.lane.b32.xlu0 %v2926, 111
        %v3191 = vpop.permute.xlu0 %3190
        %3192 = vrot.lane.b32.xlu0 %v2850, 111
        %v3193 = vpop.permute.xlu0 %3192
        %3194 = vrot.lane.b32.xlu0 %v2927, 111
        %v3195 = vpop.permute.xlu0 %3194
        %3196 = vrot.lane.b32.xlu0 %v2928, 111
        %v3197 = vpop.permute.xlu0 %3196
        %3198 = vrot.lane.b32.xlu0 %v2929, 111
        %v3199 = vpop.permute.xlu0 %3198
        %3200 = vrot.lane.b32.xlu0 %v2930, 111
        %v3201 = vpop.permute.xlu0 %3200
        %3202 = vrot.lane.b32.xlu0 %v2931, 111
        %v3203 = vpop.permute.xlu0 %3202
        %3204 = vrot.lane.b32.xlu0 %v2932, 111
        %v3205 = vpop.permute.xlu0 %3204
        %3206 = vrot.lane.b32.xlu0 %v2933, 111
        %v3207 = vpop.permute.xlu0 %3206
        %3208 = vrot.lane.b32.xlu0 %v2866, 111
        %v3209 = vpop.permute.xlu0 %3208
        %3210 = vrot.lane.b32.xlu0 %v2934, 111
        %v3211 = vpop.permute.xlu0 %3210
        %3212 = vrot.lane.b32.xlu0 %v2935, 111
        %v3213 = vpop.permute.xlu0 %3212
        %3214 = vrot.lane.b32.xlu0 %v2936, 111
        %v3215 = vpop.permute.xlu0 %3214
        %3216 = vrot.lane.b32.xlu0 %v2937, 111
        %v3217 = vpop.permute.xlu0 %3216
        %3218 = vrot.lane.b32.xlu0 %v2938, 111
        %v3219 = vpop.permute.xlu0 %3218
        %3220 = vrot.lane.b32.xlu0 %v2939, 111
        %v3221 = vpop.permute.xlu0 %3220
        %3222 = vrot.lane.b32.xlu0 %v2940, 111
        %v3223 = vpop.permute.xlu0 %3222
        %3224 = vrot.lane.b32.xlu0 %v2882, 111
        %v3225 = vpop.permute.xlu0 %3224
        %3226 = vrot.lane.b32.xlu0 %v2941, 111
        %v3227 = vpop.permute.xlu0 %3226
        %3228 = vrot.lane.b32.xlu0 %v2942, 111
        %v3229 = vpop.permute.xlu0 %3228
        %3230 = vrot.lane.b32.xlu0 %v2943, 111
        %v3231 = vpop.permute.xlu0 %3230
        %3232 = vrot.lane.b32.xlu0 %v2944, 111
        %v3233 = vpop.permute.xlu0 %3232
        %3234 = vrot.lane.b32.xlu0 %v2945, 111
        %v3235 = vpop.permute.xlu0 %3234
        %3236 = vrot.lane.b32.xlu0 %v2946, 111
        %v3237 = vpop.permute.xlu0 %3236
        %3238 = vrot.lane.b32.xlu0 %v2947, 111
        %v3239 = vpop.permute.xlu0 %3238
        %3240 = vrot.lane.b32.xlu0 %v2898, 111
        %v3241 = vpop.permute.xlu0 %3240
        %3242 = vrot.lane.b32.xlu0 %v2948, 111
        %v3243 = vpop.permute.xlu0 %3242
        %3244 = vrot.lane.b32.xlu0 %v2949, 111
        %v3245 = vpop.permute.xlu0 %3244
        %3246 = vrot.lane.b32.xlu0 %v2950, 111
        %v3247 = vpop.permute.xlu0 %3246
        %3248 = vrot.lane.b32.xlu0 %v2951, 111
        %v3249 = vpop.permute.xlu0 %3248
        %3250 = vrot.lane.b32.xlu0 %v2952, 111
        %v3251 = vpop.permute.xlu0 %3250
        %3252 = vrot.lane.b32.xlu0 %v2953, 111
        %v3253 = vpop.permute.xlu0 %3252
        %3254 = vrot.lane.b32.xlu0 %v2954, 111
        %v3255 = vpop.permute.xlu0 %3254
        %vm3256 = vcmask 908288
        %v3257 = vsel %vm3256, %v3033, %v3035
        %v3258 = vsel %vm3256, %v3035, %v3037
        %v3259 = vsel %vm3256, %v3037, %v3039
        %v3260 = vsel %vm3256, %v3039, %v3041
        %v3261 = vsel %vm3256, %v3041, %v3043
        %v3262 = vsel %vm3256, %v3043, %v3045
        %v3263 = vsel %vm3256, %v3045, %v3047
        %v3264 = vsel %vm3256, %v3049, %v3051
        %v3265 = vsel %vm3256, %v3051, %v3053
        %v3266 = vsel %vm3256, %v3053, %v3055
        %v3267 = vsel %vm3256, %v3055, %v3057
        %v3268 = vsel %vm3256, %v3057, %v3059
        %v3269 = vsel %vm3256, %v3059, %v3061
        %v3270 = vsel %vm3256, %v3061, %v3063
        %v3271 = vsel %vm3256, %v3065, %v3067
        %v3272 = vsel %vm3256, %v3067, %v3069
        %v3273 = vsel %vm3256, %v3069, %v3071
        %v3274 = vsel %vm3256, %v3071, %v3073
        %v3275 = vsel %vm3256, %v3073, %v3075
        %v3276 = vsel %vm3256, %v3075, %v3077
        %v3277 = vsel %vm3256, %v3077, %v3079
        %v3278 = vsel %vm3256, %v3081, %v3083
        %v3279 = vsel %vm3256, %v3083, %v3085
        %v3280 = vsel %vm3256, %v3085, %v3087
        %v3281 = vsel %vm3256, %v3087, %v3089
        %v3282 = vsel %vm3256, %v3089, %v3091
        %v3283 = vsel %vm3256, %v3091, %v3093
        %v3284 = vsel %vm3256, %v3093, %v3095
        %v3285 = vsel %vm3256, %v3097, %v3099
        %v3286 = vsel %vm3256, %v3099, %v3101
        %v3287 = vsel %vm3256, %v3101, %v3103
        %v3288 = vsel %vm3256, %v3103, %v3105
        %v3289 = vsel %vm3256, %v3105, %v3107
        %v3290 = vsel %vm3256, %v3107, %v3109
        %v3291 = vsel %vm3256, %v3109, %v3111
        %v3292 = vsel %vm3256, %v3113, %v3115
        %v3293 = vsel %vm3256, %v3115, %v3117
        %v3294 = vsel %vm3256, %v3117, %v3119
        %v3295 = vsel %vm3256, %v3119, %v3121
        %v3296 = vsel %vm3256, %v3121, %v3123
        %v3297 = vsel %vm3256, %v3123, %v3125
        %v3298 = vsel %vm3256, %v3125, %v3127
        %v3299 = vsel %vm3256, %v3129, %v3131
        %v3300 = vsel %vm3256, %v3131, %v3133
        %v3301 = vsel %vm3256, %v3133, %v3135
        %v3302 = vsel %vm3256, %v3135, %v3137
        %v3303 = vsel %vm3256, %v3137, %v3139
        %v3304 = vsel %vm3256, %v3139, %v3141
        %v3305 = vsel %vm3256, %v3141, %v3143
        %v3306 = vsel %vm3256, %v3145, %v3147
        %v3307 = vsel %vm3256, %v3147, %v3149
        %v3308 = vsel %vm3256, %v3149, %v3151
        %v3309 = vsel %vm3256, %v3151, %v3153
        %v3310 = vsel %vm3256, %v3153, %v3155
        %v3311 = vsel %vm3256, %v3155, %v3157
        %v3312 = vsel %vm3256, %v3157, %v3159
        %v3313 = vsel %vm3256, %v3161, %v3163
        %v3314 = vsel %vm3256, %v3163, %v3165
        %v3315 = vsel %vm3256, %v3165, %v3167
        %v3316 = vsel %vm3256, %v3167, %v3169
        %v3317 = vsel %vm3256, %v3169, %v3171
        %v3318 = vsel %vm3256, %v3171, %v3173
        %v3319 = vsel %vm3256, %v3173, %v3175
        %v3320 = vsel %vm3256, %v3177, %v3179
        %v3321 = vsel %vm3256, %v3179, %v3181
        %v3322 = vsel %vm3256, %v3181, %v3183
        %v3323 = vsel %vm3256, %v3183, %v3185
        %v3324 = vsel %vm3256, %v3185, %v3187
        %v3325 = vsel %vm3256, %v3187, %v3189
        %v3326 = vsel %vm3256, %v3189, %v3191
        %v3327 = vsel %vm3256, %v3193, %v3195
        %v3328 = vsel %vm3256, %v3195, %v3197
        %v3329 = vsel %vm3256, %v3197, %v3199
        %v3330 = vsel %vm3256, %v3199, %v3201
        %v3331 = vsel %vm3256, %v3201, %v3203
        %v3332 = vsel %vm3256, %v3203, %v3205
        %v3333 = vsel %vm3256, %v3205, %v3207
        %v3334 = vsel %vm3256, %v3209, %v3211
        %v3335 = vsel %vm3256, %v3211, %v3213
        %v3336 = vsel %vm3256, %v3213, %v3215
        %v3337 = vsel %vm3256, %v3215, %v3217
        %v3338 = vsel %vm3256, %v3217, %v3219
        %v3339 = vsel %vm3256, %v3219, %v3221
        %v3340 = vsel %vm3256, %v3221, %v3223
        %v3341 = vsel %vm3256, %v3225, %v3227
        %v3342 = vsel %vm3256, %v3227, %v3229
        %v3343 = vsel %vm3256, %v3229, %v3231
        %v3344 = vsel %vm3256, %v3231, %v3233
        %v3345 = vsel %vm3256, %v3233, %v3235
        %v3346 = vsel %vm3256, %v3235, %v3237
        %v3347 = vsel %vm3256, %v3237, %v3239
        %v3348 = vsel %vm3256, %v3241, %v3243
        %v3349 = vsel %vm3256, %v3243, %v3245
        %v3350 = vsel %vm3256, %v3245, %v3247
        %v3351 = vsel %vm3256, %v3247, %v3249
        %v3352 = vsel %vm3256, %v3249, %v3251
        %v3353 = vsel %vm3256, %v3251, %v3253
        %v3354 = vsel %vm3256, %v3253, %v3255
        %v3447 = vsel %vm1499, %v2966, 0
        %v3450 = vsel %vm712, %v3348, 0
        %v3453 = vsel %vm712, %v3349, 0
        %v3456 = vsel %vm712, %v3350, 0
        %v3459 = vsel %vm712, %v3351, 0
        %v3462 = vsel %vm712, %v3352, 0
        %v3465 = vsel %vm712, %v3353, 0
        %v3468 = vsel %vm712, %v3354, 0
        %3470 = vmatprep.subr.bf16.mxu0 %v3258
        %3471 = vmatpush1.bf16.msra.mxu0 %v3257
        %3472 = vmatprep.subr.bf16.mxu0 %v3265
        %3473 = vmatpush1.bf16.msra.mxu0 %v3264
        %3474 = vmatprep.subr.bf16.mxu0 %v3272
        %3475 = vmatpush1.bf16.msra.mxu0 %v3271
        %3476 = vmatprep.subr.bf16.mxu0 %v3279
        %3477 = vmatpush1.bf16.msra.mxu0 %v3278
        %3478 = vmatprep.subr.bf16.mxu0 %v3286
        %3479 = vmatpush1.bf16.msra.mxu0 %v3285
        %3480 = vmatprep.subr.bf16.mxu0 %v3293
        %3481 = vmatpush1.bf16.msra.mxu0 %v3292
        %3482 = vmatprep.subr.bf16.mxu0 %v3300
        %3483 = vmatpush1.bf16.msra.mxu0 %v3299
        %3484 = vmatprep.subr.bf16.mxu0 %v3307
        %3485 = vmatpush1.bf16.msra.mxu0 %v3306
        %3486 = vmatprep.subr.bf16.mxu0 %v3314
        %3487 = vmatpush1.bf16.msra.mxu0 %v3313
        %3488 = vmatprep.subr.bf16.mxu0 %v3321
        %3489 = vmatpush1.bf16.msra.mxu0 %v3320
        %3490 = vmatprep.subr.bf16.mxu0 %v3328
        %3491 = vmatpush1.bf16.msra.mxu0 %v3327
        %3492 = vmatprep.subr.bf16.mxu0 %v3335
        %3493 = vmatpush1.bf16.msra.mxu0 %v3334
        %3494 = vmatprep.subr.bf16.mxu0 %v3342
        %3495 = vmatpush1.bf16.msra.mxu0 %v3341
        %3496 = vmatprep.subr.bf16.mxu0 %v3453
        %3497 = vmatpush1.bf16.msra.mxu0 %v3450
        %3498 = vmatprep.subr.bf16.mxu0 0
        %3499 = vmatpush1.bf16.msra.mxu0 0
        %3500 = vmatprep.subr.bf16.mxu0 0
        %3501 = vmatpush1.bf16.msra.mxu0 0
        %3502 = vmatprep.mubr.bf16.mxu0 %v3447
        %3503 = vmatmul.mubr.bf16.gmra.mrb[0].mxu0 %v2965
        %v3504 = vpop.f32.mrb[0].mxu0
        %v3505 = vadd.f32 %v2960, %v3504
        %v3506 = vpop.f32.mrb[0].mxu0
        %v3507 = vadd.f32 %v2960, %v3506
        %v3508 = vpop.f32.mrb[0].mxu0
        %v3509 = vpop.f32.mrb[0].mxu0
        %3510 = vdwg.mxu0
        %3511 = vmatprep.subr.bf16.mxu0 %v3260
        %3512 = vmatpush1.bf16.msra.mxu0 %v3259
        %3513 = vmatprep.subr.bf16.mxu0 %v3267
        %3514 = vmatpush1.bf16.msra.mxu0 %v3266
        %3515 = vmatprep.subr.bf16.mxu0 %v3274
        %3516 = vmatpush1.bf16.msra.mxu0 %v3273
        %3517 = vmatprep.subr.bf16.mxu0 %v3281
        %3518 = vmatpush1.bf16.msra.mxu0 %v3280
        %3519 = vmatprep.subr.bf16.mxu0 %v3288
        %3520 = vmatpush1.bf16.msra.mxu0 %v3287
        %3521 = vmatprep.subr.bf16.mxu0 %v3295
        %3522 = vmatpush1.bf16.msra.mxu0 %v3294
        %3523 = vmatprep.subr.bf16.mxu0 %v3302
        %3524 = vmatpush1.bf16.msra.mxu0 %v3301
        %3525 = vmatprep.subr.bf16.mxu0 %v3309
        %3526 = vmatpush1.bf16.msra.mxu0 %v3308
        %3527 = vmatprep.subr.bf16.mxu0 %v3316
        %3528 = vmatpush1.bf16.msra.mxu0 %v3315
        %3529 = vmatprep.subr.bf16.mxu0 %v3323
        %3530 = vmatpush1.bf16.msra.mxu0 %v3322
        %3531 = vmatprep.subr.bf16.mxu0 %v3330
        %3532 = vmatpush1.bf16.msra.mxu0 %v3329
        %3533 = vmatprep.subr.bf16.mxu0 %v3337
        %3534 = vmatpush1.bf16.msra.mxu0 %v3336
        %3535 = vmatprep.subr.bf16.mxu0 %v3344
        %3536 = vmatpush1.bf16.msra.mxu0 %v3343
        %3537 = vmatprep.subr.bf16.mxu0 %v3459
        %3538 = vmatpush1.bf16.msra.mxu0 %v3456
        %3539 = vmatprep.subr.bf16.mxu0 0
        %3540 = vmatpush1.bf16.msra.mxu0 0
        %3541 = vmatprep.subr.bf16.mxu0 0
        %3542 = vmatpush1.bf16.msra.mxu0 0
        %3543 = vmatprep.mubr.bf16.mxu0 %v3447
        %3544 = vmatmul.mubr.bf16.gmra.mrb[0].mxu0 %v2965
        %v3545 = vpop.f32.mrb[0].mxu0
        %v3546 = vadd.f32 %v2960, %v3545
        %v3547 = vpop.f32.mrb[0].mxu0
        %v3548 = vadd.f32 %v2960, %v3547
        %v3549 = vpop.f32.mrb[0].mxu0
        %v3550 = vpop.f32.mrb[0].mxu0
        %3551 = vdwg.mxu0
        %3552 = vmatprep.subr.bf16.mxu0 %v3262
        %3553 = vmatpush1.bf16.msra.mxu0 %v3261
        %3554 = vmatprep.subr.bf16.mxu0 %v3269
        %3555 = vmatpush1.bf16.msra.mxu0 %v3268
        %3556 = vmatprep.subr.bf16.mxu0 %v3276
        %3557 = vmatpush1.bf16.msra.mxu0 %v3275
        %3558 = vmatprep.subr.bf16.mxu0 %v3283
        %3559 = vmatpush1.bf16.msra.mxu0 %v3282
        %3560 = vmatprep.subr.bf16.mxu0 %v3290
        %3561 = vmatpush1.bf16.msra.mxu0 %v3289
        %3562 = vmatprep.subr.bf16.mxu0 %v3297
        %3563 = vmatpush1.bf16.msra.mxu0 %v3296
        %3564 = vmatprep.subr.bf16.mxu0 %v3304
        %3565 = vmatpush1.bf16.msra.mxu0 %v3303
        %3566 = vmatprep.subr.bf16.mxu0 %v3311
        %3567 = vmatpush1.bf16.msra.mxu0 %v3310
        %3568 = vmatprep.subr.bf16.mxu0 %v3318
        %3569 = vmatpush1.bf16.msra.mxu0 %v3317
        %3570 = vmatprep.subr.bf16.mxu0 %v3325
        %3571 = vmatpush1.bf16.msra.mxu0 %v3324
        %3572 = vmatprep.subr.bf16.mxu0 %v3332
        %3573 = vmatpush1.bf16.msra.mxu0 %v3331
        %3574 = vmatprep.subr.bf16.mxu0 %v3339
        %3575 = vmatpush1.bf16.msra.mxu0 %v3338
        %3576 = vmatprep.subr.bf16.mxu0 %v3346
        %3577 = vmatpush1.bf16.msra.mxu0 %v3345
        %3578 = vmatprep.subr.bf16.mxu0 %v3465
        %3579 = vmatpush1.bf16.msra.mxu0 %v3462
        %3580 = vmatprep.subr.bf16.mxu0 0
        %3581 = vmatpush1.bf16.msra.mxu0 0
        %3582 = vmatprep.subr.bf16.mxu0 0
        %3583 = vmatpush1.bf16.msra.mxu0 0
        %3584 = vmatprep.mubr.bf16.mxu0 %v3447
        %3585 = vmatmul.mubr.bf16.gmra.mrb[0].mxu0 %v2965
        %v3586 = vpop.f32.mrb[0].mxu0
        %v3587 = vadd.f32 %v2960, %v3586
        %v3588 = vpop.f32.mrb[0].mxu0
        %v3589 = vadd.f32 %v2960, %v3588
        %v3590 = vpop.f32.mrb[0].mxu0
        %v3591 = vpop.f32.mrb[0].mxu0
        %3592 = vdwg.mxu0
        %3593 = vmatprep.subr.bf16.mxu0 0
        %3594 = vmatpush1.bf16.msra.mxu0 %v3263
        %3595 = vmatprep.subr.bf16.mxu0 0
        %3596 = vmatpush1.bf16.msra.mxu0 %v3270
        %3597 = vmatprep.subr.bf16.mxu0 0
        %3598 = vmatpush1.bf16.msra.mxu0 %v3277
        %3599 = vmatprep.subr.bf16.mxu0 0
        %3600 = vmatpush1.bf16.msra.mxu0 %v3284
        %3601 = vmatprep.subr.bf16.mxu0 0
        %3602 = vmatpush1.bf16.msra.mxu0 %v3291
        %3603 = vmatprep.subr.bf16.mxu0 0
        %3604 = vmatpush1.bf16.msra.mxu0 %v3298
        %3605 = vmatprep.subr.bf16.mxu0 0
        %3606 = vmatpush1.bf16.msra.mxu0 %v3305
        %3607 = vmatprep.subr.bf16.mxu0 0
        %3608 = vmatpush1.bf16.msra.mxu0 %v3312
        %3609 = vmatprep.subr.bf16.mxu0 0
        %3610 = vmatpush1.bf16.msra.mxu0 %v3319
        %3611 = vmatprep.subr.bf16.mxu0 0
        %3612 = vmatpush1.bf16.msra.mxu0 %v3326
        %3613 = vmatprep.subr.bf16.mxu0 0
        %3614 = vmatpush1.bf16.msra.mxu0 %v3333
        %3615 = vmatprep.subr.bf16.mxu0 0
        %3616 = vmatpush1.bf16.msra.mxu0 %v3340
        %3617 = vmatprep.subr.bf16.mxu0 0
        %3618 = vmatpush1.bf16.msra.mxu0 %v3347
        %3619 = vmatprep.subr.bf16.mxu0 0
        %3620 = vmatpush1.bf16.msra.mxu0 %v3468
        %3621 = vmatprep.subr.bf16.mxu0 0
        %3622 = vmatpush1.bf16.msra.mxu0 0
        %3623 = vmatprep.subr.bf16.mxu0 0
        %3624 = vmatpush1.bf16.msra.mxu0 0
        %3625 = vmatprep.mubr.bf16.mxu0 %v3447
        %3626 = vmatmul.mubr.bf16.gmra.mrb[0].mxu0 %v2965
        %v3627 = vpop.f32.mrb[0].mxu0
        %v3628 = vadd.f32 %v2960, %v3627
        %v3629 = vpop.f32.mrb[0].mxu0
        %v3630 = vpop.f32.mrb[0].mxu0
        %v3631 = vpop.f32.mrb[0].mxu0
        %3632 = vdwg.mxu0
        %v3633 = vmul.f32 %v3505, %v1691
        %v3634 = vmul.f32 %v3507, %v1695
        %v3635 = vmul.f32 %v3546, %v1699
        %v3636 = vmul.f32 %v3548, %v1703
        %v3637 = vmul.f32 %v3587, %v1707
        %v3638 = vmul.f32 %v3589, %v1711
        %v3639 = vmul.f32 %v3628, %v1715
        %v3640 = vadd.f32 %v3633, %v3634
        %v3641 = vadd.f32 %v3640, %v3635
        %v3642 = vadd.f32 %v3641, %v3636
        %v3643 = vadd.f32 %v3642, %v3637
        %v3644 = vadd.f32 %v3643, %v3638
        %v3645 = vadd.f32 %v3644, %v3639
        %3646 = vadd.xlane.f32.xlu0 %v3645
        %v3647 = vpop.xlane.xlu0 %3646
        %v3648 = vmul.f32 %v3633, %v3505
        %v3649 = vmul.f32 %v3634, %v3507
        %v3650 = vmul.f32 %v3635, %v3546
        %v3651 = vmul.f32 %v3636, %v3548
        %v3652 = vmul.f32 %v3637, %v3587
        %v3653 = vmul.f32 %v3638, %v3589
        %v3654 = vmul.f32 %v3639, %v3628
        %v3655 = vadd.f32 %v3648, %v3649
        %v3656 = vadd.f32 %v3655, %v3650
        %v3657 = vadd.f32 %v3656, %v3651
        %v3658 = vadd.f32 %v3657, %v3652
        %v3659 = vadd.f32 %v3658, %v3653
        %v3660 = vadd.f32 %v3659, %v3654
        %3661 = vadd.xlane.f32.xlu0 %v3660
        %v3662 = vpop.xlane.xlu0 %3661
        %v3663 = vmul.f32 %v3647, 0.001953125
        %v3664 = vmul.f32 %v3662, 0.001953125
        %v3665 = vmul.f32 %v3663, %v3663
        %v3666 = vsub.f32 %v3664, %v3665
        %v3667 = vmax.f32 %v3666, 0.0
        %v3668 = vsub.f32 %v3505, %v3663
        %v3669 = vsub.f32 %v3507, %v3663
        %v3670 = vsub.f32 %v3546, %v3663
        %v3671 = vsub.f32 %v3548, %v3663
        %v3672 = vsub.f32 %v3587, %v3663
        %v3673 = vsub.f32 %v3589, %v3663
        %v3674 = vsub.f32 %v3628, %v3663
        %v3675 = vmul.f32 %v3668, %v1691
        %v3676 = vmul.f32 %v3669, %v1695
        %v3677 = vmul.f32 %v3670, %v1699
        %v3678 = vmul.f32 %v3671, %v1703
        %v3679 = vmul.f32 %v3672, %v1707
        %v3680 = vmul.f32 %v3673, %v1711
        %v3681 = vmul.f32 %v3674, %v1715
        %v3682 = vadd.f32 %v3667, 1e-05
        %v3683 = vrsqrt.pop %v3682
        %v3684 = vmul.f32 %v3675, %v3683
        %v3685 = vmul.f32 %v3676, %v3683
        %v3686 = vmul.f32 %v3677, %v3683
        %v3687 = vmul.f32 %v3678, %v3683
        %v3688 = vmul.f32 %v3679, %v3683
        %v3689 = vmul.f32 %v3680, %v3683
        %v3690 = vmul.f32 %v3681, %v3683
        %v3691 = vld [vmem:[%s280] sm:$0xff]
        %v3692 = vld [vmem:[%s280 + $0x8] sm:$0xff]
        %v3693 = vld [vmem:[%s280 + $0x10] sm:$0xff]
        %v3694 = vld [vmem:[%s280 + $0x18] sm:$0xff]
        %v3695 = vld [vmem:[%s280 + $0x20] sm:$0xff]
        %v3696 = vld [vmem:[%s280 + $0x28] sm:$0xff]
        %v3697 = vld [vmem:[%s280 + $0x30] sm:$0xff]
        %v3698 = vadd.f32 %v3684, %v3691
        %v3699 = vadd.f32 %v3685, %v3692
        %v3700 = vadd.f32 %v3686, %v3693
        %v3701 = vadd.f32 %v3687, %v3694
        %v3702 = vadd.f32 %v3688, %v3695
        %v3703 = vadd.f32 %v3689, %v3696
        %v3704 = vadd.f32 %v3690, %v3697
        %3705 = vst [vmem:[%s317] sm:$0xff] %v3698
        %3706 = vst [vmem:[%s317 + $0x8] sm:$0xff] %v3699
        %3707 = vst [vmem:[%s317 + $0x10] sm:$0xff] %v3700
        %3708 = vst [vmem:[%s317 + $0x18] sm:$0xff] %v3701
        %3709 = vst [vmem:[%s317 + $0x20] sm:$0xff] %v3702
        %3710 = vst [vmem:[%s317 + $0x28] sm:$0xff] %v3703
        %3711 = vst [vmem:[%s317 + $0x30] sm:$0xff] %v3704
        %s3712 = sand.u32 %s170, 1
        %s3713 = scalar_lea.sflag [#allocation5], %s3712
        %s3714 = sand.u32 %s170, 1
        %s3715 = smul.addr %s3714, 56
        %s3716 = scalar_lea.vmem [#allocation9], %s3715
        // Predicated region
        $region57: #{tpu_custom_call.1} parent=43 // pred_check
          %p3717 = pneg %p180
        $region58: #{tpu_custom_call.1} parent=43 // pred_check_branch
          %3719 = sbr.rel (%p3717) target = $region60
        $region59: #{tpu_custom_call.1} parent=43 // pred_region
          %s3721 = ssub.s32 896, 896
          %3722 = vsyncadd %s3713, %s3721
          %s3723 = smul.addr %s26, 7
          %s3724 = smul.addr %s3723, 128
          %s3725 = scalar_lea.hbm %s6, %s3724
          %s3727 = sshll.u32 %s3716, 4
          %s3728 = int_to_ptr.vmem [resolvable:$true] %s3727
          %3730 = dma.vmem_to_hbm [thread:$0]  %s3728, 896, %s3725, %s3713
        $region60: #{tpu_custom_call.1} parent=43 // pred_fallthru
          _
      $region44: #{tpu_custom_call.1} parent=5 // pred_fallthru
        _
      %p3731 = scmp.le.s32.totalorder 2, %s21
      // Predicated region
      $region61: #{tpu_custom_call.1} parent=5 // pred_check
        %p3732 = pneg %p3731
      $region62: #{tpu_custom_call.1} parent=5 // pred_check_branch
        %3734 = sbr.rel (%p3732) target = $region64
      $region63: #{tpu_custom_call.1} parent=5 // pred_region
        %s3735 = ssub.s32 %s21, 2
        // Predicated region
        $region65: #{tpu_custom_call.1} parent=63 // pred_check
          %p3736 = pneg %p186
        $region66: #{tpu_custom_call.1} parent=63 // pred_check_branch
          %3738 = sbr.rel (%p3736) target = $region68
        $region67: #{tpu_custom_call.1} parent=63 // pred_region
          %s3739 = sand.u32 %s171, 1
          %s3740 = scalar_lea.sflag [#allocation5], %s3739
          %s3741 = sand.u32 %s171, 1
          %s3742 = smul.addr %s3741, 56
          %s3743 = scalar_lea.vmem [#allocation9], %s3742
          %3744 = dma.done %s3740, 896
        $region68: #{tpu_custom_call.1} parent=63 // pred_fallthru
          _
      $region64: #{tpu_custom_call.1} parent=5 // pred_fallthru
        _
    $region6: #{tpu_custom_call.1} parent=1 // loop_footer
      %s25 = sadd.s32 1, %s21
    $region7: #{tpu_custom_call.1} parent=1 // loop_footer_branch
      %20 = sbr.rel target = $region3
    $region8: #{tpu_custom_call.1} parent=1 // loop_exit
      _
    %3745 = vsyncpa [#allocation4], 1
    %s3746 = scalar_lea.sflag [#allocation4], 1
    %3747 = vsyncpa %s3746, 1
    %3748 = vsyncpa [#allocation7], 1
    %s3749 = scalar_lea.sflag [#allocation7], 1
    %3750 = vsyncpa %s3749, 1
    %3751 = vsyncpa [#allocation5], 1
    %s3752 = scalar_lea.sflag [#allocation5], 1
    %3753 = vsyncpa %s3752, 1

</llo_original>
